<compile_context>
chip_gen: v7x
topology: tpu7x:2x2x1
jax: 0.10.0
libtpu: 0.0.40
codegen_flags: <defaults>
</compile_context>

<pallas_src>
import functools
import math

import jax
import jax.numpy as jnp
from jax import lax
from jax.experimental import pallas as pl
from jax.experimental.pallas import tpu as pltpu

OUT_H, OUT_W = 224, 224          # fixed output size of RandomResizedCrop
LANES = 256                      # lane padding of the 224-wide intermediates
SCALE = (0.8, 1.0)               # kornia scale range
RATIO = (3.0 / 4.0, 4.0 / 3.0)   # kornia default aspect-ratio range


# --------------------------- in-kernel weight generation ---------------------
def _col_weights(x0, cw, hflip, in_w):
    """(in_w, LANES) f32 bilinear weights: source column j -> output column i
    (align_corners=True).  Output columns >= OUT_W are zero (lane padding);
    hflip in {0.,1.} reverses the output index (folds the flip in)."""
    shape = (in_w, LANES)
    i = lax.broadcasted_iota(jnp.int32, shape, 1).astype(jnp.float32)
    j = lax.broadcasted_iota(jnp.int32, shape, 0).astype(jnp.float32)
    valid = i < float(OUT_W)
    i = i + hflip * (float(OUT_W - 1) - 2.0 * i)
    src = x0 + i * (cw - 1.0) * (1.0 / float(OUT_W - 1))
    src = jnp.clip(src, 0.0, float(in_w - 1))
    i0 = jnp.floor(src)
    frac = src - i0
    i1 = jnp.minimum(i0 + 1.0, float(in_w - 1))
    w = jnp.where(j == i0, 1.0 - frac, 0.0) + jnp.where(j == i1, frac, 0.0)
    return jnp.where(valid, w, 0.0)


def _row_weights(y0, ch, vflip, in_h, tile_rows, row_off):
    """(OUT_H, tile_rows) f32 bilinear weights: output row i -> source row
    (row_off + j) of an H-tile.  vflip reverses the output index."""
    shape = (OUT_H, tile_rows)
    i = lax.broadcasted_iota(jnp.int32, shape, 0).astype(jnp.float32)
    j = lax.broadcasted_iota(jnp.int32, shape, 1).astype(jnp.float32) + row_off
    i = i + vflip * (float(OUT_H - 1) - 2.0 * i)
    src = y0 + i * (ch - 1.0) * (1.0 / float(OUT_H - 1))
    src = jnp.clip(src, 0.0, float(in_h - 1))
    i0 = jnp.floor(src)
    frac = src - i0
    i1 = jnp.minimum(i0 + 1.0, float(in_h - 1))
    return (jnp.where(j == i0, 1.0 - frac, 0.0)
            + jnp.where(j == i1, frac, 0.0))


# ------------------------------- Pallas kernels -------------------------------
def _aug_kernel_small(params_ref, x_ref, o_ref):
    """Whole image(s) per grid step: out[c] = Wy @ (x[c] @ WxT), BB images/step."""
    b = pl.program_id(0)
    BB, C, H, W = x_ref.shape
    for i in range(BB):                              # static unroll, BB <= 8
        p = b * BB + i
        y0 = params_ref[p, 0].astype(jnp.float32)
        ch = params_ref[p, 1].astype(jnp.float32)
        x0 = params_ref[p, 2].astype(jnp.float32)
        cw = params_ref[p, 3].astype(jnp.float32)
        vf = params_ref[p, 4].astype(jnp.float32)
        hf = params_ref[p, 5].astype(jnp.float32)

        wxt = _col_weights(x0, cw, hf, W).astype(jnp.bfloat16)            # (W, LANES)
        wy = _row_weights(y0, ch, vf, H, H, 0.0).astype(jnp.bfloat16)     # (OUT_H, H)

        xb = x_ref[i].astype(jnp.bfloat16).reshape(C * H, W)
        t = jnp.dot(xb, wxt, preferred_element_type=jnp.float32)          # (C*H, LANES)
        tb = t.astype(jnp.bfloat16)
        for c in range(C):   # TODO(synk): fuse to one N=C*224 matmul (v5e MRF)
            out_c = jnp.dot(wy, tb[c * H:(c + 1) * H, :],
                            preferred_element_type=jnp.float32)
            o_ref[i, c] = out_c[:, :OUT_W].astype(o_ref.dtype)


def _aug_kernel_tiled(params_ref, x_ref, o_ref, acc_ref, *, full_h):
    """H-tiled reduction: per h-step accumulate Wy[:, tile] @ (x_tile @ WxT).
    The input index_map only fetches tiles intersecting the crop rows; steps
    past the last needed tile are clamped (DMA elided) and compute-skipped."""
    b = pl.program_id(0)
    h = pl.program_id(1)
    n_h = pl.num_programs(1)
    _, C, TH, W = x_ref.shape

    y0i = params_ref[b, 0]
    chi = params_ref[b, 1]
    first = y0i // TH
    last = (y0i + chi - 1) // TH
    tile = jnp.minimum(first + h, last)              # matches the input index_map
    row_off = tile * TH

    @pl.when(h == 0)
    def _():
        acc_ref[...] = jnp.zeros_like(acc_ref)

    @pl.when(first + h <= last)                      # skip tiles outside the crop
    def _():
        y0 = y0i.astype(jnp.float32)
        ch = chi.astype(jnp.float32)
        x0 = params_ref[b, 2].astype(jnp.float32)
        cw = params_ref[b, 3].astype(jnp.float32)
        vf = params_ref[b, 4].astype(jnp.float32)
        hf = params_ref[b, 5].astype(jnp.float32)

        wxt = _col_weights(x0, cw, hf, W).astype(jnp.bfloat16)            # (W, LANES)
        wy = _row_weights(y0, ch, vf, full_h, TH,
                          row_off.astype(jnp.float32)).astype(jnp.bfloat16)

        xb = x_ref[0].astype(jnp.bfloat16)           # per-tile f32->bf16 cast (v7x)
        if full_h % TH != 0:                         # zero rows of a partial last tile
            rr = lax.broadcasted_iota(jnp.int32, (C, TH, W), 1) + row_off
            xb = jnp.where(rr < full_h, xb, jnp.zeros_like(xb))
        xb = xb.reshape(C * TH, W)
        t = jnp.dot(xb, wxt, preferred_element_type=jnp.float32)          # (C*TH, LANES)
        tb = t.astype(jnp.bfloat16)
        for c in range(C):
            acc_ref[c] += jnp.dot(wy, tb[c * TH:(c + 1) * TH, :],
                                  preferred_element_type=jnp.float32)

    @pl.when(h == n_h - 1)
    def _():
        for c in range(C):
            o_ref[0, c] = acc_ref[c, :, :OUT_W].astype(o_ref.dtype)


# ------------------------------- wrappers -------------------------------------
def _vmem_limit_bytes():
    cap = 64 * 1024 * 1024                           # conservative fallback (v7x-sized)
    try:
        cap = int(pltpu.get_tpu_info().vmem_capacity_bytes)
    except Exception:
        pass
    # 48 MiB on 64-MiB parts (v7x), ~112 MiB on 128-MiB parts (v5e/v6e).
    return int(max(min(cap - 16 * 1024 * 1024, 112 * 1024 * 1024), 32 * 1024 * 1024))


def _choose_block_batch(B, per_image_bytes):
    """Images per grid step: amortize per-step overhead for tiny images, but keep
    >= 2 grid steps so both v7x TensorCores stay busy."""
    best = 1
    for bb in range(1, min(B, 8) + 1):
        if B % bb:
            continue
        if bb * per_image_bytes > 2 * 1024 * 1024:
            continue
        if B > 1 and B // bb < 2:
            continue
        best = bb
    return best


def _aug_pallas_small(x, params, bb, vmem):
    B, C, H, W = x.shape
    return pl.pallas_call(
        _aug_kernel_small,
        out_shape=jax.ShapeDtypeStruct((B, C, OUT_H, OUT_W), x.dtype),
        grid_spec=pltpu.PrefetchScalarGridSpec(
            num_scalar_prefetch=1,
            grid=(B // bb,),
            in_specs=[pl.BlockSpec((bb, C, H, W), lambda b, p: (b, 0, 0, 0))],
            out_specs=pl.BlockSpec((bb, C, OUT_H, OUT_W),
                                   lambda b, p: (b, 0, 0, 0)),
        ),
        compiler_params=pltpu.CompilerParams(
            dimension_semantics=("parallel",),
            vmem_limit_bytes=vmem,
        ),
    )(params, x)


def _aug_pallas_tiled(x, params, th, vmem):
    B, C, H, W = x.shape
    n_h = pl.cdiv(H, th)

    def x_map(b, h, p):                     # crop-restricted DMA via prefetched params
        first = p[b, 0] // th
        last = (p[b, 0] + p[b, 1] - 1) // th
        return (b, 0, jnp.minimum(first + h, last), 0)

    return pl.pallas_call(
        functools.partial(_aug_kernel_tiled, full_h=H),
        out_shape=jax.ShapeDtypeStruct((B, C, OUT_H, OUT_W), x.dtype),
        grid_spec=pltpu.PrefetchScalarGridSpec(
            num_scalar_prefetch=1,
            grid=(B, n_h),
            in_specs=[pl.BlockSpec((1, C, th, W), x_map)],
            out_specs=pl.BlockSpec((1, C, OUT_H, OUT_W),
                                   lambda b, h, p: (b, 0, 0, 0)),
            scratch_shapes=[pltpu.VMEM((C, OUT_H, LANES), jnp.float32)],
        ),
        compiler_params=pltpu.CompilerParams(
            dimension_semantics=("parallel", "arbitrary"),
            vmem_limit_bytes=vmem,
        ),
    )(params, x)


def _aug_pallas(x, params, force_tile_rows=None):
    """x: (B, C, H, W); params: int32 (B, 6) [y0, crop_h, x0, crop_w, vflip, hflip]."""
    B, C, H, W = x.shape
    itemsize = x.dtype.itemsize
    img_bytes = C * H * W * itemsize
    vmem = _vmem_limit_bytes()
    if force_tile_rows is None and 2 * img_bytes <= min(4 * 1024 * 1024, vmem // 8):
        return _aug_pallas_small(x, params, _choose_block_batch(B, img_bytes), vmem)
    if force_tile_rows is not None:
        th = min(force_tile_rows, H)
    else:
        budget = vmem // 4                   # double-buffered input-tile budget
        th = H
        while th > 8 and 2 * C * th * W * itemsize > budget:
            th //= 2
        if th < H:
            th = max(8, (th // 8) * 8)
    return _aug_pallas_tiled(x, params, th, vmem)


# --------------------------- parameter sampling (glue) -------------------------
def _sample_params(key, B, H, W):
    """Per-image crop box + flips -> int32 (B, 6): [y0, crop_h, x0, crop_w, vflip, hflip]."""
    k_area, k_ratio, k_x, k_y, k_h, k_v = jax.random.split(key, 6)
    area = jax.random.uniform(k_area, (B,), minval=SCALE[0], maxval=SCALE[1]) * (H * W)
    log_r = jax.random.uniform(k_ratio, (B,), minval=math.log(RATIO[0]),
                               maxval=math.log(RATIO[1]))
    ratio = jnp.exp(log_r)
    w = jnp.clip(jnp.round(jnp.sqrt(area * ratio)), 1.0, float(W))
    h = jnp.clip(jnp.round(jnp.sqrt(area / ratio)), 1.0, float(H))
    x0 = jnp.floor(jax.random.uniform(k_x, (B,)) * (float(W) - w + 1.0))
    y0 = jnp.floor(jax.random.uniform(k_y, (B,)) * (float(H) - h + 1.0))
    hflip = (jax.random.uniform(k_h, (B,)) < 0.5).astype(jnp.float32)
    vflip = (jax.random.uniform(k_v, (B,)) < 0.5).astype(jnp.float32)
    return jnp.stack([y0, h, x0, w, vflip, hflip], axis=1).astype(jnp.int32)


def my_aug(sar, sarftp, opt, optftp, key):
    """Forward of MyAug: each tensor gets independently sampled crop + flips
    (matching the module, which invokes each augmentation per tensor).
    One pallas_call per tensor — no batch-concat fusion (kernel is HBM-bound)."""
    keys = jax.random.split(key, 4)
    outs = []
    for x, k in zip((sar, sarftp, opt, optftp), keys):
        B, _, H, W = x.shape
        outs.append(_aug_pallas(x, _sample_params(k, B, H, W)))
    return tuple(outs)


# --------------------------- pure-JAX reference (testing) ----------------------
def _aug_reference(x, params):
    """f32 bilinear crop-resize-flip with the same convention as the kernel."""
    B, C, H, W = x.shape

    def one(img, q):
        y0, ch, x0, cw, vf, hf = (q[k] for k in range(6))
        iy = jnp.arange(OUT_H, dtype=jnp.float32)
        iy = iy + vf * (float(OUT_H - 1) - 2.0 * iy)
        sy = jnp.clip(y0 + iy * (ch - 1.0) / float(OUT_H - 1), 0.0, float(H - 1))
        ix = jnp.arange(OUT_W, dtype=jnp.float32)
        ix = ix + hf * (float(OUT_W - 1) - 2.0 * ix)
        sx = jnp.clip(x0 + ix * (cw - 1.0) / float(OUT_W - 1), 0.0, float(W - 1))
        y0f = jnp.floor(sy); fy = sy - y0f
        x0f = jnp.floor(sx); fx = sx - x0f
        y0i = y0f.astype(jnp.int32); x0i = x0f.astype(jnp.int32)
        y1i = jnp.minimum(y0i + 1, H - 1); x1i = jnp.minimum(x0i + 1, W - 1)
        g = lambda yy, xx: img[:, yy, :][:, :, xx]
        top = g(y0i, x0i) * (1.0 - fx) + g(y0i, x1i) * fx
        bot = g(y1i, x0i) * (1.0 - fx) + g(y1i, x1i) * fx
        return top * (1.0 - fy)[None, :, None] + bot * fy[None, :, None]

    return jax.vmap(one)(x.astype(jnp.float32), params.astype(jnp.float32))


# ------------------------------------ demo -------------------------------------
if __name__ == "__main__":
    root = jax.random.PRNGKey(0)
    k_sar, k_sarftp, k_opt, k_optftp, k_aug, k_t1, k_t2 = jax.random.split(root, 7)

    # ---- module-level forward (4 independent augmentations) ----
    B, H, W = 2, 32, 32
    sar = jax.random.normal(k_sar, (B, 1, H, W), dtype=jnp.float32)
    sarftp = jax.random.normal(k_sarftp, (B, 1, H, W), dtype=jnp.float32)
    opt = jax.random.normal(k_opt, (B, 3, H, W), dtype=jnp.float32)
    optftp = jax.random.normal(k_optftp, (B, 3, H, W), dtype=jnp.float32)

    outs = jax.block_until_ready(jax.jit(my_aug)(sar, sarftp, opt, optftp, k_aug))
    assert outs[0].shape == (B, 1, OUT_H, OUT_W)
    assert outs[1].shape == (B, 1, OUT_H, OUT_W)
    assert outs[2].shape == (B, 3, OUT_H, OUT_W)
    assert outs[3].shape == (B, 3, OUT_H, OUT_W)
    assert all(bool(jnp.all(jnp.isfinite(o))) for o in outs)

    # ---- numerical check, small-image (multi-image-per-step) path ----
    xs = jax.random.normal(k_t1, (4, 3, 32, 32), dtype=jnp.float32)
    ps = _sample_params(k_t2, 4, 32, 32)
    ys = jax.block_until_ready(_aug_pallas(xs, ps))
    err_s = float(jnp.max(jnp.abs(ys - _aug_reference(xs, ps))))
    assert err_s < 0.15, f"small-path error {err_s}"

    # ---- numerical check, H-tiled path (crop-restricted DMA + partial tile) ----
    xt = jax.random.normal(k_t1, (3, 3, 40, 64), dtype=jnp.float32)
    pt = jnp.array([[8, 16, 4, 40, 1, 0],    # uses tiles 0-1 only (tile 2 skipped)
                    [0, 24, 0, 48, 0, 1],
                    [0, 40, 10, 50, 1, 1]],  # uses the partial last tile
                   dtype=jnp.int32)
    yt = jax.block_until_ready(_aug_pallas(xt, pt, force_tile_rows=16))
    err_t = float(jnp.max(jnp.abs(yt - _aug_reference(xt, pt))))
    assert err_t < 0.15, f"tiled-path error {err_t}"

    print("KERNEL_OK")
</pallas_src>

<mosaic_0001>
module attributes {stable_mosaic.version = 11 : i64} {
  func.func @_aug_kernel_small(%arg0: i32, %arg1: memref<2x6xi32, #tpu.memory_space<smem>>, %arg2: memref<1x1x32x32xf32, #tpu.memory_space<vmem>>, %arg3: memref<1x1x224x224xf32, #tpu.memory_space<vmem>>) attributes {dimension_semantics = [#tpu.dimension_semantics<parallel>], iteration_bounds = array<i64: 2>, scalar_prefetch = 1 : i64, scratch_operands = 0 : i64, tpu.core_type = #tpu.core_type<tc>, window_params = [{transform_indices = @transform_0, window_bounds = array<i64: 1, 1, 32, 32>}, {transform_indices = @transform_1, window_bounds = array<i64: 1, 1, 224, 224>}]} {
    %c1_i32 = arith.constant 1 : i32
    %0 = arith.muli %arg0, %c1_i32 : i32
    %c0_i32 = arith.constant 0 : i32
    %1 = arith.addi %0, %c0_i32 : i32
    %2 = arith.index_cast %1 : i32 to index
    %c0 = arith.constant 0 : index
    %3 = memref.load %arg1[%2, %c0] : memref<2x6xi32, #tpu.memory_space<smem>>
    %4 = arith.sitofp %3 : i32 to f32
    %5 = arith.index_cast %1 : i32 to index
    %c1 = arith.constant 1 : index
    %6 = memref.load %arg1[%5, %c1] : memref<2x6xi32, #tpu.memory_space<smem>>
    %7 = arith.sitofp %6 : i32 to f32
    %8 = arith.index_cast %1 : i32 to index
    %c2 = arith.constant 2 : index
    %9 = memref.load %arg1[%8, %c2] : memref<2x6xi32, #tpu.memory_space<smem>>
    %10 = arith.sitofp %9 : i32 to f32
    %11 = arith.index_cast %1 : i32 to index
    %c3 = arith.constant 3 : index
    %12 = memref.load %arg1[%11, %c3] : memref<2x6xi32, #tpu.memory_space<smem>>
    %13 = arith.sitofp %12 : i32 to f32
    %14 = arith.index_cast %1 : i32 to index
    %c4 = arith.constant 4 : index
    %15 = memref.load %arg1[%14, %c4] : memref<2x6xi32, #tpu.memory_space<smem>>
    %16 = arith.sitofp %15 : i32 to f32
    %17 = arith.index_cast %1 : i32 to index
    %c5 = arith.constant 5 : index
    %18 = memref.load %arg1[%17, %c5] : memref<2x6xi32, #tpu.memory_space<smem>>
    %19 = arith.sitofp %18 : i32 to f32
    %20 = tpu.iota {dimensions = array<i32: 1>} : vector<32x256xi32>
    %21 = arith.sitofp %20 : vector<32x256xi32> to vector<32x256xf32>
    %22 = tpu.iota {dimensions = array<i32: 0>} : vector<32x256xi32>
    %23 = arith.sitofp %22 : vector<32x256xi32> to vector<32x256xf32>
    %cst = arith.constant 2.240000e+02 : f32
    %24 = vector.broadcast %cst : f32 to vector<32x256xf32>
    %25 = arith.cmpf olt, %21, %24 : vector<32x256xf32>
    %cst_0 = arith.constant 2.000000e+00 : f32
    %26 = vector.broadcast %cst_0 : f32 to vector<32x256xf32>
    %27 = arith.mulf %26, %21 : vector<32x256xf32>
    %cst_1 = arith.constant 2.230000e+02 : f32
    %28 = vector.broadcast %cst_1 : f32 to vector<32x256xf32>
    %29 = arith.subf %28, %27 : vector<32x256xf32>
    %30 = vector.broadcast %19 : f32 to vector<32x256xf32>
    %31 = arith.mulf %30, %29 : vector<32x256xf32>
    %32 = arith.addf %21, %31 : vector<32x256xf32>
    %cst_2 = arith.constant 1.000000e+00 : f32
    %33 = arith.subf %13, %cst_2 : f32
    %34 = vector.broadcast %33 : f32 to vector<32x256xf32>
    %35 = arith.mulf %32, %34 : vector<32x256xf32>
    %cst_3 = arith.constant 0.00448430516 : f32
    %36 = vector.broadcast %cst_3 : f32 to vector<32x256xf32>
    %37 = arith.mulf %35, %36 : vector<32x256xf32>
    %38 = vector.broadcast %10 : f32 to vector<32x256xf32>
    %39 = arith.addf %38, %37 : vector<32x256xf32>
    %cst_4 = arith.constant 0.000000e+00 : f32
    %cst_5 = arith.constant 3.100000e+01 : f32
    %40 = vector.broadcast %cst_4 : f32 to vector<32x256xf32>
    %41 = arith.maximumf %40, %39 : vector<32x256xf32>
    %42 = vector.broadcast %cst_5 : f32 to vector<32x256xf32>
    %43 = arith.minimumf %42, %41 : vector<32x256xf32>
    %44 = math.floor %43 : vector<32x256xf32>
    %45 = arith.subf %43, %44 : vector<32x256xf32>
    %cst_6 = arith.constant 1.000000e+00 : f32
    %46 = vector.broadcast %cst_6 : f32 to vector<32x256xf32>
    %47 = arith.addf %44, %46 : vector<32x256xf32>
    %cst_7 = arith.constant 3.100000e+01 : f32
    %48 = vector.broadcast %cst_7 : f32 to vector<32x256xf32>
    %49 = arith.minimumf %47, %48 : vector<32x256xf32>
    %50 = arith.cmpf oeq, %23, %44 : vector<32x256xf32>
    %cst_8 = arith.constant 1.000000e+00 : f32
    %51 = vector.broadcast %cst_8 : f32 to vector<32x256xf32>
    %52 = arith.subf %51, %45 : vector<32x256xf32>
    %cst_9 = arith.constant 0.000000e+00 : f32
    %53 = vector.broadcast %cst_9 : f32 to vector<32x256xf32>
    %54 = arith.select %50, %52, %53 : vector<32x256xi1>, vector<32x256xf32>
    %55 = arith.cmpf oeq, %23, %49 : vector<32x256xf32>
    %cst_10 = arith.constant 0.000000e+00 : f32
    %56 = vector.broadcast %cst_10 : f32 to vector<32x256xf32>
    %57 = arith.select %55, %45, %56 : vector<32x256xi1>, vector<32x256xf32>
    %58 = arith.addf %54, %57 : vector<32x256xf32>
    %cst_11 = arith.constant 0.000000e+00 : f32
    %59 = vector.broadcast %cst_11 : f32 to vector<32x256xf32>
    %60 = arith.select %25, %58, %59 : vector<32x256xi1>, vector<32x256xf32>
    %61 = arith.truncf %60 : vector<32x256xf32> to vector<32x256xbf16>
    %62 = tpu.iota {dimensions = array<i32: 0>} : vector<224x32xi32>
    %63 = arith.sitofp %62 : vector<224x32xi32> to vector<224x32xf32>
    %64 = tpu.iota {dimensions = array<i32: 1>} : vector<224x32xi32>
    %65 = arith.sitofp %64 : vector<224x32xi32> to vector<224x32xf32>
    %cst_12 = arith.constant 0.000000e+00 : f32
    %66 = vector.broadcast %cst_12 : f32 to vector<224x32xf32>
    %67 = arith.addf %65, %66 : vector<224x32xf32>
    %cst_13 = arith.constant 2.000000e+00 : f32
    %68 = vector.broadcast %cst_13 : f32 to vector<224x32xf32>
    %69 = arith.mulf %68, %63 : vector<224x32xf32>
    %cst_14 = arith.constant 2.230000e+02 : f32
    %70 = vector.broadcast %cst_14 : f32 to vector<224x32xf32>
    %71 = arith.subf %70, %69 : vector<224x32xf32>
    %72 = vector.broadcast %16 : f32 to vector<224x32xf32>
    %73 = arith.mulf %72, %71 : vector<224x32xf32>
    %74 = arith.addf %63, %73 : vector<224x32xf32>
    %cst_15 = arith.constant 1.000000e+00 : f32
    %75 = arith.subf %7, %cst_15 : f32
    %76 = vector.broadcast %75 : f32 to vector<224x32xf32>
    %77 = arith.mulf %74, %76 : vector<224x32xf32>
    %cst_16 = arith.constant 0.00448430516 : f32
    %78 = vector.broadcast %cst_16 : f32 to vector<224x32xf32>
    %79 = arith.mulf %77, %78 : vector<224x32xf32>
    %80 = vector.broadcast %4 : f32 to vector<224x32xf32>
    %81 = arith.addf %80, %79 : vector<224x32xf32>
    %cst_17 = arith.constant 0.000000e+00 : f32
    %cst_18 = arith.constant 3.100000e+01 : f32
    %82 = vector.broadcast %cst_17 : f32 to vector<224x32xf32>
    %83 = arith.maximumf %82, %81 : vector<224x32xf32>
    %84 = vector.broadcast %cst_18 : f32 to vector<224x32xf32>
    %85 = arith.minimumf %84, %83 : vector<224x32xf32>
    %86 = math.floor %85 : vector<224x32xf32>
    %87 = arith.subf %85, %86 : vector<224x32xf32>
    %cst_19 = arith.constant 1.000000e+00 : f32
    %88 = vector.broadcast %cst_19 : f32 to vector<224x32xf32>
    %89 = arith.addf %86, %88 : vector<224x32xf32>
    %cst_20 = arith.constant 3.100000e+01 : f32
    %90 = vector.broadcast %cst_20 : f32 to vector<224x32xf32>
    %91 = arith.minimumf %89, %90 : vector<224x32xf32>
    %92 = arith.cmpf oeq, %67, %86 : vector<224x32xf32>
    %cst_21 = arith.constant 1.000000e+00 : f32
    %93 = vector.broadcast %cst_21 : f32 to vector<224x32xf32>
    %94 = arith.subf %93, %87 : vector<224x32xf32>
    %cst_22 = arith.constant 0.000000e+00 : f32
    %95 = vector.broadcast %cst_22 : f32 to vector<224x32xf32>
    %96 = arith.select %92, %94, %95 : vector<224x32xi1>, vector<224x32xf32>
    %97 = arith.cmpf oeq, %67, %91 : vector<224x32xf32>
    %cst_23 = arith.constant 0.000000e+00 : f32
    %98 = vector.broadcast %cst_23 : f32 to vector<224x32xf32>
    %99 = arith.select %97, %87, %98 : vector<224x32xi1>, vector<224x32xf32>
    %100 = arith.addf %96, %99 : vector<224x32xf32>
    %101 = arith.truncf %100 : vector<224x32xf32> to vector<224x32xbf16>
    %c0_24 = arith.constant 0 : index
    %c0_25 = arith.constant 0 : index
    %c0_26 = arith.constant 0 : index
    %c0_27 = arith.constant 0 : index
    %102 = vector.load %arg2[%c0_24, %c0_25, %c0_26, %c0_27] : memref<1x1x32x32xf32, #tpu.memory_space<vmem>>, vector<1x1x32x32xf32>
    %103 = vector.shape_cast %102 : vector<1x1x32x32xf32> to vector<1x32x32xf32>
    %104 = arith.truncf %103 : vector<1x32x32xf32> to vector<1x32x32xbf16>
    %105 = vector.shape_cast %104 : vector<1x32x32xbf16> to vector<32x32xbf16>
    %cst_28 = arith.constant dense<0.000000e+00> : vector<32x256xf32>
    %106 = tpu.matmul %105, %61, %cst_28 {dimension_numbers = #tpu.dot_dimension_numbers<[1], [0], [0], [1], [0, 0, 1, 1], [], []>} : vector<32x32xbf16>, vector<32x256xbf16>, vector<32x256xf32> -> vector<32x256xf32>
    %107 = arith.truncf %106 : vector<32x256xf32> to vector<32x256xbf16>
    %cst_29 = arith.constant dense<0.000000e+00> : vector<224x256xf32>
    %108 = tpu.matmul %101, %107, %cst_29 {dimension_numbers = #tpu.dot_dimension_numbers<[1], [0], [0], [1], [0, 0, 1, 1], [], []>} : vector<224x32xbf16>, vector<32x256xbf16>, vector<224x256xf32> -> vector<224x256xf32>
    %109 = vector.extract_strided_slice %108 {offsets = [0, 0], sizes = [224, 224], strides = [1, 1]} : vector<224x256xf32> to vector<224x224xf32>
    %c0_30 = arith.constant 0 : index
    %c0_31 = arith.constant 0 : index
    %c0_32 = arith.constant 0 : index
    %c0_33 = arith.constant 0 : index
    %110 = vector.load %arg3[%c0_30, %c0_31, %c0_32, %c0_33] : memref<1x1x224x224xf32, #tpu.memory_space<vmem>>, vector<1x1x224x224xf32>
    %111 = vector.shape_cast %110 : vector<1x1x224x224xf32> to vector<224x224xf32>
    %112 = vector.shape_cast %109 : vector<224x224xf32> to vector<1x1x224x224xf32>
    tpu.vector_store %arg3[%c0_30, %c0_31, %c0_32, %c0_33], %112 {strides = array<i32>} : memref<1x1x224x224xf32, #tpu.memory_space<vmem>>, vector<1x1x224x224xf32>,
    return
  }
  func.func @transform_0(%arg0: i32, %arg1: memref<2x6xi32, #tpu.memory_space<smem>>) -> (i32, i32, i32, i32) {
    %c0_i32 = arith.constant 0 : i32
    %c0_i32_0 = arith.constant 0 : i32
    %c0_i32_1 = arith.constant 0 : i32
    %c0_i32_2 = arith.constant 0 : i32
    return %arg0, %c0_i32, %c0_i32_0, %c0_i32_1 : i32, i32, i32, i32
  }
  func.func @transform_1(%arg0: i32, %arg1: memref<2x6xi32, #tpu.memory_space<smem>>) -> (i32, i32, i32, i32) {
    %c0_i32 = arith.constant 0 : i32
    %c0_i32_0 = arith.constant 0 : i32
    %c0_i32_1 = arith.constant 0 : i32
    %c0_i32_2 = arith.constant 0 : i32
    return %arg0, %c0_i32, %c0_i32_0, %c0_i32_1 : i32, i32, i32, i32
  }
}

module attributes {stable_mosaic.version = 11 : i64} {
  func.func @_aug_kernel_small(%arg0: i32, %arg1: memref<2x6xi32, #tpu.memory_space<smem>>, %arg2: memref<1x3x32x32xf32, #tpu.memory_space<vmem>>, %arg3: memref<1x3x224x224xf32, #tpu.memory_space<vmem>>) attributes {dimension_semantics = [#tpu.dimension_semantics<parallel>], iteration_bounds = array<i64: 2>, scalar_prefetch = 1 : i64, scratch_operands = 0 : i64, tpu.core_type = #tpu.core_type<tc>, window_params = [{transform_indices = @transform_0, window_bounds = array<i64: 1, 3, 32, 32>}, {transform_indices = @transform_1, window_bounds = array<i64: 1, 3, 224, 224>}]} {
    %c1_i32 = arith.constant 1 : i32
    %0 = arith.muli %arg0, %c1_i32 : i32
    %c0_i32 = arith.constant 0 : i32
    %1 = arith.addi %0, %c0_i32 : i32
    %2 = arith.index_cast %1 : i32 to index
    %c0 = arith.constant 0 : index
    %3 = memref.load %arg1[%2, %c0] : memref<2x6xi32, #tpu.memory_space<smem>>
    %4 = arith.sitofp %3 : i32 to f32
    %5 = arith.index_cast %1 : i32 to index
    %c1 = arith.constant 1 : index
    %6 = memref.load %arg1[%5, %c1] : memref<2x6xi32, #tpu.memory_space<smem>>
    %7 = arith.sitofp %6 : i32 to f32
    %8 = arith.index_cast %1 : i32 to index
    %c2 = arith.constant 2 : index
    %9 = memref.load %arg1[%8, %c2] : memref<2x6xi32, #tpu.memory_space<smem>>
    %10 = arith.sitofp %9 : i32 to f32
    %11 = arith.index_cast %1 : i32 to index
    %c3 = arith.constant 3 : index
    %12 = memref.load %arg1[%11, %c3] : memref<2x6xi32, #tpu.memory_space<smem>>
    %13 = arith.sitofp %12 : i32 to f32
    %14 = arith.index_cast %1 : i32 to index
    %c4 = arith.constant 4 : index
    %15 = memref.load %arg1[%14, %c4] : memref<2x6xi32, #tpu.memory_space<smem>>
    %16 = arith.sitofp %15 : i32 to f32
    %17 = arith.index_cast %1 : i32 to index
    %c5 = arith.constant 5 : index
    %18 = memref.load %arg1[%17, %c5] : memref<2x6xi32, #tpu.memory_space<smem>>
    %19 = arith.sitofp %18 : i32 to f32
    %20 = tpu.iota {dimensions = array<i32: 1>} : vector<32x256xi32>
    %21 = arith.sitofp %20 : vector<32x256xi32> to vector<32x256xf32>
    %22 = tpu.iota {dimensions = array<i32: 0>} : vector<32x256xi32>
    %23 = arith.sitofp %22 : vector<32x256xi32> to vector<32x256xf32>
    %cst = arith.constant 2.240000e+02 : f32
    %24 = vector.broadcast %cst : f32 to vector<32x256xf32>
    %25 = arith.cmpf olt, %21, %24 : vector<32x256xf32>
    %cst_0 = arith.constant 2.000000e+00 : f32
    %26 = vector.broadcast %cst_0 : f32 to vector<32x256xf32>
    %27 = arith.mulf %26, %21 : vector<32x256xf32>
    %cst_1 = arith.constant 2.230000e+02 : f32
    %28 = vector.broadcast %cst_1 : f32 to vector<32x256xf32>
    %29 = arith.subf %28, %27 : vector<32x256xf32>
    %30 = vector.broadcast %19 : f32 to vector<32x256xf32>
    %31 = arith.mulf %30, %29 : vector<32x256xf32>
    %32 = arith.addf %21, %31 : vector<32x256xf32>
    %cst_2 = arith.constant 1.000000e+00 : f32
    %33 = arith.subf %13, %cst_2 : f32
    %34 = vector.broadcast %33 : f32 to vector<32x256xf32>
    %35 = arith.mulf %32, %34 : vector<32x256xf32>
    %cst_3 = arith.constant 0.00448430516 : f32
    %36 = vector.broadcast %cst_3 : f32 to vector<32x256xf32>
    %37 = arith.mulf %35, %36 : vector<32x256xf32>
    %38 = vector.broadcast %10 : f32 to vector<32x256xf32>
    %39 = arith.addf %38, %37 : vector<32x256xf32>
    %cst_4 = arith.constant 0.000000e+00 : f32
    %cst_5 = arith.constant 3.100000e+01 : f32
    %40 = vector.broadcast %cst_4 : f32 to vector<32x256xf32>
    %41 = arith.maximumf %40, %39 : vector<32x256xf32>
    %42 = vector.broadcast %cst_5 : f32 to vector<32x256xf32>
    %43 = arith.minimumf %42, %41 : vector<32x256xf32>
    %44 = math.floor %43 : vector<32x256xf32>
    %45 = arith.subf %43, %44 : vector<32x256xf32>
    %cst_6 = arith.constant 1.000000e+00 : f32
    %46 = vector.broadcast %cst_6 : f32 to vector<32x256xf32>
    %47 = arith.addf %44, %46 : vector<32x256xf32>
    %cst_7 = arith.constant 3.100000e+01 : f32
    %48 = vector.broadcast %cst_7 : f32 to vector<32x256xf32>
    %49 = arith.minimumf %47, %48 : vector<32x256xf32>
    %50 = arith.cmpf oeq, %23, %44 : vector<32x256xf32>
    %cst_8 = arith.constant 1.000000e+00 : f32
    %51 = vector.broadcast %cst_8 : f32 to vector<32x256xf32>
    %52 = arith.subf %51, %45 : vector<32x256xf32>
    %cst_9 = arith.constant 0.000000e+00 : f32
    %53 = vector.broadcast %cst_9 : f32 to vector<32x256xf32>
    %54 = arith.select %50, %52, %53 : vector<32x256xi1>, vector<32x256xf32>
    %55 = arith.cmpf oeq, %23, %49 : vector<32x256xf32>
    %cst_10 = arith.constant 0.000000e+00 : f32
    %56 = vector.broadcast %cst_10 : f32 to vector<32x256xf32>
    %57 = arith.select %55, %45, %56 : vector<32x256xi1>, vector<32x256xf32>
    %58 = arith.addf %54, %57 : vector<32x256xf32>
    %cst_11 = arith.constant 0.000000e+00 : f32
    %59 = vector.broadcast %cst_11 : f32 to vector<32x256xf32>
    %60 = arith.select %25, %58, %59 : vector<32x256xi1>, vector<32x256xf32>
    %61 = arith.truncf %60 : vector<32x256xf32> to vector<32x256xbf16>
    %62 = tpu.iota {dimensions = array<i32: 0>} : vector<224x32xi32>
    %63 = arith.sitofp %62 : vector<224x32xi32> to vector<224x32xf32>
    %64 = tpu.iota {dimensions = array<i32: 1>} : vector<224x32xi32>
    %65 = arith.sitofp %64 : vector<224x32xi32> to vector<224x32xf32>
    %cst_12 = arith.constant 0.000000e+00 : f32
    %66 = vector.broadcast %cst_12 : f32 to vector<224x32xf32>
    %67 = arith.addf %65, %66 : vector<224x32xf32>
    %cst_13 = arith.constant 2.000000e+00 : f32
    %68 = vector.broadcast %cst_13 : f32 to vector<224x32xf32>
    %69 = arith.mulf %68, %63 : vector<224x32xf32>
    %cst_14 = arith.constant 2.230000e+02 : f32
    %70 = vector.broadcast %cst_14 : f32 to vector<224x32xf32>
    %71 = arith.subf %70, %69 : vector<224x32xf32>
    %72 = vector.broadcast %16 : f32 to vector<224x32xf32>
    %73 = arith.mulf %72, %71 : vector<224x32xf32>
    %74 = arith.addf %63, %73 : vector<224x32xf32>
    %cst_15 = arith.constant 1.000000e+00 : f32
    %75 = arith.subf %7, %cst_15 : f32
    %76 = vector.broadcast %75 : f32 to vector<224x32xf32>
    %77 = arith.mulf %74, %76 : vector<224x32xf32>
    %cst_16 = arith.constant 0.00448430516 : f32
    %78 = vector.broadcast %cst_16 : f32 to vector<224x32xf32>
    %79 = arith.mulf %77, %78 : vector<224x32xf32>
    %80 = vector.broadcast %4 : f32 to vector<224x32xf32>
    %81 = arith.addf %80, %79 : vector<224x32xf32>
    %cst_17 = arith.constant 0.000000e+00 : f32
    %cst_18 = arith.constant 3.100000e+01 : f32
    %82 = vector.broadcast %cst_17 : f32 to vector<224x32xf32>
    %83 = arith.maximumf %82, %81 : vector<224x32xf32>
    %84 = vector.broadcast %cst_18 : f32 to vector<224x32xf32>
    %85 = arith.minimumf %84, %83 : vector<224x32xf32>
    %86 = math.floor %85 : vector<224x32xf32>
    %87 = arith.subf %85, %86 : vector<224x32xf32>
    %cst_19 = arith.constant 1.000000e+00 : f32
    %88 = vector.broadcast %cst_19 : f32 to vector<224x32xf32>
    %89 = arith.addf %86, %88 : vector<224x32xf32>
    %cst_20 = arith.constant 3.100000e+01 : f32
    %90 = vector.broadcast %cst_20 : f32 to vector<224x32xf32>
    %91 = arith.minimumf %89, %90 : vector<224x32xf32>
    %92 = arith.cmpf oeq, %67, %86 : vector<224x32xf32>
    %cst_21 = arith.constant 1.000000e+00 : f32
    %93 = vector.broadcast %cst_21 : f32 to vector<224x32xf32>
    %94 = arith.subf %93, %87 : vector<224x32xf32>
    %cst_22 = arith.constant 0.000000e+00 : f32
    %95 = vector.broadcast %cst_22 : f32 to vector<224x32xf32>
    %96 = arith.select %92, %94, %95 : vector<224x32xi1>, vector<224x32xf32>
    %97 = arith.cmpf oeq, %67, %91 : vector<224x32xf32>
    %cst_23 = arith.constant 0.000000e+00 : f32
    %98 = vector.broadcast %cst_23 : f32 to vector<224x32xf32>
    %99 = arith.select %97, %87, %98 : vector<224x32xi1>, vector<224x32xf32>
    %100 = arith.addf %96, %99 : vector<224x32xf32>
    %101 = arith.truncf %100 : vector<224x32xf32> to vector<224x32xbf16>
    %c0_24 = arith.constant 0 : index
    %c0_25 = arith.constant 0 : index
    %c0_26 = arith.constant 0 : index
    %c0_27 = arith.constant 0 : index
    %102 = vector.load %arg2[%c0_24, %c0_25, %c0_26, %c0_27] : memref<1x3x32x32xf32, #tpu.memory_space<vmem>>, vector<1x3x32x32xf32>
    %103 = vector.shape_cast %102 : vector<1x3x32x32xf32> to vector<3x32x32xf32>
    %104 = arith.truncf %103 : vector<3x32x32xf32> to vector<3x32x32xbf16>
    %105 = vector.shape_cast %104 : vector<3x32x32xbf16> to vector<96x32xbf16>
    %cst_28 = arith.constant dense<0.000000e+00> : vector<96x256xf32>
    %106 = tpu.matmul %105, %61, %cst_28 {dimension_numbers = #tpu.dot_dimension_numbers<[1], [0], [0], [1], [0, 0, 1, 1], [], []>} : vector<96x32xbf16>, vector<32x256xbf16>, vector<96x256xf32> -> vector<96x256xf32>
    %107 = arith.truncf %106 : vector<96x256xf32> to vector<96x256xbf16>
    %108 = vector.extract_strided_slice %107 {offsets = [0, 0], sizes = [32, 256], strides = [1, 1]} : vector<96x256xbf16> to vector<32x256xbf16>
    %cst_29 = arith.constant dense<0.000000e+00> : vector<224x256xf32>
    %109 = tpu.matmul %101, %108, %cst_29 {dimension_numbers = #tpu.dot_dimension_numbers<[1], [0], [0], [1], [0, 0, 1, 1], [], []>} : vector<224x32xbf16>, vector<32x256xbf16>, vector<224x256xf32> -> vector<224x256xf32>
    %110 = vector.extract_strided_slice %109 {offsets = [0, 0], sizes = [224, 224], strides = [1, 1]} : vector<224x256xf32> to vector<224x224xf32>
    %c0_30 = arith.constant 0 : index
    %c0_31 = arith.constant 0 : index
    %c0_32 = arith.constant 0 : index
    %c0_33 = arith.constant 0 : index
    %111 = vector.load %arg3[%c0_30, %c0_31, %c0_32, %c0_33] : memref<1x3x224x224xf32, #tpu.memory_space<vmem>>, vector<1x1x224x224xf32>
    %112 = vector.shape_cast %111 : vector<1x1x224x224xf32> to vector<224x224xf32>
    %113 = vector.shape_cast %110 : vector<224x224xf32> to vector<1x1x224x224xf32>
    tpu.vector_store %arg3[%c0_30, %c0_31, %c0_32, %c0_33], %113 {strides = array<i32>} : memref<1x3x224x224xf32, #tpu.memory_space<vmem>>, vector<1x1x224x224xf32>,
    %114 = vector.extract_strided_slice %107 {offsets = [32, 0], sizes = [32, 256], strides = [1, 1]} : vector<96x256xbf16> to vector<32x256xbf16>
    %cst_34 = arith.constant dense<0.000000e+00> : vector<224x256xf32>
    %115 = tpu.matmul %101, %114, %cst_34 {dimension_numbers = #tpu.dot_dimension_numbers<[1], [0], [0], [1], [0, 0, 1, 1], [], []>} : vector<224x32xbf16>, vector<32x256xbf16>, vector<224x256xf32> -> vector<224x256xf32>
    %116 = vector.extract_strided_slice %115 {offsets = [0, 0], sizes = [224, 224], strides = [1, 1]} : vector<224x256xf32> to vector<224x224xf32>
    %c0_35 = arith.constant 0 : index
    %c1_36 = arith.constant 1 : index
    %c0_37 = arith.constant 0 : index
    %c0_38 = arith.constant 0 : index
    %117 = vector.load %arg3[%c0_35, %c1_36, %c0_37, %c0_38] : memref<1x3x224x224xf32, #tpu.memory_space<vmem>>, vector<1x1x224x224xf32>
    %118 = vector.shape_cast %117 : vector<1x1x224x224xf32> to vector<224x224xf32>
    %119 = vector.shape_cast %116 : vector<224x224xf32> to vector<1x1x224x224xf32>
    tpu.vector_store %arg3[%c0_35, %c1_36, %c0_37, %c0_38], %119 {strides = array<i32>} : memref<1x3x224x224xf32, #tpu.memory_space<vmem>>, vector<1x1x224x224xf32>,
    %120 = vector.extract_strided_slice %107 {offsets = [64, 0], sizes = [32, 256], strides = [1, 1]} : vector<96x256xbf16> to vector<32x256xbf16>
    %cst_39 = arith.constant dense<0.000000e+00> : vector<224x256xf32>
    %121 = tpu.matmul %101, %120, %cst_39 {dimension_numbers = #tpu.dot_dimension_numbers<[1], [0], [0], [1], [0, 0, 1, 1], [], []>} : vector<224x32xbf16>, vector<32x256xbf16>, vector<224x256xf32> -> vector<224x256xf32>
    %122 = vector.extract_strided_slice %121 {offsets = [0, 0], sizes = [224, 224], strides = [1, 1]} : vector<224x256xf32> to vector<224x224xf32>
    %c0_40 = arith.constant 0 : index
    %c2_41 = arith.constant 2 : index
    %c0_42 = arith.constant 0 : index
    %c0_43 = arith.constant 0 : index
    %123 = vector.load %arg3[%c0_40, %c2_41, %c0_42, %c0_43] : memref<1x3x224x224xf32, #tpu.memory_space<vmem>>, vector<1x1x224x224xf32>
    %124 = vector.shape_cast %123 : vector<1x1x224x224xf32> to vector<224x224xf32>
    %125 = vector.shape_cast %122 : vector<224x224xf32> to vector<1x1x224x224xf32>
    tpu.vector_store %arg3[%c0_40, %c2_41, %c0_42, %c0_43], %125 {strides = array<i32>} : memref<1x3x224x224xf32, #tpu.memory_space<vmem>>, vector<1x1x224x224xf32>,
    return
  }
  func.func @transform_0(%arg0: i32, %arg1: memref<2x6xi32, #tpu.memory_space<smem>>) -> (i32, i32, i32, i32) {
    %c0_i32 = arith.constant 0 : i32
    %c0_i32_0 = arith.constant 0 : i32
    %c0_i32_1 = arith.constant 0 : i32
    %c0_i32_2 = arith.constant 0 : i32
    return %arg0, %c0_i32, %c0_i32_0, %c0_i32_1 : i32, i32, i32, i32
  }
  func.func @transform_1(%arg0: i32, %arg1: memref<2x6xi32, #tpu.memory_space<smem>>) -> (i32, i32, i32, i32) {
    %c0_i32 = arith.constant 0 : i32
    %c0_i32_0 = arith.constant 0 : i32
    %c0_i32_1 = arith.constant 0 : i32
    %c0_i32_2 = arith.constant 0 : i32
    return %arg0, %c0_i32, %c0_i32_0, %c0_i32_1 : i32, i32, i32, i32
  }
}

</mosaic_0001>

<llo_original>
// kernel: my_aug.7
$region0: #{my_aug.7}
  #allocation0 [shape = 'u32[]', space=smem, size = 0x4, offset = 0x4, fixed_abs, tag = 'smem constant byte address 0x4 - core index']
  #allocation1 [shape = 'u32[144,128]{1,0:T(1,128)}', space=vmem, size = 0x12000, scoped, tag = 'internal scratch']
  #allocation2 [shape = 's32[1]{0}', space=sflag, size = 0x4, scoped, tag = 'scoped memory for my_aug.7']
  #allocation3 [shape = 'u8[1024]{0}', space=smem, size = 0x400, scoped, tag = 'prefetched SMEM operand 0']
  %s0 = inlined_call_operand.vmem [shape: s32[2,6], index: 0, kind: input, shape index: {}]
  %s1 = inlined_call_operand.hbm [shape: f32[2,1,32,32], index: 1, kind: input, shape index: {}]
  %s2 = inlined_call_operand.hbm [shape: f32[2,1,224,224], index: 2, kind: output, shape index: {}]
  %s3 = sld [smem:[#allocation0]]
  $region41: #{my_aug.7} parent=0
    _
  %s5 = ssub.s32 1, %s3
  %s6 = scalar_select 0, %s5, %s3
  %s7 = sshll.u32 %s0, 4
  %s8 = int_to_ptr.vmem [resolvable:$true] %s7
  %10 = dma.vmem_to_smem %s8, 32, [#allocation3], [#allocation2]
  %11 = dma.done [#allocation2], 32
  %12 = sfence
  $region1: #{my_aug.7} parent=0
    #allocation4 [shape = 'u8[32768]{0}', space=vmem, size = 0x8000, scoped, tag = 'input window, operand 1']
    #allocation5 [shape = 's32[2]{0}', space=sflag, size = 0x8, scoped, tag = 'scoped memory for my_aug.7']
    #allocation6 [shape = 's32[2]{0}', space=sflag, size = 0x8, scoped, tag = 'scoped memory for my_aug.7']
    #allocation7 [shape = 'u8[458752]{0}', space=vmem, size = 0x70000, scoped, tag = 'output window, operand 0']
    %13 = vsyncpa [#allocation5], 0
    %s14 = scalar_lea.sflag [#allocation5], 1
    %15 = vsyncpa %s14, 0
    %16 = vsyncpa [#allocation6], 0
    %s17 = scalar_lea.sflag [#allocation6], 1
    %18 = vsyncpa %s17, 0
    loop: start=0, step=1, limit=4
    $region2: #{my_aug.7} parent=1 // loop_pre_header
      _
    $region3: #{my_aug.7} parent=1 // loop_header
      %s20 = sphi 0, %s24
      %p21 = scmp.ge.s32.totalorder %s20, 4
      %s30 = sphi 0, %s32
      %s33 = sphi 0, %s30
      %s34 = sphi 0, %s33
      %s50 = sphi 0, %s34
      %s56 = sphi 0, %s58
      %s59 = sphi 0, %s56
      %s60 = sphi 0, %s59
      %s76 = sphi 0, %s60
    $region4: #{my_aug.7} parent=1 // loop_header_branch
      %23 = sbr.rel (%p21) target = $region8
    $region5: #{my_aug.7} parent=1 // loop_body
      %s25 = ssub.s32 %s20, 1
      %s26 = ssub.s32 %s20, 2
      %s27 = sadd.s32 %s20, 1
      %s28 = ssub.s32 %s20, %s27
      %p29 = scmp.eq.s32.totalorder %s28, 0
      %s31 = sadd.s32 %s30, 1
      %s32 = scalar_select %p29, %s30, %s31
      %p35 = pneg %p29
      %p36 = scmp.eq.s32.totalorder %s20, 1
      %p37 = por %p35, %p36
      %p38 = scmp.ne.s32.totalorder %s30, %s33
      %p39 = scmp.eq.s32.totalorder %s20, 0
      %p40 = por %p38, %p39
      %p41 = scmp.ne.s32.totalorder %s30, %s33
      %p42 = scmp.eq.s32.totalorder %s25, 1
      %p43 = por %p41, %p42
      %p44 = scmp.ne.s32.totalorder %s33, %s34
      %p45 = scmp.eq.s32.totalorder %s25, 0
      %p46 = por %p44, %p45
      %p47 = scmp.ne.s32.totalorder %s33, %s34
      %p48 = scmp.eq.s32.totalorder %s26, 1
      %p49 = por %p47, %p48
      %p51 = scmp.ne.s32.totalorder %s34, %s50
      %p52 = scmp.eq.s32.totalorder %s26, 0
      %p53 = por %p51, %p52
      %s54 = ssub.s32 %s20, %s27
      %p55 = scmp.eq.s32.totalorder %s54, 0
      %s57 = sadd.s32 %s56, 1
      %s58 = scalar_select %p55, %s56, %s57
      %p61 = pneg %p55
      %p62 = scmp.eq.s32.totalorder %s20, 1
      %p63 = por %p61, %p62
      %p64 = scmp.ne.s32.totalorder %s56, %s59
      %p65 = scmp.eq.s32.totalorder %s20, 0
      %p66 = por %p64, %p65
      %p67 = scmp.ne.s32.totalorder %s56, %s59
      %p68 = scmp.eq.s32.totalorder %s25, 1
      %p69 = por %p67, %p68
      %p70 = scmp.ne.s32.totalorder %s59, %s60
      %p71 = scmp.eq.s32.totalorder %s25, 0
      %p72 = por %p70, %p71
      %p73 = scmp.ne.s32.totalorder %s59, %s60
      %p74 = scmp.eq.s32.totalorder %s26, 1
      %p75 = por %p73, %p74
      %p77 = scmp.ne.s32.totalorder %s60, %s76
      %p78 = scmp.eq.s32.totalorder %s26, 0
      %p79 = por %p77, %p78
      %p80 = scmp.le.s32.totalorder 1, %s20
      %p81 = scmp.lt.s32.totalorder %s20, 3
      %p82 = pnand %p80, %p81
      %p83 = pneg %p82
      // Predicated region
      $region9: #{my_aug.7} parent=5 // pred_check
        _
      $region10: #{my_aug.7} parent=5 // pred_check_branch
        %85 = sbr.rel (%p82) target = $region12
      $region11: #{my_aug.7} parent=5 // pred_region
        %s86 = ssub.s32 %s20, 1
      $region12: #{my_aug.7} parent=5 // pred_fallthru
        _
      %p87 = scmp.lt.s32.totalorder %s20, 2
      // Predicated region
      $region13: #{my_aug.7} parent=5 // pred_check
        %p88 = pneg %p87
      $region14: #{my_aug.7} parent=5 // pred_check_branch
        %90 = sbr.rel (%p88) target = $region16
      $region15: #{my_aug.7} parent=5 // pred_region
        // Predicated region
        $region17: #{my_aug.7} parent=15 // pred_check
          %p91 = pneg %p40
        $region18: #{my_aug.7} parent=15 // pred_check_branch
          %93 = sbr.rel (%p91) target = $region20
        $region19: #{my_aug.7} parent=15 // pred_region
          %s94 = sand.u32 %s30, 1
          %s95 = scalar_lea.sflag [#allocation5], %s94
          %s96 = sand.u32 %s30, 1
          %s97 = smul.addr %s96, 32
          %s98 = scalar_lea.vmem [#allocation4], %s97
          %s100 = ssub.s32 512, 512
          %101 = vsyncadd %s95, %s100
          %s102 = smul.addr %s20, 4
          %s103 = smul.addr %s102, 128
          %s104 = scalar_lea.hbm %s1, %s103
          %s105 = sshll.u32 %s98, 4
          %s106 = int_to_ptr.vmem [resolvable:$true] %s105
          %111 = dma.hbm_to_vmem [thread:$0]  %s104, 512, %s106, %s95, 128, 128, 8
        $region20: #{my_aug.7} parent=15 // pred_fallthru
          _
      $region16: #{my_aug.7} parent=5 // pred_fallthru
        _
      %p112 = scmp.le.s32.totalorder 1, %s20
      %p113 = scmp.lt.s32.totalorder %s20, 3
      %p114 = pnand %p112, %p113
      %p115 = pneg %p114
      // Predicated region
      $region21: #{my_aug.7} parent=5 // pred_check
        _
      $region22: #{my_aug.7} parent=5 // pred_check_branch
        %117 = sbr.rel (%p114) target = $region24
      $region23: #{my_aug.7} parent=5 // pred_region
        %s118 = ssub.s32 %s20, 1
        %s119 = sand.u32 %s33, 1
        %s120 = scalar_lea.sflag [#allocation5], %s119
        %s121 = sand.u32 %s33, 1
        %s122 = smul.addr %s121, 32
        %s123 = scalar_lea.vmem [#allocation4], %s122
        // Predicated region
        $region25: #{my_aug.7} parent=23 // pred_check
          %p124 = pneg %p46
        $region26: #{my_aug.7} parent=23 // pred_check_branch
          %126 = sbr.rel (%p124) target = $region28
        $region27: #{my_aug.7} parent=23 // pred_region
          %127 = dma.done %s120, 512
        $region28: #{my_aug.7} parent=23 // pred_fallthru
          _
        %s128 = sand.u32 %s33, 1
        %s129 = scalar_lea.sflag [#allocation5], %s128
        %s130 = sand.u32 %s33, 1
        %s131 = smul.addr %s130, 32
        %s132 = scalar_lea.vmem [#allocation4], %s131
        %p133 = pneg %p46
        %p134 = pneg %p43
        %p135 = pneg %p72
        %p136 = pneg %p69
        %s137 = sand.u32 %s59, 1
        %s138 = scalar_lea.sflag [#allocation6], %s137
        %s139 = sand.u32 %s59, 1
        %s140 = smul.addr %s139, 448
        %s141 = scalar_lea.vmem [#allocation7], %s140
        %s143 = smul.u32 %s25, 128
        %s144 = sld [smem:[#allocation3 + %s143]]
        %s145 = scvt.s32.f32 %s144
        %s146 = sadd.s32 %s143, 1
        %s147 = sld [smem:[#allocation3 + %s146]]
        %s148 = scvt.s32.f32 %s147
        %s149 = sadd.s32 %s143, 2
        %s150 = sld [smem:[#allocation3 + %s149]]
        %s151 = scvt.s32.f32 %s150
        %s152 = sadd.s32 %s143, 3
        %s153 = sld [smem:[#allocation3 + %s152]]
        %s154 = scvt.s32.f32 %s153
        %s155 = sadd.s32 %s143, 4
        %s156 = sld [smem:[#allocation3 + %s155]]
        %s157 = scvt.s32.f32 %s156
        %s158 = sadd.s32 %s143, 5
        %s159 = sld [smem:[#allocation3 + %s158]]
        %s160 = scvt.s32.f32 %s159
        %v161 = vlaneseq
        %v162 = vand.u32 %v161, 127
        %v163 = vadd.s32 %v162, 128
        %v164 = vcvt.s32.f32 %v162
        %v165 = vcvt.s32.f32 %v163
        %v166 = vlaneseq
        %v167 = vshrl.u32 %v166, 7
        %v168 = vadd.s32 %v167, 8
        %v169 = vadd.s32 %v167, 16
        %v170 = vadd.s32 %v167, 24
        %v171 = vcvt.s32.f32 %v167
        %v172 = vcvt.s32.f32 %v168
        %v173 = vcvt.s32.f32 %v169
        %v174 = vcvt.s32.f32 %v170
        %vm175 = vcmp.lt.f32.partialorder %v164, 224.0
        %vm176 = vcmp.lt.f32.partialorder %v165, 224.0
        %v177 = vmul.f32 %v164, 2.0
        %v178 = vmul.f32 %v165, 2.0
        %v179 = vsub.f32 223.0, %v177
        %v180 = vsub.f32 223.0, %v178
        %v181 = vstv %s160
        %v182 = vmul.f32 %v181, %v179
        %v183 = vmul.f32 %v181, %v180
        %v184 = vadd.f32 %v164, %v182
        %v185 = vadd.f32 %v165, %v183
        %s186 = ssub.f32 %s154, 1.0
        %v187 = vstv %s186
        %v188 = vmul.f32 %v184, %v187
        %v189 = vmul.f32 %v185, %v187
        %v190 = vmul.f32 %v188, 0.004484305
        %v191 = vmul.f32 %v189, 0.004484305
        %v192 = vstv %s151
        %v193 = vadd.f32 %v192, %v190
        %v194 = vadd.f32 %v192, %v191
        %v195 = vmax.f32 %v193, 0.0
        %v196 = vmax.f32 %v194, 0.0
        %v197 = vmin.f32 %v195, 31.0
        %v198 = vmin.f32 %v196, 31.0
        %v199 = vfloor.f32 %v197
        %v200 = vfloor.f32 %v198
        %v201 = vsub.f32 %v197, %v199
        %v202 = vsub.f32 %v198, %v200
        %v203 = vadd.f32 %v199, 1.0
        %v204 = vadd.f32 %v200, 1.0
        %v205 = vmin.f32 %v203, 31.0
        %v206 = vmin.f32 %v204, 31.0
        %vm207 = vcmp.eq.f32.partialorder %v171, %v199
        %vm208 = vcmp.eq.f32.partialorder %v171, %v200
        %vm209 = vcmp.eq.f32.partialorder %v172, %v199
        %vm210 = vcmp.eq.f32.partialorder %v172, %v200
        %vm211 = vcmp.eq.f32.partialorder %v173, %v199
        %vm212 = vcmp.eq.f32.partialorder %v173, %v200
        %vm213 = vcmp.eq.f32.partialorder %v174, %v199
        %vm214 = vcmp.eq.f32.partialorder %v174, %v200
        %v215 = vsub.f32 1.0, %v201
        %v216 = vsub.f32 1.0, %v202
        %v217 = vsel %vm207, %v215, 0.0
        %v218 = vsel %vm208, %v216, 0.0
        %v219 = vsel %vm209, %v215, 0.0
        %v220 = vsel %vm210, %v216, 0.0
        %v221 = vsel %vm211, %v215, 0.0
        %v222 = vsel %vm212, %v216, 0.0
        %v223 = vsel %vm213, %v215, 0.0
        %v224 = vsel %vm214, %v216, 0.0
        %vm225 = vcmp.eq.f32.partialorder %v171, %v205
        %vm226 = vcmp.eq.f32.partialorder %v171, %v206
        %vm227 = vcmp.eq.f32.partialorder %v172, %v205
        %vm228 = vcmp.eq.f32.partialorder %v172, %v206
        %vm229 = vcmp.eq.f32.partialorder %v173, %v205
        %vm230 = vcmp.eq.f32.partialorder %v173, %v206
        %vm231 = vcmp.eq.f32.partialorder %v174, %v205
        %vm232 = vcmp.eq.f32.partialorder %v174, %v206
        %v233 = vsel %vm225, %v201, 0.0
        %v234 = vsel %vm226, %v202, 0.0
        %v235 = vsel %vm227, %v201, 0.0
        %v236 = vsel %vm228, %v202, 0.0
        %v237 = vsel %vm229, %v201, 0.0
        %v238 = vsel %vm230, %v202, 0.0
        %v239 = vsel %vm231, %v201, 0.0
        %v240 = vsel %vm232, %v202, 0.0
        %v241 = vadd.f32 %v217, %v233
        %v242 = vadd.f32 %v218, %v234
        %v243 = vadd.f32 %v219, %v235
        %v244 = vadd.f32 %v220, %v236
        %v245 = vadd.f32 %v221, %v237
        %v246 = vadd.f32 %v222, %v238
        %v247 = vadd.f32 %v223, %v239
        %v248 = vadd.f32 %v224, %v240
        %v249 = vsel %vm175, %v241, 0.0
        %v250 = vsel %vm176, %v242, 0.0
        %v251 = vsel %vm175, %v243, 0.0
        %v252 = vsel %vm176, %v244, 0.0
        %v253 = vsel %vm175, %v245, 0.0
        %v254 = vsel %vm176, %v246, 0.0
        %v255 = vsel %vm175, %v247, 0.0
        %v256 = vsel %vm176, %v248, 0.0
        %v257 = vpack.c.bf16 %v251, %v249
        %v258 = vpack.c.bf16 %v252, %v250
        %v259 = vpack.c.bf16 %v255, %v253
        %v260 = vpack.c.bf16 %v256, %v254
        %v261 = vadd.s32 %v167, 32
        %v262 = vadd.s32 %v167, 40
        %v263 = vadd.s32 %v167, 48
        %v264 = vadd.s32 %v167, 56
        %v265 = vadd.s32 %v167, 64
        %v266 = vadd.s32 %v167, 72
        %v267 = vadd.s32 %v167, 80
        %v268 = vadd.s32 %v167, 88
        %v269 = vadd.s32 %v167, 96
        %v270 = vadd.s32 %v167, 104
        %v271 = vadd.s32 %v167, 112
        %v272 = vadd.s32 %v167, 120
        %v273 = vadd.s32 %v167, 128
        %v274 = vadd.s32 %v167, 136
        %v275 = vadd.s32 %v167, 144
        %v276 = vadd.s32 %v167, 152
        %v277 = vadd.s32 %v167, 160
        %v278 = vadd.s32 %v167, 168
        %v279 = vadd.s32 %v167, 176
        %v280 = vadd.s32 %v167, 184
        %v281 = vadd.s32 %v167, 192
        %v282 = vadd.s32 %v167, 200
        %v283 = vadd.s32 %v167, 208
        %v284 = vadd.s32 %v167, 216
        %v285 = vcvt.s32.f32 %v261
        %v286 = vcvt.s32.f32 %v262
        %v287 = vcvt.s32.f32 %v263
        %v288 = vcvt.s32.f32 %v264
        %v289 = vcvt.s32.f32 %v265
        %v290 = vcvt.s32.f32 %v266
        %v291 = vcvt.s32.f32 %v267
        %v292 = vcvt.s32.f32 %v268
        %v293 = vcvt.s32.f32 %v269
        %v294 = vcvt.s32.f32 %v270
        %v295 = vcvt.s32.f32 %v271
        %v296 = vcvt.s32.f32 %v272
        %v297 = vcvt.s32.f32 %v273
        %v298 = vcvt.s32.f32 %v274
        %v299 = vcvt.s32.f32 %v275
        %v300 = vcvt.s32.f32 %v276
        %v301 = vcvt.s32.f32 %v277
        %v302 = vcvt.s32.f32 %v278
        %v303 = vcvt.s32.f32 %v279
        %v304 = vcvt.s32.f32 %v280
        %v305 = vcvt.s32.f32 %v281
        %v306 = vcvt.s32.f32 %v282
        %v307 = vcvt.s32.f32 %v283
        %v308 = vcvt.s32.f32 %v284
        %v309 = vadd.f32 %v164, 0.0
        %v310 = vmul.f32 %v171, 2.0
        %v311 = vmul.f32 %v172, 2.0
        %v312 = vmul.f32 %v173, 2.0
        %v313 = vmul.f32 %v174, 2.0
        %v314 = vmul.f32 %v285, 2.0
        %v315 = vmul.f32 %v286, 2.0
        %v316 = vmul.f32 %v287, 2.0
        %v317 = vmul.f32 %v288, 2.0
        %v318 = vmul.f32 %v289, 2.0
        %v319 = vmul.f32 %v290, 2.0
        %v320 = vmul.f32 %v291, 2.0
        %v321 = vmul.f32 %v292, 2.0
        %v322 = vmul.f32 %v293, 2.0
        %v323 = vmul.f32 %v294, 2.0
        %v324 = vmul.f32 %v295, 2.0
        %v325 = vmul.f32 %v296, 2.0
        %v326 = vmul.f32 %v297, 2.0
        %v327 = vmul.f32 %v298, 2.0
        %v328 = vmul.f32 %v299, 2.0
        %v329 = vmul.f32 %v300, 2.0
        %v330 = vmul.f32 %v301, 2.0
        %v331 = vmul.f32 %v302, 2.0
        %v332 = vmul.f32 %v303, 2.0
        %v333 = vmul.f32 %v304, 2.0
        %v334 = vmul.f32 %v305, 2.0
        %v335 = vmul.f32 %v306, 2.0
        %v336 = vmul.f32 %v307, 2.0
        %v337 = vmul.f32 %v308, 2.0
        %v338 = vsub.f32 223.0, %v310
        %v339 = vsub.f32 223.0, %v311
        %v340 = vsub.f32 223.0, %v312
        %v341 = vsub.f32 223.0, %v313
        %v342 = vsub.f32 223.0, %v314
        %v343 = vsub.f32 223.0, %v315
        %v344 = vsub.f32 223.0, %v316
        %v345 = vsub.f32 223.0, %v317
        %v346 = vsub.f32 223.0, %v318
        %v347 = vsub.f32 223.0, %v319
        %v348 = vsub.f32 223.0, %v320
        %v349 = vsub.f32 223.0, %v321
        %v350 = vsub.f32 223.0, %v322
        %v351 = vsub.f32 223.0, %v323
        %v352 = vsub.f32 223.0, %v324
        %v353 = vsub.f32 223.0, %v325
        %v354 = vsub.f32 223.0, %v326
        %v355 = vsub.f32 223.0, %v327
        %v356 = vsub.f32 223.0, %v328
        %v357 = vsub.f32 223.0, %v329
        %v358 = vsub.f32 223.0, %v330
        %v359 = vsub.f32 223.0, %v331
        %v360 = vsub.f32 223.0, %v332
        %v361 = vsub.f32 223.0, %v333
        %v362 = vsub.f32 223.0, %v334
        %v363 = vsub.f32 223.0, %v335
        %v364 = vsub.f32 223.0, %v336
        %v365 = vsub.f32 223.0, %v337
        %v366 = vstv %s157
        %v367 = vmul.f32 %v366, %v338
        %v368 = vmul.f32 %v366, %v339
        %v369 = vmul.f32 %v366, %v340
        %v370 = vmul.f32 %v366, %v341
        %v371 = vmul.f32 %v366, %v342
        %v372 = vmul.f32 %v366, %v343
        %v373 = vmul.f32 %v366, %v344
        %v374 = vmul.f32 %v366, %v345
        %v375 = vmul.f32 %v366, %v346
        %v376 = vmul.f32 %v366, %v347
        %v377 = vmul.f32 %v366, %v348
        %v378 = vmul.f32 %v366, %v349
        %v379 = vmul.f32 %v366, %v350
        %v380 = vmul.f32 %v366, %v351
        %v381 = vmul.f32 %v366, %v352
        %v382 = vmul.f32 %v366, %v353
        %v383 = vmul.f32 %v366, %v354
        %v384 = vmul.f32 %v366, %v355
        %v385 = vmul.f32 %v366, %v356
        %v386 = vmul.f32 %v366, %v357
        %v387 = vmul.f32 %v366, %v358
        %v388 = vmul.f32 %v366, %v359
        %v389 = vmul.f32 %v366, %v360
        %v390 = vmul.f32 %v366, %v361
        %v391 = vmul.f32 %v366, %v362
        %v392 = vmul.f32 %v366, %v363
        %v393 = vmul.f32 %v366, %v364
        %v394 = vmul.f32 %v366, %v365
        %v395 = vadd.f32 %v171, %v367
        %v396 = vadd.f32 %v172, %v368
        %v397 = vadd.f32 %v173, %v369
        %v398 = vadd.f32 %v174, %v370
        %v399 = vadd.f32 %v285, %v371
        %v400 = vadd.f32 %v286, %v372
        %v401 = vadd.f32 %v287, %v373
        %v402 = vadd.f32 %v288, %v374
        %v403 = vadd.f32 %v289, %v375
        %v404 = vadd.f32 %v290, %v376
        %v405 = vadd.f32 %v291, %v377
        %v406 = vadd.f32 %v292, %v378
        %v407 = vadd.f32 %v293, %v379
        %v408 = vadd.f32 %v294, %v380
        %v409 = vadd.f32 %v295, %v381
        %v410 = vadd.f32 %v296, %v382
        %v411 = vadd.f32 %v297, %v383
        %v412 = vadd.f32 %v298, %v384
        %v413 = vadd.f32 %v299, %v385
        %v414 = vadd.f32 %v300, %v386
        %v415 = vadd.f32 %v301, %v387
        %v416 = vadd.f32 %v302, %v388
        %v417 = vadd.f32 %v303, %v389
        %v418 = vadd.f32 %v304, %v390
        %v419 = vadd.f32 %v305, %v391
        %v420 = vadd.f32 %v306, %v392
        %v421 = vadd.f32 %v307, %v393
        %v422 = vadd.f32 %v308, %v394
        %s423 = ssub.f32 %s148, 1.0
        %v424 = vstv %s423
        %v425 = vmul.f32 %v395, %v424
        %v426 = vmul.f32 %v396, %v424
        %v427 = vmul.f32 %v397, %v424
        %v428 = vmul.f32 %v398, %v424
        %v429 = vmul.f32 %v399, %v424
        %v430 = vmul.f32 %v400, %v424
        %v431 = vmul.f32 %v401, %v424
        %v432 = vmul.f32 %v402, %v424
        %v433 = vmul.f32 %v403, %v424
        %v434 = vmul.f32 %v404, %v424
        %v435 = vmul.f32 %v405, %v424
        %v436 = vmul.f32 %v406, %v424
        %v437 = vmul.f32 %v407, %v424
        %v438 = vmul.f32 %v408, %v424
        %v439 = vmul.f32 %v409, %v424
        %v440 = vmul.f32 %v410, %v424
        %v441 = vmul.f32 %v411, %v424
        %v442 = vmul.f32 %v412, %v424
        %v443 = vmul.f32 %v413, %v424
        %v444 = vmul.f32 %v414, %v424
        %v445 = vmul.f32 %v415, %v424
        %v446 = vmul.f32 %v416, %v424
        %v447 = vmul.f32 %v417, %v424
        %v448 = vmul.f32 %v418, %v424
        %v449 = vmul.f32 %v419, %v424
        %v450 = vmul.f32 %v420, %v424
        %v451 = vmul.f32 %v421, %v424
        %v452 = vmul.f32 %v422, %v424
        %v453 = vmul.f32 %v425, 0.004484305
        %v454 = vmul.f32 %v426, 0.004484305
        %v455 = vmul.f32 %v427, 0.004484305
        %v456 = vmul.f32 %v428, 0.004484305
        %v457 = vmul.f32 %v429, 0.004484305
        %v458 = vmul.f32 %v430, 0.004484305
        %v459 = vmul.f32 %v431, 0.004484305
        %v460 = vmul.f32 %v432, 0.004484305
        %v461 = vmul.f32 %v433, 0.004484305
        %v462 = vmul.f32 %v434, 0.004484305
        %v463 = vmul.f32 %v435, 0.004484305
        %v464 = vmul.f32 %v436, 0.004484305
        %v465 = vmul.f32 %v437, 0.004484305
        %v466 = vmul.f32 %v438, 0.004484305
        %v467 = vmul.f32 %v439, 0.004484305
        %v468 = vmul.f32 %v440, 0.004484305
        %v469 = vmul.f32 %v441, 0.004484305
        %v470 = vmul.f32 %v442, 0.004484305
        %v471 = vmul.f32 %v443, 0.004484305
        %v472 = vmul.f32 %v444, 0.004484305
        %v473 = vmul.f32 %v445, 0.004484305
        %v474 = vmul.f32 %v446, 0.004484305
        %v475 = vmul.f32 %v447, 0.004484305
        %v476 = vmul.f32 %v448, 0.004484305
        %v477 = vmul.f32 %v449, 0.004484305
        %v478 = vmul.f32 %v450, 0.004484305
        %v479 = vmul.f32 %v451, 0.004484305
        %v480 = vmul.f32 %v452, 0.004484305
        %v481 = vstv %s145
        %v482 = vadd.f32 %v481, %v453
        %v483 = vadd.f32 %v481, %v454
        %v484 = vadd.f32 %v481, %v455
        %v485 = vadd.f32 %v481, %v456
        %v486 = vadd.f32 %v481, %v457
        %v487 = vadd.f32 %v481, %v458
        %v488 = vadd.f32 %v481, %v459
        %v489 = vadd.f32 %v481, %v460
        %v490 = vadd.f32 %v481, %v461
        %v491 = vadd.f32 %v481, %v462
        %v492 = vadd.f32 %v481, %v463
        %v493 = vadd.f32 %v481, %v464
        %v494 = vadd.f32 %v481, %v465
        %v495 = vadd.f32 %v481, %v466
        %v496 = vadd.f32 %v481, %v467
        %v497 = vadd.f32 %v481, %v468
        %v498 = vadd.f32 %v481, %v469
        %v499 = vadd.f32 %v481, %v470
        %v500 = vadd.f32 %v481, %v471
        %v501 = vadd.f32 %v481, %v472
        %v502 = vadd.f32 %v481, %v473
        %v503 = vadd.f32 %v481, %v474
        %v504 = vadd.f32 %v481, %v475
        %v505 = vadd.f32 %v481, %v476
        %v506 = vadd.f32 %v481, %v477
        %v507 = vadd.f32 %v481, %v478
        %v508 = vadd.f32 %v481, %v479
        %v509 = vadd.f32 %v481, %v480
        %v510 = vmax.f32 %v482, 0.0
        %v511 = vmax.f32 %v483, 0.0
        %v512 = vmax.f32 %v484, 0.0
        %v513 = vmax.f32 %v485, 0.0
        %v514 = vmax.f32 %v486, 0.0
        %v515 = vmax.f32 %v487, 0.0
        %v516 = vmax.f32 %v488, 0.0
        %v517 = vmax.f32 %v489, 0.0
        %v518 = vmax.f32 %v490, 0.0
        %v519 = vmax.f32 %v491, 0.0
        %v520 = vmax.f32 %v492, 0.0
        %v521 = vmax.f32 %v493, 0.0
        %v522 = vmax.f32 %v494, 0.0
        %v523 = vmax.f32 %v495, 0.0
        %v524 = vmax.f32 %v496, 0.0
        %v525 = vmax.f32 %v497, 0.0
        %v526 = vmax.f32 %v498, 0.0
        %v527 = vmax.f32 %v499, 0.0
        %v528 = vmax.f32 %v500, 0.0
        %v529 = vmax.f32 %v501, 0.0
        %v530 = vmax.f32 %v502, 0.0
        %v531 = vmax.f32 %v503, 0.0
        %v532 = vmax.f32 %v504, 0.0
        %v533 = vmax.f32 %v505, 0.0
        %v534 = vmax.f32 %v506, 0.0
        %v535 = vmax.f32 %v507, 0.0
        %v536 = vmax.f32 %v508, 0.0
        %v537 = vmax.f32 %v509, 0.0
        %v538 = vmin.f32 %v510, 31.0
        %v539 = vmin.f32 %v511, 31.0
        %v540 = vmin.f32 %v512, 31.0
        %v541 = vmin.f32 %v513, 31.0
        %v542 = vmin.f32 %v514, 31.0
        %v543 = vmin.f32 %v515, 31.0
        %v544 = vmin.f32 %v516, 31.0
        %v545 = vmin.f32 %v517, 31.0
        %v546 = vmin.f32 %v518, 31.0
        %v547 = vmin.f32 %v519, 31.0
        %v548 = vmin.f32 %v520, 31.0
        %v549 = vmin.f32 %v521, 31.0
        %v550 = vmin.f32 %v522, 31.0
        %v551 = vmin.f32 %v523, 31.0
        %v552 = vmin.f32 %v524, 31.0
        %v553 = vmin.f32 %v525, 31.0
        %v554 = vmin.f32 %v526, 31.0
        %v555 = vmin.f32 %v527, 31.0
        %v556 = vmin.f32 %v528, 31.0
        %v557 = vmin.f32 %v529, 31.0
        %v558 = vmin.f32 %v530, 31.0
        %v559 = vmin.f32 %v531, 31.0
        %v560 = vmin.f32 %v532, 31.0
        %v561 = vmin.f32 %v533, 31.0
        %v562 = vmin.f32 %v534, 31.0
        %v563 = vmin.f32 %v535, 31.0
        %v564 = vmin.f32 %v536, 31.0
        %v565 = vmin.f32 %v537, 31.0
        %v566 = vfloor.f32 %v538
        %v567 = vfloor.f32 %v539
        %v568 = vfloor.f32 %v540
        %v569 = vfloor.f32 %v541
        %v570 = vfloor.f32 %v542
        %v571 = vfloor.f32 %v543
        %v572 = vfloor.f32 %v544
        %v573 = vfloor.f32 %v545
        %v574 = vfloor.f32 %v546
        %v575 = vfloor.f32 %v547
        %v576 = vfloor.f32 %v548
        %v577 = vfloor.f32 %v549
        %v578 = vfloor.f32 %v550
        %v579 = vfloor.f32 %v551
        %v580 = vfloor.f32 %v552
        %v581 = vfloor.f32 %v553
        %v582 = vfloor.f32 %v554
        %v583 = vfloor.f32 %v555
        %v584 = vfloor.f32 %v556
        %v585 = vfloor.f32 %v557
        %v586 = vfloor.f32 %v558
        %v587 = vfloor.f32 %v559
        %v588 = vfloor.f32 %v560
        %v589 = vfloor.f32 %v561
        %v590 = vfloor.f32 %v562
        %v591 = vfloor.f32 %v563
        %v592 = vfloor.f32 %v564
        %v593 = vfloor.f32 %v565
        %v594 = vsub.f32 %v538, %v566
        %v595 = vsub.f32 %v539, %v567
        %v596 = vsub.f32 %v540, %v568
        %v597 = vsub.f32 %v541, %v569
        %v598 = vsub.f32 %v542, %v570
        %v599 = vsub.f32 %v543, %v571
        %v600 = vsub.f32 %v544, %v572
        %v601 = vsub.f32 %v545, %v573
        %v602 = vsub.f32 %v546, %v574
        %v603 = vsub.f32 %v547, %v575
        %v604 = vsub.f32 %v548, %v576
        %v605 = vsub.f32 %v549, %v577
        %v606 = vsub.f32 %v550, %v578
        %v607 = vsub.f32 %v551, %v579
        %v608 = vsub.f32 %v552, %v580
        %v609 = vsub.f32 %v553, %v581
        %v610 = vsub.f32 %v554, %v582
        %v611 = vsub.f32 %v555, %v583
        %v612 = vsub.f32 %v556, %v584
        %v613 = vsub.f32 %v557, %v585
        %v614 = vsub.f32 %v558, %v586
        %v615 = vsub.f32 %v559, %v587
        %v616 = vsub.f32 %v560, %v588
        %v617 = vsub.f32 %v561, %v589
        %v618 = vsub.f32 %v562, %v590
        %v619 = vsub.f32 %v563, %v591
        %v620 = vsub.f32 %v564, %v592
        %v621 = vsub.f32 %v565, %v593
        %v622 = vadd.f32 %v566, 1.0
        %v623 = vadd.f32 %v567, 1.0
        %v624 = vadd.f32 %v568, 1.0
        %v625 = vadd.f32 %v569, 1.0
        %v626 = vadd.f32 %v570, 1.0
        %v627 = vadd.f32 %v571, 1.0
        %v628 = vadd.f32 %v572, 1.0
        %v629 = vadd.f32 %v573, 1.0
        %v630 = vadd.f32 %v574, 1.0
        %v631 = vadd.f32 %v575, 1.0
        %v632 = vadd.f32 %v576, 1.0
        %v633 = vadd.f32 %v577, 1.0
        %v634 = vadd.f32 %v578, 1.0
        %v635 = vadd.f32 %v579, 1.0
        %v636 = vadd.f32 %v580, 1.0
        %v637 = vadd.f32 %v581, 1.0
        %v638 = vadd.f32 %v582, 1.0
        %v639 = vadd.f32 %v583, 1.0
        %v640 = vadd.f32 %v584, 1.0
        %v641 = vadd.f32 %v585, 1.0
        %v642 = vadd.f32 %v586, 1.0
        %v643 = vadd.f32 %v587, 1.0
        %v644 = vadd.f32 %v588, 1.0
        %v645 = vadd.f32 %v589, 1.0
        %v646 = vadd.f32 %v590, 1.0
        %v647 = vadd.f32 %v591, 1.0
        %v648 = vadd.f32 %v592, 1.0
        %v649 = vadd.f32 %v593, 1.0
        %v650 = vmin.f32 %v622, 31.0
        %v651 = vmin.f32 %v623, 31.0
        %v652 = vmin.f32 %v624, 31.0
        %v653 = vmin.f32 %v625, 31.0
        %v654 = vmin.f32 %v626, 31.0
        %v655 = vmin.f32 %v627, 31.0
        %v656 = vmin.f32 %v628, 31.0
        %v657 = vmin.f32 %v629, 31.0
        %v658 = vmin.f32 %v630, 31.0
        %v659 = vmin.f32 %v631, 31.0
        %v660 = vmin.f32 %v632, 31.0
        %v661 = vmin.f32 %v633, 31.0
        %v662 = vmin.f32 %v634, 31.0
        %v663 = vmin.f32 %v635, 31.0
        %v664 = vmin.f32 %v636, 31.0
        %v665 = vmin.f32 %v637, 31.0
        %v666 = vmin.f32 %v638, 31.0
        %v667 = vmin.f32 %v639, 31.0
        %v668 = vmin.f32 %v640, 31.0
        %v669 = vmin.f32 %v641, 31.0
        %v670 = vmin.f32 %v642, 31.0
        %v671 = vmin.f32 %v643, 31.0
        %v672 = vmin.f32 %v644, 31.0
        %v673 = vmin.f32 %v645, 31.0
        %v674 = vmin.f32 %v646, 31.0
        %v675 = vmin.f32 %v647, 31.0
        %v676 = vmin.f32 %v648, 31.0
        %v677 = vmin.f32 %v649, 31.0
        %vm678 = vcmp.eq.f32.partialorder %v309, %v566
        %vm679 = vcmp.eq.f32.partialorder %v309, %v567
        %vm680 = vcmp.eq.f32.partialorder %v309, %v568
        %vm681 = vcmp.eq.f32.partialorder %v309, %v569
        %vm682 = vcmp.eq.f32.partialorder %v309, %v570
        %vm683 = vcmp.eq.f32.partialorder %v309, %v571
        %vm684 = vcmp.eq.f32.partialorder %v309, %v572
        %vm685 = vcmp.eq.f32.partialorder %v309, %v573
        %vm686 = vcmp.eq.f32.partialorder %v309, %v574
        %vm687 = vcmp.eq.f32.partialorder %v309, %v575
        %vm688 = vcmp.eq.f32.partialorder %v309, %v576
        %vm689 = vcmp.eq.f32.partialorder %v309, %v577
        %vm690 = vcmp.eq.f32.partialorder %v309, %v578
        %vm691 = vcmp.eq.f32.partialorder %v309, %v579
        %vm692 = vcmp.eq.f32.partialorder %v309, %v580
        %vm693 = vcmp.eq.f32.partialorder %v309, %v581
        %vm694 = vcmp.eq.f32.partialorder %v309, %v582
        %vm695 = vcmp.eq.f32.partialorder %v309, %v583
        %vm696 = vcmp.eq.f32.partialorder %v309, %v584
        %vm697 = vcmp.eq.f32.partialorder %v309, %v585
        %vm698 = vcmp.eq.f32.partialorder %v309, %v586
        %vm699 = vcmp.eq.f32.partialorder %v309, %v587
        %vm700 = vcmp.eq.f32.partialorder %v309, %v588
        %vm701 = vcmp.eq.f32.partialorder %v309, %v589
        %vm702 = vcmp.eq.f32.partialorder %v309, %v590
        %vm703 = vcmp.eq.f32.partialorder %v309, %v591
        %vm704 = vcmp.eq.f32.partialorder %v309, %v592
        %vm705 = vcmp.eq.f32.partialorder %v309, %v593
        %v706 = vsub.f32 1.0, %v594
        %v707 = vsub.f32 1.0, %v595
        %v708 = vsub.f32 1.0, %v596
        %v709 = vsub.f32 1.0, %v597
        %v710 = vsub.f32 1.0, %v598
        %v711 = vsub.f32 1.0, %v599
        %v712 = vsub.f32 1.0, %v600
        %v713 = vsub.f32 1.0, %v601
        %v714 = vsub.f32 1.0, %v602
        %v715 = vsub.f32 1.0, %v603
        %v716 = vsub.f32 1.0, %v604
        %v717 = vsub.f32 1.0, %v605
        %v718 = vsub.f32 1.0, %v606
        %v719 = vsub.f32 1.0, %v607
        %v720 = vsub.f32 1.0, %v608
        %v721 = vsub.f32 1.0, %v609
        %v722 = vsub.f32 1.0, %v610
        %v723 = vsub.f32 1.0, %v611
        %v724 = vsub.f32 1.0, %v612
        %v725 = vsub.f32 1.0, %v613
        %v726 = vsub.f32 1.0, %v614
        %v727 = vsub.f32 1.0, %v615
        %v728 = vsub.f32 1.0, %v616
        %v729 = vsub.f32 1.0, %v617
        %v730 = vsub.f32 1.0, %v618
        %v731 = vsub.f32 1.0, %v619
        %v732 = vsub.f32 1.0, %v620
        %v733 = vsub.f32 1.0, %v621
        %v734 = vsel %vm678, %v706, 0.0
        %v735 = vsel %vm679, %v707, 0.0
        %v736 = vsel %vm680, %v708, 0.0
        %v737 = vsel %vm681, %v709, 0.0
        %v738 = vsel %vm682, %v710, 0.0
        %v739 = vsel %vm683, %v711, 0.0
        %v740 = vsel %vm684, %v712, 0.0
        %v741 = vsel %vm685, %v713, 0.0
        %v742 = vsel %vm686, %v714, 0.0
        %v743 = vsel %vm687, %v715, 0.0
        %v744 = vsel %vm688, %v716, 0.0
        %v745 = vsel %vm689, %v717, 0.0
        %v746 = vsel %vm690, %v718, 0.0
        %v747 = vsel %vm691, %v719, 0.0
        %v748 = vsel %vm692, %v720, 0.0
        %v749 = vsel %vm693, %v721, 0.0
        %v750 = vsel %vm694, %v722, 0.0
        %v751 = vsel %vm695, %v723, 0.0
        %v752 = vsel %vm696, %v724, 0.0
        %v753 = vsel %vm697, %v725, 0.0
        %v754 = vsel %vm698, %v726, 0.0
        %v755 = vsel %vm699, %v727, 0.0
        %v756 = vsel %vm700, %v728, 0.0
        %v757 = vsel %vm701, %v729, 0.0
        %v758 = vsel %vm702, %v730, 0.0
        %v759 = vsel %vm703, %v731, 0.0
        %v760 = vsel %vm704, %v732, 0.0
        %v761 = vsel %vm705, %v733, 0.0
        %vm762 = vcmp.eq.f32.partialorder %v309, %v650
        %vm763 = vcmp.eq.f32.partialorder %v309, %v651
        %vm764 = vcmp.eq.f32.partialorder %v309, %v652
        %vm765 = vcmp.eq.f32.partialorder %v309, %v653
        %vm766 = vcmp.eq.f32.partialorder %v309, %v654
        %vm767 = vcmp.eq.f32.partialorder %v309, %v655
        %vm768 = vcmp.eq.f32.partialorder %v309, %v656
        %vm769 = vcmp.eq.f32.partialorder %v309, %v657
        %vm770 = vcmp.eq.f32.partialorder %v309, %v658
        %vm771 = vcmp.eq.f32.partialorder %v309, %v659
        %vm772 = vcmp.eq.f32.partialorder %v309, %v660
        %vm773 = vcmp.eq.f32.partialorder %v309, %v661
        %vm774 = vcmp.eq.f32.partialorder %v309, %v662
        %vm775 = vcmp.eq.f32.partialorder %v309, %v663
        %vm776 = vcmp.eq.f32.partialorder %v309, %v664
        %vm777 = vcmp.eq.f32.partialorder %v309, %v665
        %vm778 = vcmp.eq.f32.partialorder %v309, %v666
        %vm779 = vcmp.eq.f32.partialorder %v309, %v667
        %vm780 = vcmp.eq.f32.partialorder %v309, %v668
        %vm781 = vcmp.eq.f32.partialorder %v309, %v669
        %vm782 = vcmp.eq.f32.partialorder %v309, %v670
        %vm783 = vcmp.eq.f32.partialorder %v309, %v671
        %vm784 = vcmp.eq.f32.partialorder %v309, %v672
        %vm785 = vcmp.eq.f32.partialorder %v309, %v673
        %vm786 = vcmp.eq.f32.partialorder %v309, %v674
        %vm787 = vcmp.eq.f32.partialorder %v309, %v675
        %vm788 = vcmp.eq.f32.partialorder %v309, %v676
        %vm789 = vcmp.eq.f32.partialorder %v309, %v677
        %v790 = vsel %vm762, %v594, 0.0
        %v791 = vsel %vm763, %v595, 0.0
        %v792 = vsel %vm764, %v596, 0.0
        %v793 = vsel %vm765, %v597, 0.0
        %v794 = vsel %vm766, %v598, 0.0
        %v795 = vsel %vm767, %v599, 0.0
        %v796 = vsel %vm768, %v600, 0.0
        %v797 = vsel %vm769, %v601, 0.0
        %v798 = vsel %vm770, %v602, 0.0
        %v799 = vsel %vm771, %v603, 0.0
        %v800 = vsel %vm772, %v604, 0.0
        %v801 = vsel %vm773, %v605, 0.0
        %v802 = vsel %vm774, %v606, 0.0
        %v803 = vsel %vm775, %v607, 0.0
        %v804 = vsel %vm776, %v608, 0.0
        %v805 = vsel %vm777, %v609, 0.0
        %v806 = vsel %vm778, %v610, 0.0
        %v807 = vsel %vm779, %v611, 0.0
        %v808 = vsel %vm780, %v612, 0.0
        %v809 = vsel %vm781, %v613, 0.0
        %v810 = vsel %vm782, %v614, 0.0
        %v811 = vsel %vm783, %v615, 0.0
        %v812 = vsel %vm784, %v616, 0.0
        %v813 = vsel %vm785, %v617, 0.0
        %v814 = vsel %vm786, %v618, 0.0
        %v815 = vsel %vm787, %v619, 0.0
        %v816 = vsel %vm788, %v620, 0.0
        %v817 = vsel %vm789, %v621, 0.0
        %v818 = vadd.f32 %v734, %v790
        %v819 = vadd.f32 %v735, %v791
        %v820 = vadd.f32 %v736, %v792
        %v821 = vadd.f32 %v737, %v793
        %v822 = vadd.f32 %v738, %v794
        %v823 = vadd.f32 %v739, %v795
        %v824 = vadd.f32 %v740, %v796
        %v825 = vadd.f32 %v741, %v797
        %v826 = vadd.f32 %v742, %v798
        %v827 = vadd.f32 %v743, %v799
        %v828 = vadd.f32 %v744, %v800
        %v829 = vadd.f32 %v745, %v801
        %v830 = vadd.f32 %v746, %v802
        %v831 = vadd.f32 %v747, %v803
        %v832 = vadd.f32 %v748, %v804
        %v833 = vadd.f32 %v749, %v805
        %v834 = vadd.f32 %v750, %v806
        %v835 = vadd.f32 %v751, %v807
        %v836 = vadd.f32 %v752, %v808
        %v837 = vadd.f32 %v753, %v809
        %v838 = vadd.f32 %v754, %v810
        %v839 = vadd.f32 %v755, %v811
        %v840 = vadd.f32 %v756, %v812
        %v841 = vadd.f32 %v757, %v813
        %v842 = vadd.f32 %v758, %v814
        %v843 = vadd.f32 %v759, %v815
        %v844 = vadd.f32 %v760, %v816
        %v845 = vadd.f32 %v761, %v817
        %v846 = vpack.c.bf16 %v819, %v818
        %v847 = vpack.c.bf16 %v821, %v820
        %v848 = vpack.c.bf16 %v823, %v822
        %v849 = vpack.c.bf16 %v825, %v824
        %v850 = vpack.c.bf16 %v827, %v826
        %v851 = vpack.c.bf16 %v829, %v828
        %v852 = vpack.c.bf16 %v831, %v830
        %v853 = vpack.c.bf16 %v833, %v832
        %v854 = vpack.c.bf16 %v835, %v834
        %v855 = vpack.c.bf16 %v837, %v836
        %v856 = vpack.c.bf16 %v839, %v838
        %v857 = vpack.c.bf16 %v841, %v840
        %v858 = vpack.c.bf16 %v843, %v842
        %v859 = vpack.c.bf16 %v845, %v844
        %v860 = vld [vmem:[%s123] sm:$0xff]
        %v861 = vld [vmem:[%s123 + $0x8] sm:$0xff]
        %v862 = vld [vmem:[%s123 + $0x10] sm:$0xff]
        %v863 = vld [vmem:[%s123 + $0x18] sm:$0xff]
        %v864 = vpack.c.bf16 %v861, %v860
        %v865 = vpack.c.bf16 %v863, %v862
        %vm866 = vcmask 261120
        %v868 = vsel %vm866, %v864, 0
        %v871 = vsel %vm866, %v865, 0
        %873 = vmatprep.subr.bf16.mxu0 %v258
        %874 = vmatpush1.bf16.msra.mxu0 %v257
        %875 = vmatprep.subr.bf16.mxu0 %v260
        %876 = vmatpush1.bf16.msra.mxu0 %v259
        %877 = vmatprep.subr.bf16.mxu0 0
        %878 = vmatpush1.bf16.msra.mxu0 0
        %879 = vmatprep.subr.bf16.mxu0 0
        %880 = vmatpush1.bf16.msra.mxu0 0
        %881 = vmatprep.subr.bf16.mxu0 0
        %882 = vmatpush1.bf16.msra.mxu0 0
        %883 = vmatprep.subr.bf16.mxu0 0
        %884 = vmatpush1.bf16.msra.mxu0 0
        %885 = vmatprep.subr.bf16.mxu0 0
        %886 = vmatpush1.bf16.msra.mxu0 0
        %887 = vmatprep.subr.bf16.mxu0 0
        %888 = vmatpush1.bf16.msra.mxu0 0
        %889 = vmatprep.subr.bf16.mxu0 0
        %890 = vmatpush1.bf16.msra.mxu0 0
        %891 = vmatprep.subr.bf16.mxu0 0
        %892 = vmatpush1.bf16.msra.mxu0 0
        %893 = vmatprep.subr.bf16.mxu0 0
        %894 = vmatpush1.bf16.msra.mxu0 0
        %895 = vmatprep.subr.bf16.mxu0 0
        %896 = vmatpush1.bf16.msra.mxu0 0
        %897 = vmatprep.subr.bf16.mxu0 0
        %898 = vmatpush1.bf16.msra.mxu0 0
        %899 = vmatprep.subr.bf16.mxu0 0
        %900 = vmatpush1.bf16.msra.mxu0 0
        %901 = vmatprep.subr.bf16.mxu0 0
        %902 = vmatpush1.bf16.msra.mxu0 0
        %903 = vmatprep.subr.bf16.mxu0 0
        %904 = vmatpush1.bf16.msra.mxu0 0
        %905 = vmatprep.mubr.bf16.mxu0 0
        %906 = vmatmul.mubr.bf16.gmra.mrb[0].mxu0 %v868
        %v907 = vpop.f32.mrb[0].mxu0
        %v908 = vadd.f32 0.0, %v907
        %v909 = vpop.f32.mrb[0].mxu0
        %v910 = vadd.f32 0.0, %v909
        %v911 = vpop.f32.mrb[0].mxu0
        %v912 = vadd.f32 0.0, %v911
        %v913 = vpop.f32.mrb[0].mxu0
        %v914 = vadd.f32 0.0, %v913
        %915 = vmatprep.mubr.bf16.mxu0 0
        %916 = vmatmul.mubr.bf16.gmra.mrb[0].mxu0 %v871
        %v917 = vpop.f32.mrb[0].mxu0
        %v918 = vadd.f32 0.0, %v917
        %v919 = vpop.f32.mrb[0].mxu0
        %v920 = vadd.f32 0.0, %v919
        %v921 = vpop.f32.mrb[0].mxu0
        %v922 = vadd.f32 0.0, %v921
        %v923 = vpop.f32.mrb[0].mxu0
        %v924 = vadd.f32 0.0, %v923
        %925 = vdwg.mxu0
        %v926 = vpack.c.bf16 %v912, %v908
        %v927 = vpack.c.bf16 %v914, %v910
        %v928 = vpack.c.bf16 %v922, %v918
        %v929 = vpack.c.bf16 %v924, %v920
        %v931 = vsel %vm866, %v846, 0
        %v934 = vsel %vm866, %v847, 0
        %v937 = vsel %vm866, %v848, 0
        %v940 = vsel %vm866, %v849, 0
        %v943 = vsel %vm866, %v850, 0
        %v946 = vsel %vm866, %v851, 0
        %v949 = vsel %vm866, %v852, 0
        %v952 = vsel %vm866, %v853, 0
        %v955 = vsel %vm866, %v854, 0
        %v958 = vsel %vm866, %v855, 0
        %v961 = vsel %vm866, %v856, 0
        %v964 = vsel %vm866, %v857, 0
        %v967 = vsel %vm866, %v858, 0
        %v970 = vsel %vm866, %v859, 0
        %972 = vmatprep.subr.bf16.mxu0 %v927
        %973 = vmatpush1.bf16.msra.mxu0 %v926
        %974 = vmatprep.subr.bf16.mxu0 %v929
        %975 = vmatpush1.bf16.msra.mxu0 %v928
        %976 = vmatprep.subr.bf16.mxu0 0
        %977 = vmatpush1.bf16.msra.mxu0 0
        %978 = vmatprep.subr.bf16.mxu0 0
        %979 = vmatpush1.bf16.msra.mxu0 0
        %980 = vmatprep.subr.bf16.mxu0 0
        %981 = vmatpush1.bf16.msra.mxu0 0
        %982 = vmatprep.subr.bf16.mxu0 0
        %983 = vmatpush1.bf16.msra.mxu0 0
        %984 = vmatprep.subr.bf16.mxu0 0
        %985 = vmatpush1.bf16.msra.mxu0 0
        %986 = vmatprep.subr.bf16.mxu0 0
        %987 = vmatpush1.bf16.msra.mxu0 0
        %988 = vmatprep.subr.bf16.mxu0 0
        %989 = vmatpush1.bf16.msra.mxu0 0
        %990 = vmatprep.subr.bf16.mxu0 0
        %991 = vmatpush1.bf16.msra.mxu0 0
        %992 = vmatprep.subr.bf16.mxu0 0
        %993 = vmatpush1.bf16.msra.mxu0 0
        %994 = vmatprep.subr.bf16.mxu0 0
        %995 = vmatpush1.bf16.msra.mxu0 0
        %996 = vmatprep.subr.bf16.mxu0 0
        %997 = vmatpush1.bf16.msra.mxu0 0
        %998 = vmatprep.subr.bf16.mxu0 0
        %999 = vmatpush1.bf16.msra.mxu0 0
        %1000 = vmatprep.subr.bf16.mxu0 0
        %1001 = vmatpush1.bf16.msra.mxu0 0
        %1002 = vmatprep.subr.bf16.mxu0 0
        %1003 = vmatpush1.bf16.msra.mxu0 0
        %1004 = vmatprep.mubr.bf16.mxu0 0
        %1005 = vmatmul.mubr.bf16.gmra.mrb[0].mxu0 %v931
        %v1006 = vpop.f32.mrb[0].mxu0
        %v1007 = vadd.f32 0.0, %v1006
        %v1008 = vpop.f32.mrb[0].mxu0
        %v1009 = vadd.f32 0.0, %v1008
        %v1010 = vpop.f32.mrb[0].mxu0
        %v1011 = vadd.f32 0.0, %v1010
        %v1012 = vpop.f32.mrb[0].mxu0
        %v1013 = vadd.f32 0.0, %v1012
        %1014 = vmatprep.mubr.bf16.mxu0 0
        %1015 = vmatmul.mubr.bf16.gmra.mrb[0].mxu0 %v934
        %v1016 = vpop.f32.mrb[0].mxu0
        %v1017 = vadd.f32 0.0, %v1016
        %v1018 = vpop.f32.mrb[0].mxu0
        %v1019 = vadd.f32 0.0, %v1018
        %v1020 = vpop.f32.mrb[0].mxu0
        %v1021 = vadd.f32 0.0, %v1020
        %v1022 = vpop.f32.mrb[0].mxu0
        %v1023 = vadd.f32 0.0, %v1022
        %1024 = vmatprep.mubr.bf16.mxu0 0
        %1025 = vmatmul.mubr.bf16.gmra.mrb[0].mxu0 %v937
        %v1026 = vpop.f32.mrb[0].mxu0
        %v1027 = vadd.f32 0.0, %v1026
        %v1028 = vpop.f32.mrb[0].mxu0
        %v1029 = vadd.f32 0.0, %v1028
        %v1030 = vpop.f32.mrb[0].mxu0
        %v1031 = vadd.f32 0.0, %v1030
        %v1032 = vpop.f32.mrb[0].mxu0
        %v1033 = vadd.f32 0.0, %v1032
        %1034 = vmatprep.mubr.bf16.mxu0 0
        %1035 = vmatmul.mubr.bf16.gmra.mrb[0].mxu0 %v940
        %v1036 = vpop.f32.mrb[0].mxu0
        %v1037 = vadd.f32 0.0, %v1036
        %v1038 = vpop.f32.mrb[0].mxu0
        %v1039 = vadd.f32 0.0, %v1038
        %v1040 = vpop.f32.mrb[0].mxu0
        %v1041 = vadd.f32 0.0, %v1040
        %v1042 = vpop.f32.mrb[0].mxu0
        %v1043 = vadd.f32 0.0, %v1042
        %1044 = vmatprep.mubr.bf16.mxu0 0
        %1045 = vmatmul.mubr.bf16.gmra.mrb[0].mxu0 %v943
        %v1046 = vpop.f32.mrb[0].mxu0
        %v1047 = vadd.f32 0.0, %v1046
        %v1048 = vpop.f32.mrb[0].mxu0
        %v1049 = vadd.f32 0.0, %v1048
        %v1050 = vpop.f32.mrb[0].mxu0
        %v1051 = vadd.f32 0.0, %v1050
        %v1052 = vpop.f32.mrb[0].mxu0
        %v1053 = vadd.f32 0.0, %v1052
        %1054 = vmatprep.mubr.bf16.mxu0 0
        %1055 = vmatmul.mubr.bf16.gmra.mrb[0].mxu0 %v946
        %v1056 = vpop.f32.mrb[0].mxu0
        %v1057 = vadd.f32 0.0, %v1056
        %v1058 = vpop.f32.mrb[0].mxu0
        %v1059 = vadd.f32 0.0, %v1058
        %v1060 = vpop.f32.mrb[0].mxu0
        %v1061 = vadd.f32 0.0, %v1060
        %v1062 = vpop.f32.mrb[0].mxu0
        %v1063 = vadd.f32 0.0, %v1062
        %1064 = vmatprep.mubr.bf16.mxu0 0
        %1065 = vmatmul.mubr.bf16.gmra.mrb[0].mxu0 %v949
        %v1066 = vpop.f32.mrb[0].mxu0
        %v1067 = vadd.f32 0.0, %v1066
        %v1068 = vpop.f32.mrb[0].mxu0
        %v1069 = vadd.f32 0.0, %v1068
        %v1070 = vpop.f32.mrb[0].mxu0
        %v1071 = vadd.f32 0.0, %v1070
        %v1072 = vpop.f32.mrb[0].mxu0
        %v1073 = vadd.f32 0.0, %v1072
        %1074 = vmatprep.mubr.bf16.mxu0 0
        %1075 = vmatmul.mubr.bf16.gmra.mrb[0].mxu0 %v952
        %v1076 = vpop.f32.mrb[0].mxu0
        %v1077 = vadd.f32 0.0, %v1076
        %v1078 = vpop.f32.mrb[0].mxu0
        %v1079 = vadd.f32 0.0, %v1078
        %v1080 = vpop.f32.mrb[0].mxu0
        %v1081 = vadd.f32 0.0, %v1080
        %v1082 = vpop.f32.mrb[0].mxu0
        %v1083 = vadd.f32 0.0, %v1082
        %1084 = vmatprep.mubr.bf16.mxu0 0
        %1085 = vmatmul.mubr.bf16.gmra.mrb[0].mxu0 %v955
        %v1086 = vpop.f32.mrb[0].mxu0
        %v1087 = vadd.f32 0.0, %v1086
        %v1088 = vpop.f32.mrb[0].mxu0
        %v1089 = vadd.f32 0.0, %v1088
        %v1090 = vpop.f32.mrb[0].mxu0
        %v1091 = vadd.f32 0.0, %v1090
        %v1092 = vpop.f32.mrb[0].mxu0
        %v1093 = vadd.f32 0.0, %v1092
        %1094 = vmatprep.mubr.bf16.mxu0 0
        %1095 = vmatmul.mubr.bf16.gmra.mrb[0].mxu0 %v958
        %v1096 = vpop.f32.mrb[0].mxu0
        %v1097 = vadd.f32 0.0, %v1096
        %v1098 = vpop.f32.mrb[0].mxu0
        %v1099 = vadd.f32 0.0, %v1098
        %v1100 = vpop.f32.mrb[0].mxu0
        %v1101 = vadd.f32 0.0, %v1100
        %v1102 = vpop.f32.mrb[0].mxu0
        %v1103 = vadd.f32 0.0, %v1102
        %1104 = vmatprep.mubr.bf16.mxu0 0
        %1105 = vmatmul.mubr.bf16.gmra.mrb[0].mxu0 %v961
        %v1106 = vpop.f32.mrb[0].mxu0
        %v1107 = vadd.f32 0.0, %v1106
        %v1108 = vpop.f32.mrb[0].mxu0
        %v1109 = vadd.f32 0.0, %v1108
        %v1110 = vpop.f32.mrb[0].mxu0
        %v1111 = vadd.f32 0.0, %v1110
        %v1112 = vpop.f32.mrb[0].mxu0
        %v1113 = vadd.f32 0.0, %v1112
        %1114 = vmatprep.mubr.bf16.mxu0 0
        %1115 = vmatmul.mubr.bf16.gmra.mrb[0].mxu0 %v964
        %v1116 = vpop.f32.mrb[0].mxu0
        %v1117 = vadd.f32 0.0, %v1116
        %v1118 = vpop.f32.mrb[0].mxu0
        %v1119 = vadd.f32 0.0, %v1118
        %v1120 = vpop.f32.mrb[0].mxu0
        %v1121 = vadd.f32 0.0, %v1120
        %v1122 = vpop.f32.mrb[0].mxu0
        %v1123 = vadd.f32 0.0, %v1122
        %1124 = vmatprep.mubr.bf16.mxu0 0
        %1125 = vmatmul.mubr.bf16.gmra.mrb[0].mxu0 %v967
        %v1126 = vpop.f32.mrb[0].mxu0
        %v1127 = vadd.f32 0.0, %v1126
        %v1128 = vpop.f32.mrb[0].mxu0
        %v1129 = vadd.f32 0.0, %v1128
        %v1130 = vpop.f32.mrb[0].mxu0
        %v1131 = vadd.f32 0.0, %v1130
        %v1132 = vpop.f32.mrb[0].mxu0
        %v1133 = vadd.f32 0.0, %v1132
        %1134 = vmatprep.mubr.bf16.mxu0 0
        %1135 = vmatmul.mubr.bf16.gmra.mrb[0].mxu0 %v970
        %v1136 = vpop.f32.mrb[0].mxu0
        %v1137 = vadd.f32 0.0, %v1136
        %v1138 = vpop.f32.mrb[0].mxu0
        %v1139 = vadd.f32 0.0, %v1138
        %v1140 = vpop.f32.mrb[0].mxu0
        %v1141 = vadd.f32 0.0, %v1140
        %v1142 = vpop.f32.mrb[0].mxu0
        %v1143 = vadd.f32 0.0, %v1142
        %1144 = vdwg.mxu0
        %1145 = vst [vmem:[%s141] sm:$0xff] %v1007
        %vm1146 = vcmask 785408
        %1147 = vst.msk [vmem:[%s141 + $0x8] sm:$0xff] %vm1146, %v1009
        %1148 = vst [vmem:[%s141 + $0x10] sm:$0xff] %v1011
        %1149 = vst.msk [vmem:[%s141 + $0x18] sm:$0xff] %vm1146, %v1013
        %1150 = vst [vmem:[%s141 + $0x20] sm:$0xff] %v1017
        %1151 = vst.msk [vmem:[%s141 + $0x28] sm:$0xff] %vm1146, %v1019
        %1152 = vst [vmem:[%s141 + $0x30] sm:$0xff] %v1021
        %1153 = vst.msk [vmem:[%s141 + $0x38] sm:$0xff] %vm1146, %v1023
        %1154 = vst [vmem:[%s141 + $0x40] sm:$0xff] %v1027
        %1155 = vst.msk [vmem:[%s141 + $0x48] sm:$0xff] %vm1146, %v1029
        %1156 = vst [vmem:[%s141 + $0x50] sm:$0xff] %v1031
        %1157 = vst.msk [vmem:[%s141 + $0x58] sm:$0xff] %vm1146, %v1033
        %1158 = vst [vmem:[%s141 + $0x60] sm:$0xff] %v1037
        %1159 = vst.msk [vmem:[%s141 + $0x68] sm:$0xff] %vm1146, %v1039
        %1160 = vst [vmem:[%s141 + $0x70] sm:$0xff] %v1041
        %1161 = vst.msk [vmem:[%s141 + $0x78] sm:$0xff] %vm1146, %v1043
        %1162 = vst [vmem:[%s141 + $0x80] sm:$0xff] %v1047
        %1163 = vst.msk [vmem:[%s141 + $0x88] sm:$0xff] %vm1146, %v1049
        %1164 = vst [vmem:[%s141 + $0x90] sm:$0xff] %v1051
        %1165 = vst.msk [vmem:[%s141 + $0x98] sm:$0xff] %vm1146, %v1053
        %1166 = vst [vmem:[%s141 + $0xa0] sm:$0xff] %v1057
        %1167 = vst.msk [vmem:[%s141 + $0xa8] sm:$0xff] %vm1146, %v1059
        %1168 = vst [vmem:[%s141 + $0xb0] sm:$0xff] %v1061
        %1169 = vst.msk [vmem:[%s141 + $0xb8] sm:$0xff] %vm1146, %v1063
        %1170 = vst [vmem:[%s141 + $0xc0] sm:$0xff] %v1067
        %1171 = vst.msk [vmem:[%s141 + $0xc8] sm:$0xff] %vm1146, %v1069
        %1172 = vst [vmem:[%s141 + $0xd0] sm:$0xff] %v1071
        %1173 = vst.msk [vmem:[%s141 + $0xd8] sm:$0xff] %vm1146, %v1073
        %1174 = vst [vmem:[%s141 + $0xe0] sm:$0xff] %v1077
        %1175 = vst.msk [vmem:[%s141 + $0xe8] sm:$0xff] %vm1146, %v1079
        %1176 = vst [vmem:[%s141 + $0xf0] sm:$0xff] %v1081
        %1177 = vst.msk [vmem:[%s141 + $0xf8] sm:$0xff] %vm1146, %v1083
        %1178 = vst [vmem:[%s141 + $0x100] sm:$0xff] %v1087
        %1179 = vst.msk [vmem:[%s141 + $0x108] sm:$0xff] %vm1146, %v1089
        %1180 = vst [vmem:[%s141 + $0x110] sm:$0xff] %v1091
        %1181 = vst.msk [vmem:[%s141 + $0x118] sm:$0xff] %vm1146, %v1093
        %1182 = vst [vmem:[%s141 + $0x120] sm:$0xff] %v1097
        %1183 = vst.msk [vmem:[%s141 + $0x128] sm:$0xff] %vm1146, %v1099
        %1184 = vst [vmem:[%s141 + $0x130] sm:$0xff] %v1101
        %1185 = vst.msk [vmem:[%s141 + $0x138] sm:$0xff] %vm1146, %v1103
        %1186 = vst [vmem:[%s141 + $0x140] sm:$0xff] %v1107
        %1187 = vst.msk [vmem:[%s141 + $0x148] sm:$0xff] %vm1146, %v1109
        %1188 = vst [vmem:[%s141 + $0x150] sm:$0xff] %v1111
        %1189 = vst.msk [vmem:[%s141 + $0x158] sm:$0xff] %vm1146, %v1113
        %1190 = vst [vmem:[%s141 + $0x160] sm:$0xff] %v1117
        %1191 = vst.msk [vmem:[%s141 + $0x168] sm:$0xff] %vm1146, %v1119
        %1192 = vst [vmem:[%s141 + $0x170] sm:$0xff] %v1121
        %1193 = vst.msk [vmem:[%s141 + $0x178] sm:$0xff] %vm1146, %v1123
        %1194 = vst [vmem:[%s141 + $0x180] sm:$0xff] %v1127
        %1195 = vst.msk [vmem:[%s141 + $0x188] sm:$0xff] %vm1146, %v1129
        %1196 = vst [vmem:[%s141 + $0x190] sm:$0xff] %v1131
        %1197 = vst.msk [vmem:[%s141 + $0x198] sm:$0xff] %vm1146, %v1133
        %1198 = vst [vmem:[%s141 + $0x1a0] sm:$0xff] %v1137
        %1199 = vst.msk [vmem:[%s141 + $0x1a8] sm:$0xff] %vm1146, %v1139
        %1200 = vst [vmem:[%s141 + $0x1b0] sm:$0xff] %v1141
        %1201 = vst.msk [vmem:[%s141 + $0x1b8] sm:$0xff] %vm1146, %v1143
        %s1202 = sand.u32 %s59, 1
        %s1203 = scalar_lea.sflag [#allocation6], %s1202
        %s1204 = sand.u32 %s59, 1
        %s1205 = smul.addr %s1204, 448
        %s1206 = scalar_lea.vmem [#allocation7], %s1205
        // Predicated region
        $region29: #{my_aug.7} parent=23 // pred_check
          %p1207 = pneg %p69
        $region30: #{my_aug.7} parent=23 // pred_check_branch
          %1209 = sbr.rel (%p1207) target = $region32
        $region31: #{my_aug.7} parent=23 // pred_region
          %s1211 = ssub.s32 7168, 7168
          %1212 = vsyncadd %s1203, %s1211
          %s1213 = smul.addr %s25, 56
          %s1214 = smul.addr %s1213, 128
          %s1215 = scalar_lea.hbm %s2, %s1214
          %s1216 = sshll.u32 %s1206, 4
          %s1217 = int_to_ptr.vmem [resolvable:$true] %s1216
          %1222 = dma.vmem_to_hbm [thread:$0]  %s1217, 7168, %s1215, %s1203, 256, 256, 16
        $region32: #{my_aug.7} parent=23 // pred_fallthru
          _
      $region24: #{my_aug.7} parent=5 // pred_fallthru
        _
      %p1223 = scmp.le.s32.totalorder 2, %s20
      // Predicated region
      $region33: #{my_aug.7} parent=5 // pred_check
        %p1224 = pneg %p1223
      $region34: #{my_aug.7} parent=5 // pred_check_branch
        %1226 = sbr.rel (%p1224) target = $region36
      $region35: #{my_aug.7} parent=5 // pred_region
        %s1227 = ssub.s32 %s20, 2
        // Predicated region
        $region37: #{my_aug.7} parent=35 // pred_check
          %p1228 = pneg %p75
        $region38: #{my_aug.7} parent=35 // pred_check_branch
          %1230 = sbr.rel (%p1228) target = $region40
        $region39: #{my_aug.7} parent=35 // pred_region
          %s1231 = sand.u32 %s60, 1
          %s1232 = scalar_lea.sflag [#allocation6], %s1231
          %s1233 = sand.u32 %s60, 1
          %s1234 = smul.addr %s1233, 448
          %s1235 = scalar_lea.vmem [#allocation7], %s1234
          %1236 = dma.done %s1232, 7168
        $region40: #{my_aug.7} parent=35 // pred_fallthru
          _
      $region36: #{my_aug.7} parent=5 // pred_fallthru
        _
    $region6: #{my_aug.7} parent=1 // loop_footer
      %s24 = sadd.s32 1, %s20
    $region7: #{my_aug.7} parent=1 // loop_footer_branch
      %19 = sbr.rel target = $region3
    $region8: #{my_aug.7} parent=1 // loop_exit
      _
    %1237 = vsyncpa [#allocation5], 1
    %s1238 = scalar_lea.sflag [#allocation5], 1
    %1239 = vsyncpa %s1238, 1
    %1240 = vsyncpa [#allocation6], 1
    %s1241 = scalar_lea.sflag [#allocation6], 1
    %1242 = vsyncpa %s1241, 1

// kernel: my_aug.9
$region0: #{my_aug.9}
  #allocation0 [shape = 'u32[]', space=smem, size = 0x4, offset = 0x4, fixed_abs, tag = 'smem constant byte address 0x4 - core index']
  #allocation1 [shape = 'u32[144,128]{1,0:T(1,128)}', space=vmem, size = 0x12000, scoped, tag = 'internal scratch']
  #allocation2 [shape = 's32[1]{0}', space=sflag, size = 0x4, scoped, tag = 'scoped memory for my_aug.9']
  #allocation3 [shape = 'u8[1024]{0}', space=smem, size = 0x400, scoped, tag = 'prefetched SMEM operand 0']
  %s0 = inlined_call_operand.vmem [shape: s32[2,6], index: 0, kind: input, shape index: {}]
  %s1 = inlined_call_operand.vmem [shape: f32[2,3,32,32], index: 1, kind: input, shape index: {}]
  %s2 = inlined_call_operand.hbm [shape: f32[2,3,224,224], index: 2, kind: output, shape index: {}]
  %s3 = sld [smem:[#allocation0]]
  $region37: #{my_aug.9} parent=0
    _
  %s5 = ssub.s32 1, %s3
  %s6 = scalar_select 0, %s5, %s3
  %s7 = sshll.u32 %s0, 4
  %s8 = int_to_ptr.vmem [resolvable:$true] %s7
  %10 = dma.vmem_to_smem %s8, 32, [#allocation3], [#allocation2]
  %11 = dma.done [#allocation2], 32
  %12 = sfence
  $region1: #{my_aug.9} parent=0
    #allocation4 [shape = 'u8[1376256]{0}', space=vmem, size = 0x150000, scoped, tag = 'output window, operand 0']
    #allocation5 [shape = 's32[2]{0}', space=sflag, size = 0x8, scoped, tag = 'scoped memory for my_aug.9']
    %13 = vsyncpa [#allocation5], 0
    %s14 = scalar_lea.sflag [#allocation5], 1
    %15 = vsyncpa %s14, 0
    loop: start=0, step=1, limit=4
    $region2: #{my_aug.9} parent=1 // loop_pre_header
      _
    $region3: #{my_aug.9} parent=1 // loop_header
      %s17 = sphi 0, %s21
      %p18 = scmp.ge.s32.totalorder %s17, 4
      %s27 = sphi 0, %s29
      %s30 = sphi 0, %s27
      %s31 = sphi 0, %s30
      %s47 = sphi 0, %s31
      %s53 = sphi 0, %s55
      %s56 = sphi 0, %s53
      %s57 = sphi 0, %s56
      %s73 = sphi 0, %s57
    $region4: #{my_aug.9} parent=1 // loop_header_branch
      %20 = sbr.rel (%p18) target = $region8
    $region5: #{my_aug.9} parent=1 // loop_body
      %s22 = ssub.s32 %s17, 1
      %s23 = ssub.s32 %s17, 2
      %s24 = sadd.s32 %s17, 1
      %s25 = ssub.s32 %s17, %s24
      %p26 = scmp.eq.s32.totalorder %s25, 0
      %s28 = sadd.s32 %s27, 1
      %s29 = scalar_select %p26, %s27, %s28
      %p32 = pneg %p26
      %p33 = scmp.eq.s32.totalorder %s17, 1
      %p34 = por %p32, %p33
      %p35 = scmp.ne.s32.totalorder %s27, %s30
      %p36 = scmp.eq.s32.totalorder %s17, 0
      %p37 = por %p35, %p36
      %p38 = scmp.ne.s32.totalorder %s27, %s30
      %p39 = scmp.eq.s32.totalorder %s22, 1
      %p40 = por %p38, %p39
      %p41 = scmp.ne.s32.totalorder %s30, %s31
      %p42 = scmp.eq.s32.totalorder %s22, 0
      %p43 = por %p41, %p42
      %p44 = scmp.ne.s32.totalorder %s30, %s31
      %p45 = scmp.eq.s32.totalorder %s23, 1
      %p46 = por %p44, %p45
      %p48 = scmp.ne.s32.totalorder %s31, %s47
      %p49 = scmp.eq.s32.totalorder %s23, 0
      %p50 = por %p48, %p49
      %s51 = ssub.s32 %s17, %s24
      %p52 = scmp.eq.s32.totalorder %s51, 0
      %s54 = sadd.s32 %s53, 1
      %s55 = scalar_select %p52, %s53, %s54
      %p58 = pneg %p52
      %p59 = scmp.eq.s32.totalorder %s17, 1
      %p60 = por %p58, %p59
      %p61 = scmp.ne.s32.totalorder %s53, %s56
      %p62 = scmp.eq.s32.totalorder %s17, 0
      %p63 = por %p61, %p62
      %p64 = scmp.ne.s32.totalorder %s53, %s56
      %p65 = scmp.eq.s32.totalorder %s22, 1
      %p66 = por %p64, %p65
      %p67 = scmp.ne.s32.totalorder %s56, %s57
      %p68 = scmp.eq.s32.totalorder %s22, 0
      %p69 = por %p67, %p68
      %p70 = scmp.ne.s32.totalorder %s56, %s57
      %p71 = scmp.eq.s32.totalorder %s23, 1
      %p72 = por %p70, %p71
      %p74 = scmp.ne.s32.totalorder %s57, %s73
      %p75 = scmp.eq.s32.totalorder %s23, 0
      %p76 = por %p74, %p75
      %p77 = scmp.le.s32.totalorder 1, %s17
      %p78 = scmp.lt.s32.totalorder %s17, 3
      %p79 = pnand %p77, %p78
      %p80 = pneg %p79
      // Predicated region
      $region9: #{my_aug.9} parent=5 // pred_check
        _
      $region10: #{my_aug.9} parent=5 // pred_check_branch
        %82 = sbr.rel (%p79) target = $region12
      $region11: #{my_aug.9} parent=5 // pred_region
        %s83 = ssub.s32 %s17, 1
      $region12: #{my_aug.9} parent=5 // pred_fallthru
        _
      %p84 = scmp.lt.s32.totalorder %s17, 2
      // Predicated region
      $region13: #{my_aug.9} parent=5 // pred_check
        %p85 = pneg %p84
      $region14: #{my_aug.9} parent=5 // pred_check_branch
        %87 = sbr.rel (%p85) target = $region16
      $region15: #{my_aug.9} parent=5 // pred_region
        // Predicated region
        $region17: #{my_aug.9} parent=15 // pred_check
          %p88 = pneg %p37
        $region18: #{my_aug.9} parent=15 // pred_check_branch
          %90 = sbr.rel (%p88) target = $region20
        $region19: #{my_aug.9} parent=15 // pred_region
          %p91 = scmp.lt.s32.totalorder %s17, 1
          %s92 = scalar_select %p91, %s17, 1
          %s93 = smul.addr %s92, 12
          %s94 = smul.addr %s93, 8
          %s95 = scalar_lea.vmem %s1, %s94
        $region20: #{my_aug.9} parent=15 // pred_fallthru
          _
      $region16: #{my_aug.9} parent=5 // pred_fallthru
        _
      %p96 = scmp.le.s32.totalorder 1, %s17
      %p97 = scmp.lt.s32.totalorder %s17, 3
      %p98 = pnand %p96, %p97
      %p99 = pneg %p98
      // Predicated region
      $region21: #{my_aug.9} parent=5 // pred_check
        _
      $region22: #{my_aug.9} parent=5 // pred_check_branch
        %101 = sbr.rel (%p98) target = $region24
      $region23: #{my_aug.9} parent=5 // pred_region
        %s102 = ssub.s32 %s17, 1
        %p103 = scmp.lt.s32.totalorder %s22, 1
        %s104 = scalar_select %p103, %s22, 1
        %s105 = smul.addr %s104, 12
        %s106 = smul.addr %s105, 8
        %s107 = scalar_lea.vmem %s1, %s106
        %p108 = pneg %p43
        %p109 = pneg %p40
        %p110 = pneg %p69
        %p111 = pneg %p66
        %s112 = sand.u32 %s56, 1
        %s113 = scalar_lea.sflag [#allocation5], %s112
        %s114 = sand.u32 %s56, 1
        %s115 = smul.addr %s114, 1344
        %s116 = scalar_lea.vmem [#allocation4], %s115
        %p117 = scmp.lt.s32.totalorder %s22, 1
        %s118 = scalar_select %p117, %s22, 1
        %s119 = smul.addr %s118, 12
        %s120 = smul.addr %s119, 8
        %s121 = scalar_lea.vmem %s1, %s120
        %s123 = smul.u32 %s22, 128
        %s124 = sld [smem:[#allocation3 + %s123]]
        %s125 = scvt.s32.f32 %s124
        %s126 = sadd.s32 %s123, 1
        %s127 = sld [smem:[#allocation3 + %s126]]
        %s128 = scvt.s32.f32 %s127
        %s129 = sadd.s32 %s123, 2
        %s130 = sld [smem:[#allocation3 + %s129]]
        %s131 = scvt.s32.f32 %s130
        %s132 = sadd.s32 %s123, 3
        %s133 = sld [smem:[#allocation3 + %s132]]
        %s134 = scvt.s32.f32 %s133
        %s135 = sadd.s32 %s123, 4
        %s136 = sld [smem:[#allocation3 + %s135]]
        %s137 = scvt.s32.f32 %s136
        %s138 = sadd.s32 %s123, 5
        %s139 = sld [smem:[#allocation3 + %s138]]
        %s140 = scvt.s32.f32 %s139
        %v141 = vlaneseq
        %v142 = vand.u32 %v141, 127
        %v143 = vadd.s32 %v142, 128
        %v144 = vcvt.s32.f32 %v142
        %v145 = vcvt.s32.f32 %v143
        %v146 = vlaneseq
        %v147 = vshrl.u32 %v146, 7
        %v148 = vadd.s32 %v147, 8
        %v149 = vadd.s32 %v147, 16
        %v150 = vadd.s32 %v147, 24
        %v151 = vcvt.s32.f32 %v147
        %v152 = vcvt.s32.f32 %v148
        %v153 = vcvt.s32.f32 %v149
        %v154 = vcvt.s32.f32 %v150
        %vm155 = vcmp.lt.f32.partialorder %v144, 224.0
        %vm156 = vcmp.lt.f32.partialorder %v145, 224.0
        %v157 = vmul.f32 %v144, 2.0
        %v158 = vmul.f32 %v145, 2.0
        %v159 = vsub.f32 223.0, %v157
        %v160 = vsub.f32 223.0, %v158
        %v161 = vstv %s140
        %v162 = vmul.f32 %v161, %v159
        %v163 = vmul.f32 %v161, %v160
        %v164 = vadd.f32 %v144, %v162
        %v165 = vadd.f32 %v145, %v163
        %s166 = ssub.f32 %s134, 1.0
        %v167 = vstv %s166
        %v168 = vmul.f32 %v164, %v167
        %v169 = vmul.f32 %v165, %v167
        %v170 = vmul.f32 %v168, 0.004484305
        %v171 = vmul.f32 %v169, 0.004484305
        %v172 = vstv %s131
        %v173 = vadd.f32 %v172, %v170
        %v174 = vadd.f32 %v172, %v171
        %v175 = vmax.f32 %v173, 0.0
        %v176 = vmax.f32 %v174, 0.0
        %v177 = vmin.f32 %v175, 31.0
        %v178 = vmin.f32 %v176, 31.0
        %v179 = vfloor.f32 %v177
        %v180 = vfloor.f32 %v178
        %v181 = vsub.f32 %v177, %v179
        %v182 = vsub.f32 %v178, %v180
        %v183 = vadd.f32 %v179, 1.0
        %v184 = vadd.f32 %v180, 1.0
        %v185 = vmin.f32 %v183, 31.0
        %v186 = vmin.f32 %v184, 31.0
        %vm187 = vcmp.eq.f32.partialorder %v151, %v179
        %vm188 = vcmp.eq.f32.partialorder %v151, %v180
        %vm189 = vcmp.eq.f32.partialorder %v152, %v179
        %vm190 = vcmp.eq.f32.partialorder %v152, %v180
        %vm191 = vcmp.eq.f32.partialorder %v153, %v179
        %vm192 = vcmp.eq.f32.partialorder %v153, %v180
        %vm193 = vcmp.eq.f32.partialorder %v154, %v179
        %vm194 = vcmp.eq.f32.partialorder %v154, %v180
        %v195 = vsub.f32 1.0, %v181
        %v196 = vsub.f32 1.0, %v182
        %v197 = vsel %vm187, %v195, 0.0
        %v198 = vsel %vm188, %v196, 0.0
        %v199 = vsel %vm189, %v195, 0.0
        %v200 = vsel %vm190, %v196, 0.0
        %v201 = vsel %vm191, %v195, 0.0
        %v202 = vsel %vm192, %v196, 0.0
        %v203 = vsel %vm193, %v195, 0.0
        %v204 = vsel %vm194, %v196, 0.0
        %vm205 = vcmp.eq.f32.partialorder %v151, %v185
        %vm206 = vcmp.eq.f32.partialorder %v151, %v186
        %vm207 = vcmp.eq.f32.partialorder %v152, %v185
        %vm208 = vcmp.eq.f32.partialorder %v152, %v186
        %vm209 = vcmp.eq.f32.partialorder %v153, %v185
        %vm210 = vcmp.eq.f32.partialorder %v153, %v186
        %vm211 = vcmp.eq.f32.partialorder %v154, %v185
        %vm212 = vcmp.eq.f32.partialorder %v154, %v186
        %v213 = vsel %vm205, %v181, 0.0
        %v214 = vsel %vm206, %v182, 0.0
        %v215 = vsel %vm207, %v181, 0.0
        %v216 = vsel %vm208, %v182, 0.0
        %v217 = vsel %vm209, %v181, 0.0
        %v218 = vsel %vm210, %v182, 0.0
        %v219 = vsel %vm211, %v181, 0.0
        %v220 = vsel %vm212, %v182, 0.0
        %v221 = vadd.f32 %v197, %v213
        %v222 = vadd.f32 %v198, %v214
        %v223 = vadd.f32 %v199, %v215
        %v224 = vadd.f32 %v200, %v216
        %v225 = vadd.f32 %v201, %v217
        %v226 = vadd.f32 %v202, %v218
        %v227 = vadd.f32 %v203, %v219
        %v228 = vadd.f32 %v204, %v220
        %v229 = vsel %vm155, %v221, 0.0
        %v230 = vsel %vm156, %v222, 0.0
        %v231 = vsel %vm155, %v223, 0.0
        %v232 = vsel %vm156, %v224, 0.0
        %v233 = vsel %vm155, %v225, 0.0
        %v234 = vsel %vm156, %v226, 0.0
        %v235 = vsel %vm155, %v227, 0.0
        %v236 = vsel %vm156, %v228, 0.0
        %v237 = vpack.c.bf16 %v231, %v229
        %v238 = vpack.c.bf16 %v232, %v230
        %v239 = vpack.c.bf16 %v235, %v233
        %v240 = vpack.c.bf16 %v236, %v234
        %v241 = vadd.s32 %v147, 32
        %v242 = vadd.s32 %v147, 40
        %v243 = vadd.s32 %v147, 48
        %v244 = vadd.s32 %v147, 56
        %v245 = vadd.s32 %v147, 64
        %v246 = vadd.s32 %v147, 72
        %v247 = vadd.s32 %v147, 80
        %v248 = vadd.s32 %v147, 88
        %v249 = vadd.s32 %v147, 96
        %v250 = vadd.s32 %v147, 104
        %v251 = vadd.s32 %v147, 112
        %v252 = vadd.s32 %v147, 120
        %v253 = vadd.s32 %v147, 128
        %v254 = vadd.s32 %v147, 136
        %v255 = vadd.s32 %v147, 144
        %v256 = vadd.s32 %v147, 152
        %v257 = vadd.s32 %v147, 160
        %v258 = vadd.s32 %v147, 168
        %v259 = vadd.s32 %v147, 176
        %v260 = vadd.s32 %v147, 184
        %v261 = vadd.s32 %v147, 192
        %v262 = vadd.s32 %v147, 200
        %v263 = vadd.s32 %v147, 208
        %v264 = vadd.s32 %v147, 216
        %v265 = vcvt.s32.f32 %v241
        %v266 = vcvt.s32.f32 %v242
        %v267 = vcvt.s32.f32 %v243
        %v268 = vcvt.s32.f32 %v244
        %v269 = vcvt.s32.f32 %v245
        %v270 = vcvt.s32.f32 %v246
        %v271 = vcvt.s32.f32 %v247
        %v272 = vcvt.s32.f32 %v248
        %v273 = vcvt.s32.f32 %v249
        %v274 = vcvt.s32.f32 %v250
        %v275 = vcvt.s32.f32 %v251
        %v276 = vcvt.s32.f32 %v252
        %v277 = vcvt.s32.f32 %v253
        %v278 = vcvt.s32.f32 %v254
        %v279 = vcvt.s32.f32 %v255
        %v280 = vcvt.s32.f32 %v256
        %v281 = vcvt.s32.f32 %v257
        %v282 = vcvt.s32.f32 %v258
        %v283 = vcvt.s32.f32 %v259
        %v284 = vcvt.s32.f32 %v260
        %v285 = vcvt.s32.f32 %v261
        %v286 = vcvt.s32.f32 %v262
        %v287 = vcvt.s32.f32 %v263
        %v288 = vcvt.s32.f32 %v264
        %v289 = vadd.f32 %v144, 0.0
        %v290 = vmul.f32 %v151, 2.0
        %v291 = vmul.f32 %v152, 2.0
        %v292 = vmul.f32 %v153, 2.0
        %v293 = vmul.f32 %v154, 2.0
        %v294 = vmul.f32 %v265, 2.0
        %v295 = vmul.f32 %v266, 2.0
        %v296 = vmul.f32 %v267, 2.0
        %v297 = vmul.f32 %v268, 2.0
        %v298 = vmul.f32 %v269, 2.0
        %v299 = vmul.f32 %v270, 2.0
        %v300 = vmul.f32 %v271, 2.0
        %v301 = vmul.f32 %v272, 2.0
        %v302 = vmul.f32 %v273, 2.0
        %v303 = vmul.f32 %v274, 2.0
        %v304 = vmul.f32 %v275, 2.0
        %v305 = vmul.f32 %v276, 2.0
        %v306 = vmul.f32 %v277, 2.0
        %v307 = vmul.f32 %v278, 2.0
        %v308 = vmul.f32 %v279, 2.0
        %v309 = vmul.f32 %v280, 2.0
        %v310 = vmul.f32 %v281, 2.0
        %v311 = vmul.f32 %v282, 2.0
        %v312 = vmul.f32 %v283, 2.0
        %v313 = vmul.f32 %v284, 2.0
        %v314 = vmul.f32 %v285, 2.0
        %v315 = vmul.f32 %v286, 2.0
        %v316 = vmul.f32 %v287, 2.0
        %v317 = vmul.f32 %v288, 2.0
        %v318 = vsub.f32 223.0, %v290
        %v319 = vsub.f32 223.0, %v291
        %v320 = vsub.f32 223.0, %v292
        %v321 = vsub.f32 223.0, %v293
        %v322 = vsub.f32 223.0, %v294
        %v323 = vsub.f32 223.0, %v295
        %v324 = vsub.f32 223.0, %v296
        %v325 = vsub.f32 223.0, %v297
        %v326 = vsub.f32 223.0, %v298
        %v327 = vsub.f32 223.0, %v299
        %v328 = vsub.f32 223.0, %v300
        %v329 = vsub.f32 223.0, %v301
        %v330 = vsub.f32 223.0, %v302
        %v331 = vsub.f32 223.0, %v303
        %v332 = vsub.f32 223.0, %v304
        %v333 = vsub.f32 223.0, %v305
        %v334 = vsub.f32 223.0, %v306
        %v335 = vsub.f32 223.0, %v307
        %v336 = vsub.f32 223.0, %v308
        %v337 = vsub.f32 223.0, %v309
        %v338 = vsub.f32 223.0, %v310
        %v339 = vsub.f32 223.0, %v311
        %v340 = vsub.f32 223.0, %v312
        %v341 = vsub.f32 223.0, %v313
        %v342 = vsub.f32 223.0, %v314
        %v343 = vsub.f32 223.0, %v315
        %v344 = vsub.f32 223.0, %v316
        %v345 = vsub.f32 223.0, %v317
        %v346 = vstv %s137
        %v347 = vmul.f32 %v346, %v318
        %v348 = vmul.f32 %v346, %v319
        %v349 = vmul.f32 %v346, %v320
        %v350 = vmul.f32 %v346, %v321
        %v351 = vmul.f32 %v346, %v322
        %v352 = vmul.f32 %v346, %v323
        %v353 = vmul.f32 %v346, %v324
        %v354 = vmul.f32 %v346, %v325
        %v355 = vmul.f32 %v346, %v326
        %v356 = vmul.f32 %v346, %v327
        %v357 = vmul.f32 %v346, %v328
        %v358 = vmul.f32 %v346, %v329
        %v359 = vmul.f32 %v346, %v330
        %v360 = vmul.f32 %v346, %v331
        %v361 = vmul.f32 %v346, %v332
        %v362 = vmul.f32 %v346, %v333
        %v363 = vmul.f32 %v346, %v334
        %v364 = vmul.f32 %v346, %v335
        %v365 = vmul.f32 %v346, %v336
        %v366 = vmul.f32 %v346, %v337
        %v367 = vmul.f32 %v346, %v338
        %v368 = vmul.f32 %v346, %v339
        %v369 = vmul.f32 %v346, %v340
        %v370 = vmul.f32 %v346, %v341
        %v371 = vmul.f32 %v346, %v342
        %v372 = vmul.f32 %v346, %v343
        %v373 = vmul.f32 %v346, %v344
        %v374 = vmul.f32 %v346, %v345
        %v375 = vadd.f32 %v151, %v347
        %v376 = vadd.f32 %v152, %v348
        %v377 = vadd.f32 %v153, %v349
        %v378 = vadd.f32 %v154, %v350
        %v379 = vadd.f32 %v265, %v351
        %v380 = vadd.f32 %v266, %v352
        %v381 = vadd.f32 %v267, %v353
        %v382 = vadd.f32 %v268, %v354
        %v383 = vadd.f32 %v269, %v355
        %v384 = vadd.f32 %v270, %v356
        %v385 = vadd.f32 %v271, %v357
        %v386 = vadd.f32 %v272, %v358
        %v387 = vadd.f32 %v273, %v359
        %v388 = vadd.f32 %v274, %v360
        %v389 = vadd.f32 %v275, %v361
        %v390 = vadd.f32 %v276, %v362
        %v391 = vadd.f32 %v277, %v363
        %v392 = vadd.f32 %v278, %v364
        %v393 = vadd.f32 %v279, %v365
        %v394 = vadd.f32 %v280, %v366
        %v395 = vadd.f32 %v281, %v367
        %v396 = vadd.f32 %v282, %v368
        %v397 = vadd.f32 %v283, %v369
        %v398 = vadd.f32 %v284, %v370
        %v399 = vadd.f32 %v285, %v371
        %v400 = vadd.f32 %v286, %v372
        %v401 = vadd.f32 %v287, %v373
        %v402 = vadd.f32 %v288, %v374
        %s403 = ssub.f32 %s128, 1.0
        %v404 = vstv %s403
        %v405 = vmul.f32 %v375, %v404
        %v406 = vmul.f32 %v376, %v404
        %v407 = vmul.f32 %v377, %v404
        %v408 = vmul.f32 %v378, %v404
        %v409 = vmul.f32 %v379, %v404
        %v410 = vmul.f32 %v380, %v404
        %v411 = vmul.f32 %v381, %v404
        %v412 = vmul.f32 %v382, %v404
        %v413 = vmul.f32 %v383, %v404
        %v414 = vmul.f32 %v384, %v404
        %v415 = vmul.f32 %v385, %v404
        %v416 = vmul.f32 %v386, %v404
        %v417 = vmul.f32 %v387, %v404
        %v418 = vmul.f32 %v388, %v404
        %v419 = vmul.f32 %v389, %v404
        %v420 = vmul.f32 %v390, %v404
        %v421 = vmul.f32 %v391, %v404
        %v422 = vmul.f32 %v392, %v404
        %v423 = vmul.f32 %v393, %v404
        %v424 = vmul.f32 %v394, %v404
        %v425 = vmul.f32 %v395, %v404
        %v426 = vmul.f32 %v396, %v404
        %v427 = vmul.f32 %v397, %v404
        %v428 = vmul.f32 %v398, %v404
        %v429 = vmul.f32 %v399, %v404
        %v430 = vmul.f32 %v400, %v404
        %v431 = vmul.f32 %v401, %v404
        %v432 = vmul.f32 %v402, %v404
        %v433 = vmul.f32 %v405, 0.004484305
        %v434 = vmul.f32 %v406, 0.004484305
        %v435 = vmul.f32 %v407, 0.004484305
        %v436 = vmul.f32 %v408, 0.004484305
        %v437 = vmul.f32 %v409, 0.004484305
        %v438 = vmul.f32 %v410, 0.004484305
        %v439 = vmul.f32 %v411, 0.004484305
        %v440 = vmul.f32 %v412, 0.004484305
        %v441 = vmul.f32 %v413, 0.004484305
        %v442 = vmul.f32 %v414, 0.004484305
        %v443 = vmul.f32 %v415, 0.004484305
        %v444 = vmul.f32 %v416, 0.004484305
        %v445 = vmul.f32 %v417, 0.004484305
        %v446 = vmul.f32 %v418, 0.004484305
        %v447 = vmul.f32 %v419, 0.004484305
        %v448 = vmul.f32 %v420, 0.004484305
        %v449 = vmul.f32 %v421, 0.004484305
        %v450 = vmul.f32 %v422, 0.004484305
        %v451 = vmul.f32 %v423, 0.004484305
        %v452 = vmul.f32 %v424, 0.004484305
        %v453 = vmul.f32 %v425, 0.004484305
        %v454 = vmul.f32 %v426, 0.004484305
        %v455 = vmul.f32 %v427, 0.004484305
        %v456 = vmul.f32 %v428, 0.004484305
        %v457 = vmul.f32 %v429, 0.004484305
        %v458 = vmul.f32 %v430, 0.004484305
        %v459 = vmul.f32 %v431, 0.004484305
        %v460 = vmul.f32 %v432, 0.004484305
        %v461 = vstv %s125
        %v462 = vadd.f32 %v461, %v433
        %v463 = vadd.f32 %v461, %v434
        %v464 = vadd.f32 %v461, %v435
        %v465 = vadd.f32 %v461, %v436
        %v466 = vadd.f32 %v461, %v437
        %v467 = vadd.f32 %v461, %v438
        %v468 = vadd.f32 %v461, %v439
        %v469 = vadd.f32 %v461, %v440
        %v470 = vadd.f32 %v461, %v441
        %v471 = vadd.f32 %v461, %v442
        %v472 = vadd.f32 %v461, %v443
        %v473 = vadd.f32 %v461, %v444
        %v474 = vadd.f32 %v461, %v445
        %v475 = vadd.f32 %v461, %v446
        %v476 = vadd.f32 %v461, %v447
        %v477 = vadd.f32 %v461, %v448
        %v478 = vadd.f32 %v461, %v449
        %v479 = vadd.f32 %v461, %v450
        %v480 = vadd.f32 %v461, %v451
        %v481 = vadd.f32 %v461, %v452
        %v482 = vadd.f32 %v461, %v453
        %v483 = vadd.f32 %v461, %v454
        %v484 = vadd.f32 %v461, %v455
        %v485 = vadd.f32 %v461, %v456
        %v486 = vadd.f32 %v461, %v457
        %v487 = vadd.f32 %v461, %v458
        %v488 = vadd.f32 %v461, %v459
        %v489 = vadd.f32 %v461, %v460
        %v490 = vmax.f32 %v462, 0.0
        %v491 = vmax.f32 %v463, 0.0
        %v492 = vmax.f32 %v464, 0.0
        %v493 = vmax.f32 %v465, 0.0
        %v494 = vmax.f32 %v466, 0.0
        %v495 = vmax.f32 %v467, 0.0
        %v496 = vmax.f32 %v468, 0.0
        %v497 = vmax.f32 %v469, 0.0
        %v498 = vmax.f32 %v470, 0.0
        %v499 = vmax.f32 %v471, 0.0
        %v500 = vmax.f32 %v472, 0.0
        %v501 = vmax.f32 %v473, 0.0
        %v502 = vmax.f32 %v474, 0.0
        %v503 = vmax.f32 %v475, 0.0
        %v504 = vmax.f32 %v476, 0.0
        %v505 = vmax.f32 %v477, 0.0
        %v506 = vmax.f32 %v478, 0.0
        %v507 = vmax.f32 %v479, 0.0
        %v508 = vmax.f32 %v480, 0.0
        %v509 = vmax.f32 %v481, 0.0
        %v510 = vmax.f32 %v482, 0.0
        %v511 = vmax.f32 %v483, 0.0
        %v512 = vmax.f32 %v484, 0.0
        %v513 = vmax.f32 %v485, 0.0
        %v514 = vmax.f32 %v486, 0.0
        %v515 = vmax.f32 %v487, 0.0
        %v516 = vmax.f32 %v488, 0.0
        %v517 = vmax.f32 %v489, 0.0
        %v518 = vmin.f32 %v490, 31.0
        %v519 = vmin.f32 %v491, 31.0
        %v520 = vmin.f32 %v492, 31.0
        %v521 = vmin.f32 %v493, 31.0
        %v522 = vmin.f32 %v494, 31.0
        %v523 = vmin.f32 %v495, 31.0
        %v524 = vmin.f32 %v496, 31.0
        %v525 = vmin.f32 %v497, 31.0
        %v526 = vmin.f32 %v498, 31.0
        %v527 = vmin.f32 %v499, 31.0
        %v528 = vmin.f32 %v500, 31.0
        %v529 = vmin.f32 %v501, 31.0
        %v530 = vmin.f32 %v502, 31.0
        %v531 = vmin.f32 %v503, 31.0
        %v532 = vmin.f32 %v504, 31.0
        %v533 = vmin.f32 %v505, 31.0
        %v534 = vmin.f32 %v506, 31.0
        %v535 = vmin.f32 %v507, 31.0
        %v536 = vmin.f32 %v508, 31.0
        %v537 = vmin.f32 %v509, 31.0
        %v538 = vmin.f32 %v510, 31.0
        %v539 = vmin.f32 %v511, 31.0
        %v540 = vmin.f32 %v512, 31.0
        %v541 = vmin.f32 %v513, 31.0
        %v542 = vmin.f32 %v514, 31.0
        %v543 = vmin.f32 %v515, 31.0
        %v544 = vmin.f32 %v516, 31.0
        %v545 = vmin.f32 %v517, 31.0
        %v546 = vfloor.f32 %v518
        %v547 = vfloor.f32 %v519
        %v548 = vfloor.f32 %v520
        %v549 = vfloor.f32 %v521
        %v550 = vfloor.f32 %v522
        %v551 = vfloor.f32 %v523
        %v552 = vfloor.f32 %v524
        %v553 = vfloor.f32 %v525
        %v554 = vfloor.f32 %v526
        %v555 = vfloor.f32 %v527
        %v556 = vfloor.f32 %v528
        %v557 = vfloor.f32 %v529
        %v558 = vfloor.f32 %v530
        %v559 = vfloor.f32 %v531
        %v560 = vfloor.f32 %v532
        %v561 = vfloor.f32 %v533
        %v562 = vfloor.f32 %v534
        %v563 = vfloor.f32 %v535
        %v564 = vfloor.f32 %v536
        %v565 = vfloor.f32 %v537
        %v566 = vfloor.f32 %v538
        %v567 = vfloor.f32 %v539
        %v568 = vfloor.f32 %v540
        %v569 = vfloor.f32 %v541
        %v570 = vfloor.f32 %v542
        %v571 = vfloor.f32 %v543
        %v572 = vfloor.f32 %v544
        %v573 = vfloor.f32 %v545
        %v574 = vsub.f32 %v518, %v546
        %v575 = vsub.f32 %v519, %v547
        %v576 = vsub.f32 %v520, %v548
        %v577 = vsub.f32 %v521, %v549
        %v578 = vsub.f32 %v522, %v550
        %v579 = vsub.f32 %v523, %v551
        %v580 = vsub.f32 %v524, %v552
        %v581 = vsub.f32 %v525, %v553
        %v582 = vsub.f32 %v526, %v554
        %v583 = vsub.f32 %v527, %v555
        %v584 = vsub.f32 %v528, %v556
        %v585 = vsub.f32 %v529, %v557
        %v586 = vsub.f32 %v530, %v558
        %v587 = vsub.f32 %v531, %v559
        %v588 = vsub.f32 %v532, %v560
        %v589 = vsub.f32 %v533, %v561
        %v590 = vsub.f32 %v534, %v562
        %v591 = vsub.f32 %v535, %v563
        %v592 = vsub.f32 %v536, %v564
        %v593 = vsub.f32 %v537, %v565
        %v594 = vsub.f32 %v538, %v566
        %v595 = vsub.f32 %v539, %v567
        %v596 = vsub.f32 %v540, %v568
        %v597 = vsub.f32 %v541, %v569
        %v598 = vsub.f32 %v542, %v570
        %v599 = vsub.f32 %v543, %v571
        %v600 = vsub.f32 %v544, %v572
        %v601 = vsub.f32 %v545, %v573
        %v602 = vadd.f32 %v546, 1.0
        %v603 = vadd.f32 %v547, 1.0
        %v604 = vadd.f32 %v548, 1.0
        %v605 = vadd.f32 %v549, 1.0
        %v606 = vadd.f32 %v550, 1.0
        %v607 = vadd.f32 %v551, 1.0
        %v608 = vadd.f32 %v552, 1.0
        %v609 = vadd.f32 %v553, 1.0
        %v610 = vadd.f32 %v554, 1.0
        %v611 = vadd.f32 %v555, 1.0
        %v612 = vadd.f32 %v556, 1.0
        %v613 = vadd.f32 %v557, 1.0
        %v614 = vadd.f32 %v558, 1.0
        %v615 = vadd.f32 %v559, 1.0
        %v616 = vadd.f32 %v560, 1.0
        %v617 = vadd.f32 %v561, 1.0
        %v618 = vadd.f32 %v562, 1.0
        %v619 = vadd.f32 %v563, 1.0
        %v620 = vadd.f32 %v564, 1.0
        %v621 = vadd.f32 %v565, 1.0
        %v622 = vadd.f32 %v566, 1.0
        %v623 = vadd.f32 %v567, 1.0
        %v624 = vadd.f32 %v568, 1.0
        %v625 = vadd.f32 %v569, 1.0
        %v626 = vadd.f32 %v570, 1.0
        %v627 = vadd.f32 %v571, 1.0
        %v628 = vadd.f32 %v572, 1.0
        %v629 = vadd.f32 %v573, 1.0
        %v630 = vmin.f32 %v602, 31.0
        %v631 = vmin.f32 %v603, 31.0
        %v632 = vmin.f32 %v604, 31.0
        %v633 = vmin.f32 %v605, 31.0
        %v634 = vmin.f32 %v606, 31.0
        %v635 = vmin.f32 %v607, 31.0
        %v636 = vmin.f32 %v608, 31.0
        %v637 = vmin.f32 %v609, 31.0
        %v638 = vmin.f32 %v610, 31.0
        %v639 = vmin.f32 %v611, 31.0
        %v640 = vmin.f32 %v612, 31.0
        %v641 = vmin.f32 %v613, 31.0
        %v642 = vmin.f32 %v614, 31.0
        %v643 = vmin.f32 %v615, 31.0
        %v644 = vmin.f32 %v616, 31.0
        %v645 = vmin.f32 %v617, 31.0
        %v646 = vmin.f32 %v618, 31.0
        %v647 = vmin.f32 %v619, 31.0
        %v648 = vmin.f32 %v620, 31.0
        %v649 = vmin.f32 %v621, 31.0
        %v650 = vmin.f32 %v622, 31.0
        %v651 = vmin.f32 %v623, 31.0
        %v652 = vmin.f32 %v624, 31.0
        %v653 = vmin.f32 %v625, 31.0
        %v654 = vmin.f32 %v626, 31.0
        %v655 = vmin.f32 %v627, 31.0
        %v656 = vmin.f32 %v628, 31.0
        %v657 = vmin.f32 %v629, 31.0
        %vm658 = vcmp.eq.f32.partialorder %v289, %v546
        %vm659 = vcmp.eq.f32.partialorder %v289, %v547
        %vm660 = vcmp.eq.f32.partialorder %v289, %v548
        %vm661 = vcmp.eq.f32.partialorder %v289, %v549
        %vm662 = vcmp.eq.f32.partialorder %v289, %v550
        %vm663 = vcmp.eq.f32.partialorder %v289, %v551
        %vm664 = vcmp.eq.f32.partialorder %v289, %v552
        %vm665 = vcmp.eq.f32.partialorder %v289, %v553
        %vm666 = vcmp.eq.f32.partialorder %v289, %v554
        %vm667 = vcmp.eq.f32.partialorder %v289, %v555
        %vm668 = vcmp.eq.f32.partialorder %v289, %v556
        %vm669 = vcmp.eq.f32.partialorder %v289, %v557
        %vm670 = vcmp.eq.f32.partialorder %v289, %v558
        %vm671 = vcmp.eq.f32.partialorder %v289, %v559
        %vm672 = vcmp.eq.f32.partialorder %v289, %v560
        %vm673 = vcmp.eq.f32.partialorder %v289, %v561
        %vm674 = vcmp.eq.f32.partialorder %v289, %v562
        %vm675 = vcmp.eq.f32.partialorder %v289, %v563
        %vm676 = vcmp.eq.f32.partialorder %v289, %v564
        %vm677 = vcmp.eq.f32.partialorder %v289, %v565
        %vm678 = vcmp.eq.f32.partialorder %v289, %v566
        %vm679 = vcmp.eq.f32.partialorder %v289, %v567
        %vm680 = vcmp.eq.f32.partialorder %v289, %v568
        %vm681 = vcmp.eq.f32.partialorder %v289, %v569
        %vm682 = vcmp.eq.f32.partialorder %v289, %v570
        %vm683 = vcmp.eq.f32.partialorder %v289, %v571
        %vm684 = vcmp.eq.f32.partialorder %v289, %v572
        %vm685 = vcmp.eq.f32.partialorder %v289, %v573
        %v686 = vsub.f32 1.0, %v574
        %v687 = vsub.f32 1.0, %v575
        %v688 = vsub.f32 1.0, %v576
        %v689 = vsub.f32 1.0, %v577
        %v690 = vsub.f32 1.0, %v578
        %v691 = vsub.f32 1.0, %v579
        %v692 = vsub.f32 1.0, %v580
        %v693 = vsub.f32 1.0, %v581
        %v694 = vsub.f32 1.0, %v582
        %v695 = vsub.f32 1.0, %v583
        %v696 = vsub.f32 1.0, %v584
        %v697 = vsub.f32 1.0, %v585
        %v698 = vsub.f32 1.0, %v586
        %v699 = vsub.f32 1.0, %v587
        %v700 = vsub.f32 1.0, %v588
        %v701 = vsub.f32 1.0, %v589
        %v702 = vsub.f32 1.0, %v590
        %v703 = vsub.f32 1.0, %v591
        %v704 = vsub.f32 1.0, %v592
        %v705 = vsub.f32 1.0, %v593
        %v706 = vsub.f32 1.0, %v594
        %v707 = vsub.f32 1.0, %v595
        %v708 = vsub.f32 1.0, %v596
        %v709 = vsub.f32 1.0, %v597
        %v710 = vsub.f32 1.0, %v598
        %v711 = vsub.f32 1.0, %v599
        %v712 = vsub.f32 1.0, %v600
        %v713 = vsub.f32 1.0, %v601
        %v714 = vsel %vm658, %v686, 0.0
        %v715 = vsel %vm659, %v687, 0.0
        %v716 = vsel %vm660, %v688, 0.0
        %v717 = vsel %vm661, %v689, 0.0
        %v718 = vsel %vm662, %v690, 0.0
        %v719 = vsel %vm663, %v691, 0.0
        %v720 = vsel %vm664, %v692, 0.0
        %v721 = vsel %vm665, %v693, 0.0
        %v722 = vsel %vm666, %v694, 0.0
        %v723 = vsel %vm667, %v695, 0.0
        %v724 = vsel %vm668, %v696, 0.0
        %v725 = vsel %vm669, %v697, 0.0
        %v726 = vsel %vm670, %v698, 0.0
        %v727 = vsel %vm671, %v699, 0.0
        %v728 = vsel %vm672, %v700, 0.0
        %v729 = vsel %vm673, %v701, 0.0
        %v730 = vsel %vm674, %v702, 0.0
        %v731 = vsel %vm675, %v703, 0.0
        %v732 = vsel %vm676, %v704, 0.0
        %v733 = vsel %vm677, %v705, 0.0
        %v734 = vsel %vm678, %v706, 0.0
        %v735 = vsel %vm679, %v707, 0.0
        %v736 = vsel %vm680, %v708, 0.0
        %v737 = vsel %vm681, %v709, 0.0
        %v738 = vsel %vm682, %v710, 0.0
        %v739 = vsel %vm683, %v711, 0.0
        %v740 = vsel %vm684, %v712, 0.0
        %v741 = vsel %vm685, %v713, 0.0
        %vm742 = vcmp.eq.f32.partialorder %v289, %v630
        %vm743 = vcmp.eq.f32.partialorder %v289, %v631
        %vm744 = vcmp.eq.f32.partialorder %v289, %v632
        %vm745 = vcmp.eq.f32.partialorder %v289, %v633
        %vm746 = vcmp.eq.f32.partialorder %v289, %v634
        %vm747 = vcmp.eq.f32.partialorder %v289, %v635
        %vm748 = vcmp.eq.f32.partialorder %v289, %v636
        %vm749 = vcmp.eq.f32.partialorder %v289, %v637
        %vm750 = vcmp.eq.f32.partialorder %v289, %v638
        %vm751 = vcmp.eq.f32.partialorder %v289, %v639
        %vm752 = vcmp.eq.f32.partialorder %v289, %v640
        %vm753 = vcmp.eq.f32.partialorder %v289, %v641
        %vm754 = vcmp.eq.f32.partialorder %v289, %v642
        %vm755 = vcmp.eq.f32.partialorder %v289, %v643
        %vm756 = vcmp.eq.f32.partialorder %v289, %v644
        %vm757 = vcmp.eq.f32.partialorder %v289, %v645
        %vm758 = vcmp.eq.f32.partialorder %v289, %v646
        %vm759 = vcmp.eq.f32.partialorder %v289, %v647
        %vm760 = vcmp.eq.f32.partialorder %v289, %v648
        %vm761 = vcmp.eq.f32.partialorder %v289, %v649
        %vm762 = vcmp.eq.f32.partialorder %v289, %v650
        %vm763 = vcmp.eq.f32.partialorder %v289, %v651
        %vm764 = vcmp.eq.f32.partialorder %v289, %v652
        %vm765 = vcmp.eq.f32.partialorder %v289, %v653
        %vm766 = vcmp.eq.f32.partialorder %v289, %v654
        %vm767 = vcmp.eq.f32.partialorder %v289, %v655
        %vm768 = vcmp.eq.f32.partialorder %v289, %v656
        %vm769 = vcmp.eq.f32.partialorder %v289, %v657
        %v770 = vsel %vm742, %v574, 0.0
        %v771 = vsel %vm743, %v575, 0.0
        %v772 = vsel %vm744, %v576, 0.0
        %v773 = vsel %vm745, %v577, 0.0
        %v774 = vsel %vm746, %v578, 0.0
        %v775 = vsel %vm747, %v579, 0.0
        %v776 = vsel %vm748, %v580, 0.0
        %v777 = vsel %vm749, %v581, 0.0
        %v778 = vsel %vm750, %v582, 0.0
        %v779 = vsel %vm751, %v583, 0.0
        %v780 = vsel %vm752, %v584, 0.0
        %v781 = vsel %vm753, %v585, 0.0
        %v782 = vsel %vm754, %v586, 0.0
        %v783 = vsel %vm755, %v587, 0.0
        %v784 = vsel %vm756, %v588, 0.0
        %v785 = vsel %vm757, %v589, 0.0
        %v786 = vsel %vm758, %v590, 0.0
        %v787 = vsel %vm759, %v591, 0.0
        %v788 = vsel %vm760, %v592, 0.0
        %v789 = vsel %vm761, %v593, 0.0
        %v790 = vsel %vm762, %v594, 0.0
        %v791 = vsel %vm763, %v595, 0.0
        %v792 = vsel %vm764, %v596, 0.0
        %v793 = vsel %vm765, %v597, 0.0
        %v794 = vsel %vm766, %v598, 0.0
        %v795 = vsel %vm767, %v599, 0.0
        %v796 = vsel %vm768, %v600, 0.0
        %v797 = vsel %vm769, %v601, 0.0
        %v798 = vadd.f32 %v714, %v770
        %v799 = vadd.f32 %v715, %v771
        %v800 = vadd.f32 %v716, %v772
        %v801 = vadd.f32 %v717, %v773
        %v802 = vadd.f32 %v718, %v774
        %v803 = vadd.f32 %v719, %v775
        %v804 = vadd.f32 %v720, %v776
        %v805 = vadd.f32 %v721, %v777
        %v806 = vadd.f32 %v722, %v778
        %v807 = vadd.f32 %v723, %v779
        %v808 = vadd.f32 %v724, %v780
        %v809 = vadd.f32 %v725, %v781
        %v810 = vadd.f32 %v726, %v782
        %v811 = vadd.f32 %v727, %v783
        %v812 = vadd.f32 %v728, %v784
        %v813 = vadd.f32 %v729, %v785
        %v814 = vadd.f32 %v730, %v786
        %v815 = vadd.f32 %v731, %v787
        %v816 = vadd.f32 %v732, %v788
        %v817 = vadd.f32 %v733, %v789
        %v818 = vadd.f32 %v734, %v790
        %v819 = vadd.f32 %v735, %v791
        %v820 = vadd.f32 %v736, %v792
        %v821 = vadd.f32 %v737, %v793
        %v822 = vadd.f32 %v738, %v794
        %v823 = vadd.f32 %v739, %v795
        %v824 = vadd.f32 %v740, %v796
        %v825 = vadd.f32 %v741, %v797
        %v826 = vpack.c.bf16 %v799, %v798
        %v827 = vpack.c.bf16 %v801, %v800
        %v828 = vpack.c.bf16 %v803, %v802
        %v829 = vpack.c.bf16 %v805, %v804
        %v830 = vpack.c.bf16 %v807, %v806
        %v831 = vpack.c.bf16 %v809, %v808
        %v832 = vpack.c.bf16 %v811, %v810
        %v833 = vpack.c.bf16 %v813, %v812
        %v834 = vpack.c.bf16 %v815, %v814
        %v835 = vpack.c.bf16 %v817, %v816
        %v836 = vpack.c.bf16 %v819, %v818
        %v837 = vpack.c.bf16 %v821, %v820
        %v838 = vpack.c.bf16 %v823, %v822
        %v839 = vpack.c.bf16 %v825, %v824
        %v840 = vld [vmem:[%s121] sm:$0xff]
        %v841 = vld [vmem:[%s121 + $0x8] sm:$0xff]
        %v842 = vld [vmem:[%s121 + $0x10] sm:$0xff]
        %v843 = vld [vmem:[%s121 + $0x18] sm:$0xff]
        %v844 = vld [vmem:[%s121 + $0x20] sm:$0xff]
        %v845 = vld [vmem:[%s121 + $0x28] sm:$0xff]
        %v846 = vld [vmem:[%s121 + $0x30] sm:$0xff]
        %v847 = vld [vmem:[%s121 + $0x38] sm:$0xff]
        %v848 = vld [vmem:[%s121 + $0x40] sm:$0xff]
        %v849 = vld [vmem:[%s121 + $0x48] sm:$0xff]
        %v850 = vld [vmem:[%s121 + $0x50] sm:$0xff]
        %v851 = vld [vmem:[%s121 + $0x58] sm:$0xff]
        %v852 = vpack.c.bf16 %v841, %v840
        %v853 = vpack.c.bf16 %v843, %v842
        %v854 = vpack.c.bf16 %v845, %v844
        %v855 = vpack.c.bf16 %v847, %v846
        %v856 = vpack.c.bf16 %v849, %v848
        %v857 = vpack.c.bf16 %v851, %v850
        %vm858 = vcmask 261120
        %v860 = vsel %vm858, %v852, 0
        %v863 = vsel %vm858, %v853, 0
        %v866 = vsel %vm858, %v854, 0
        %v869 = vsel %vm858, %v855, 0
        %v872 = vsel %vm858, %v856, 0
        %v875 = vsel %vm858, %v857, 0
        %877 = vmatprep.subr.bf16.mxu0 %v238
        %878 = vmatpush1.bf16.msra.mxu0 %v237
        %879 = vmatprep.subr.bf16.mxu0 %v240
        %880 = vmatpush1.bf16.msra.mxu0 %v239
        %881 = vmatprep.subr.bf16.mxu0 0
        %882 = vmatpush1.bf16.msra.mxu0 0
        %883 = vmatprep.subr.bf16.mxu0 0
        %884 = vmatpush1.bf16.msra.mxu0 0
        %885 = vmatprep.subr.bf16.mxu0 0
        %886 = vmatpush1.bf16.msra.mxu0 0
        %887 = vmatprep.subr.bf16.mxu0 0
        %888 = vmatpush1.bf16.msra.mxu0 0
        %889 = vmatprep.subr.bf16.mxu0 0
        %890 = vmatpush1.bf16.msra.mxu0 0
        %891 = vmatprep.subr.bf16.mxu0 0
        %892 = vmatpush1.bf16.msra.mxu0 0
        %893 = vmatprep.subr.bf16.mxu0 0
        %894 = vmatpush1.bf16.msra.mxu0 0
        %895 = vmatprep.subr.bf16.mxu0 0
        %896 = vmatpush1.bf16.msra.mxu0 0
        %897 = vmatprep.subr.bf16.mxu0 0
        %898 = vmatpush1.bf16.msra.mxu0 0
        %899 = vmatprep.subr.bf16.mxu0 0
        %900 = vmatpush1.bf16.msra.mxu0 0
        %901 = vmatprep.subr.bf16.mxu0 0
        %902 = vmatpush1.bf16.msra.mxu0 0
        %903 = vmatprep.subr.bf16.mxu0 0
        %904 = vmatpush1.bf16.msra.mxu0 0
        %905 = vmatprep.subr.bf16.mxu0 0
        %906 = vmatpush1.bf16.msra.mxu0 0
        %907 = vmatprep.subr.bf16.mxu0 0
        %908 = vmatpush1.bf16.msra.mxu0 0
        %909 = vmatprep.mubr.bf16.mxu0 0
        %910 = vmatmul.mubr.bf16.gmra.mrb[0].mxu0 %v860
        %v911 = vpop.f32.mrb[0].mxu0
        %v912 = vadd.f32 0.0, %v911
        %v913 = vpop.f32.mrb[0].mxu0
        %v914 = vadd.f32 0.0, %v913
        %v915 = vpop.f32.mrb[0].mxu0
        %v916 = vadd.f32 0.0, %v915
        %v917 = vpop.f32.mrb[0].mxu0
        %v918 = vadd.f32 0.0, %v917
        %919 = vmatprep.mubr.bf16.mxu0 0
        %920 = vmatmul.mubr.bf16.gmra.mrb[0].mxu0 %v863
        %v921 = vpop.f32.mrb[0].mxu0
        %v922 = vadd.f32 0.0, %v921
        %v923 = vpop.f32.mrb[0].mxu0
        %v924 = vadd.f32 0.0, %v923
        %v925 = vpop.f32.mrb[0].mxu0
        %v926 = vadd.f32 0.0, %v925
        %v927 = vpop.f32.mrb[0].mxu0
        %v928 = vadd.f32 0.0, %v927
        %929 = vmatprep.mubr.bf16.mxu0 0
        %930 = vmatmul.mubr.bf16.gmra.mrb[0].mxu0 %v866
        %v931 = vpop.f32.mrb[0].mxu0
        %v932 = vadd.f32 0.0, %v931
        %v933 = vpop.f32.mrb[0].mxu0
        %v934 = vadd.f32 0.0, %v933
        %v935 = vpop.f32.mrb[0].mxu0
        %v936 = vadd.f32 0.0, %v935
        %v937 = vpop.f32.mrb[0].mxu0
        %v938 = vadd.f32 0.0, %v937
        %939 = vmatprep.mubr.bf16.mxu0 0
        %940 = vmatmul.mubr.bf16.gmra.mrb[0].mxu0 %v869
        %v941 = vpop.f32.mrb[0].mxu0
        %v942 = vadd.f32 0.0, %v941
        %v943 = vpop.f32.mrb[0].mxu0
        %v944 = vadd.f32 0.0, %v943
        %v945 = vpop.f32.mrb[0].mxu0
        %v946 = vadd.f32 0.0, %v945
        %v947 = vpop.f32.mrb[0].mxu0
        %v948 = vadd.f32 0.0, %v947
        %949 = vmatprep.mubr.bf16.mxu0 0
        %950 = vmatmul.mubr.bf16.gmra.mrb[0].mxu0 %v872
        %v951 = vpop.f32.mrb[0].mxu0
        %v952 = vadd.f32 0.0, %v951
        %v953 = vpop.f32.mrb[0].mxu0
        %v954 = vadd.f32 0.0, %v953
        %v955 = vpop.f32.mrb[0].mxu0
        %v956 = vadd.f32 0.0, %v955
        %v957 = vpop.f32.mrb[0].mxu0
        %v958 = vadd.f32 0.0, %v957
        %959 = vmatprep.mubr.bf16.mxu0 0
        %960 = vmatmul.mubr.bf16.gmra.mrb[0].mxu0 %v875
        %v961 = vpop.f32.mrb[0].mxu0
        %v962 = vadd.f32 0.0, %v961
        %v963 = vpop.f32.mrb[0].mxu0
        %v964 = vadd.f32 0.0, %v963
        %v965 = vpop.f32.mrb[0].mxu0
        %v966 = vadd.f32 0.0, %v965
        %v967 = vpop.f32.mrb[0].mxu0
        %v968 = vadd.f32 0.0, %v967
        %969 = vdwg.mxu0
        %v970 = vpack.c.bf16 %v916, %v912
        %v971 = vpack.c.bf16 %v918, %v914
        %v972 = vpack.c.bf16 %v926, %v922
        %v973 = vpack.c.bf16 %v928, %v924
        %v974 = vpack.c.bf16 %v936, %v932
        %v975 = vpack.c.bf16 %v938, %v934
        %v976 = vpack.c.bf16 %v946, %v942
        %v977 = vpack.c.bf16 %v948, %v944
        %v978 = vpack.c.bf16 %v956, %v952
        %v979 = vpack.c.bf16 %v958, %v954
        %v980 = vpack.c.bf16 %v966, %v962
        %v981 = vpack.c.bf16 %v968, %v964
        %v983 = vsel %vm858, %v826, 0
        %v986 = vsel %vm858, %v827, 0
        %v989 = vsel %vm858, %v828, 0
        %v992 = vsel %vm858, %v829, 0
        %v995 = vsel %vm858, %v830, 0
        %v998 = vsel %vm858, %v831, 0
        %v1001 = vsel %vm858, %v832, 0
        %v1004 = vsel %vm858, %v833, 0
        %v1007 = vsel %vm858, %v834, 0
        %v1010 = vsel %vm858, %v835, 0
        %v1013 = vsel %vm858, %v836, 0
        %v1016 = vsel %vm858, %v837, 0
        %v1019 = vsel %vm858, %v838, 0
        %v1022 = vsel %vm858, %v839, 0
        %1024 = vmatprep.subr.bf16.mxu0 %v971
        %1025 = vmatpush1.bf16.msra.mxu0 %v970
        %1026 = vmatprep.subr.bf16.mxu0 %v973
        %1027 = vmatpush1.bf16.msra.mxu0 %v972
        %1028 = vmatprep.subr.bf16.mxu0 0
        %1029 = vmatpush1.bf16.msra.mxu0 0
        %1030 = vmatprep.subr.bf16.mxu0 0
        %1031 = vmatpush1.bf16.msra.mxu0 0
        %1032 = vmatprep.subr.bf16.mxu0 0
        %1033 = vmatpush1.bf16.msra.mxu0 0
        %1034 = vmatprep.subr.bf16.mxu0 0
        %1035 = vmatpush1.bf16.msra.mxu0 0
        %1036 = vmatprep.subr.bf16.mxu0 0
        %1037 = vmatpush1.bf16.msra.mxu0 0
        %1038 = vmatprep.subr.bf16.mxu0 0
        %1039 = vmatpush1.bf16.msra.mxu0 0
        %1040 = vmatprep.subr.bf16.mxu0 0
        %1041 = vmatpush1.bf16.msra.mxu0 0
        %1042 = vmatprep.subr.bf16.mxu0 0
        %1043 = vmatpush1.bf16.msra.mxu0 0
        %1044 = vmatprep.subr.bf16.mxu0 0
        %1045 = vmatpush1.bf16.msra.mxu0 0
        %1046 = vmatprep.subr.bf16.mxu0 0
        %1047 = vmatpush1.bf16.msra.mxu0 0
        %1048 = vmatprep.subr.bf16.mxu0 0
        %1049 = vmatpush1.bf16.msra.mxu0 0
        %1050 = vmatprep.subr.bf16.mxu0 0
        %1051 = vmatpush1.bf16.msra.mxu0 0
        %1052 = vmatprep.subr.bf16.mxu0 0
        %1053 = vmatpush1.bf16.msra.mxu0 0
        %1054 = vmatprep.subr.bf16.mxu0 0
        %1055 = vmatpush1.bf16.msra.mxu0 0
        %1056 = vmatprep.mubr.bf16.mxu0 0
        %1057 = vmatmul.mubr.bf16.gmra.mrb[0].mxu0 %v983
        %v1058 = vpop.f32.mrb[0].mxu0
        %v1059 = vadd.f32 0.0, %v1058
        %v1060 = vpop.f32.mrb[0].mxu0
        %v1061 = vadd.f32 0.0, %v1060
        %v1062 = vpop.f32.mrb[0].mxu0
        %v1063 = vadd.f32 0.0, %v1062
        %v1064 = vpop.f32.mrb[0].mxu0
        %v1065 = vadd.f32 0.0, %v1064
        %1066 = vmatprep.mubr.bf16.mxu0 0
        %1067 = vmatmul.mubr.bf16.gmra.mrb[0].mxu0 %v986
        %v1068 = vpop.f32.mrb[0].mxu0
        %v1069 = vadd.f32 0.0, %v1068
        %v1070 = vpop.f32.mrb[0].mxu0
        %v1071 = vadd.f32 0.0, %v1070
        %v1072 = vpop.f32.mrb[0].mxu0
        %v1073 = vadd.f32 0.0, %v1072
        %v1074 = vpop.f32.mrb[0].mxu0
        %v1075 = vadd.f32 0.0, %v1074
        %1076 = vmatprep.mubr.bf16.mxu0 0
        %1077 = vmatmul.mubr.bf16.gmra.mrb[0].mxu0 %v989
        %v1078 = vpop.f32.mrb[0].mxu0
        %v1079 = vadd.f32 0.0, %v1078
        %v1080 = vpop.f32.mrb[0].mxu0
        %v1081 = vadd.f32 0.0, %v1080
        %v1082 = vpop.f32.mrb[0].mxu0
        %v1083 = vadd.f32 0.0, %v1082
        %v1084 = vpop.f32.mrb[0].mxu0
        %v1085 = vadd.f32 0.0, %v1084
        %1086 = vmatprep.mubr.bf16.mxu0 0
        %1087 = vmatmul.mubr.bf16.gmra.mrb[0].mxu0 %v992
        %v1088 = vpop.f32.mrb[0].mxu0
        %v1089 = vadd.f32 0.0, %v1088
        %v1090 = vpop.f32.mrb[0].mxu0
        %v1091 = vadd.f32 0.0, %v1090
        %v1092 = vpop.f32.mrb[0].mxu0
        %v1093 = vadd.f32 0.0, %v1092
        %v1094 = vpop.f32.mrb[0].mxu0
        %v1095 = vadd.f32 0.0, %v1094
        %1096 = vmatprep.mubr.bf16.mxu0 0
        %1097 = vmatmul.mubr.bf16.gmra.mrb[0].mxu0 %v995
        %v1098 = vpop.f32.mrb[0].mxu0
        %v1099 = vadd.f32 0.0, %v1098
        %v1100 = vpop.f32.mrb[0].mxu0
        %v1101 = vadd.f32 0.0, %v1100
        %v1102 = vpop.f32.mrb[0].mxu0
        %v1103 = vadd.f32 0.0, %v1102
        %v1104 = vpop.f32.mrb[0].mxu0
        %v1105 = vadd.f32 0.0, %v1104
        %1106 = vmatprep.mubr.bf16.mxu0 0
        %1107 = vmatmul.mubr.bf16.gmra.mrb[0].mxu0 %v998
        %v1108 = vpop.f32.mrb[0].mxu0
        %v1109 = vadd.f32 0.0, %v1108
        %v1110 = vpop.f32.mrb[0].mxu0
        %v1111 = vadd.f32 0.0, %v1110
        %v1112 = vpop.f32.mrb[0].mxu0
        %v1113 = vadd.f32 0.0, %v1112
        %v1114 = vpop.f32.mrb[0].mxu0
        %v1115 = vadd.f32 0.0, %v1114
        %1116 = vmatprep.mubr.bf16.mxu0 0
        %1117 = vmatmul.mubr.bf16.gmra.mrb[0].mxu0 %v1001
        %v1118 = vpop.f32.mrb[0].mxu0
        %v1119 = vadd.f32 0.0, %v1118
        %v1120 = vpop.f32.mrb[0].mxu0
        %v1121 = vadd.f32 0.0, %v1120
        %v1122 = vpop.f32.mrb[0].mxu0
        %v1123 = vadd.f32 0.0, %v1122
        %v1124 = vpop.f32.mrb[0].mxu0
        %v1125 = vadd.f32 0.0, %v1124
        %1126 = vmatprep.mubr.bf16.mxu0 0
        %1127 = vmatmul.mubr.bf16.gmra.mrb[0].mxu0 %v1004
        %v1128 = vpop.f32.mrb[0].mxu0
        %v1129 = vadd.f32 0.0, %v1128
        %v1130 = vpop.f32.mrb[0].mxu0
        %v1131 = vadd.f32 0.0, %v1130
        %v1132 = vpop.f32.mrb[0].mxu0
        %v1133 = vadd.f32 0.0, %v1132
        %v1134 = vpop.f32.mrb[0].mxu0
        %v1135 = vadd.f32 0.0, %v1134
        %1136 = vmatprep.mubr.bf16.mxu0 0
        %1137 = vmatmul.mubr.bf16.gmra.mrb[0].mxu0 %v1007
        %v1138 = vpop.f32.mrb[0].mxu0
        %v1139 = vadd.f32 0.0, %v1138
        %v1140 = vpop.f32.mrb[0].mxu0
        %v1141 = vadd.f32 0.0, %v1140
        %v1142 = vpop.f32.mrb[0].mxu0
        %v1143 = vadd.f32 0.0, %v1142
        %v1144 = vpop.f32.mrb[0].mxu0
        %v1145 = vadd.f32 0.0, %v1144
        %1146 = vmatprep.mubr.bf16.mxu0 0
        %1147 = vmatmul.mubr.bf16.gmra.mrb[0].mxu0 %v1010
        %v1148 = vpop.f32.mrb[0].mxu0
        %v1149 = vadd.f32 0.0, %v1148
        %v1150 = vpop.f32.mrb[0].mxu0
        %v1151 = vadd.f32 0.0, %v1150
        %v1152 = vpop.f32.mrb[0].mxu0
        %v1153 = vadd.f32 0.0, %v1152
        %v1154 = vpop.f32.mrb[0].mxu0
        %v1155 = vadd.f32 0.0, %v1154
        %1156 = vmatprep.mubr.bf16.mxu0 0
        %1157 = vmatmul.mubr.bf16.gmra.mrb[0].mxu0 %v1013
        %v1158 = vpop.f32.mrb[0].mxu0
        %v1159 = vadd.f32 0.0, %v1158
        %v1160 = vpop.f32.mrb[0].mxu0
        %v1161 = vadd.f32 0.0, %v1160
        %v1162 = vpop.f32.mrb[0].mxu0
        %v1163 = vadd.f32 0.0, %v1162
        %v1164 = vpop.f32.mrb[0].mxu0
        %v1165 = vadd.f32 0.0, %v1164
        %1166 = vmatprep.mubr.bf16.mxu0 0
        %1167 = vmatmul.mubr.bf16.gmra.mrb[0].mxu0 %v1016
        %v1168 = vpop.f32.mrb[0].mxu0
        %v1169 = vadd.f32 0.0, %v1168
        %v1170 = vpop.f32.mrb[0].mxu0
        %v1171 = vadd.f32 0.0, %v1170
        %v1172 = vpop.f32.mrb[0].mxu0
        %v1173 = vadd.f32 0.0, %v1172
        %v1174 = vpop.f32.mrb[0].mxu0
        %v1175 = vadd.f32 0.0, %v1174
        %1176 = vmatprep.mubr.bf16.mxu0 0
        %1177 = vmatmul.mubr.bf16.gmra.mrb[0].mxu0 %v1019
        %v1178 = vpop.f32.mrb[0].mxu0
        %v1179 = vadd.f32 0.0, %v1178
        %v1180 = vpop.f32.mrb[0].mxu0
        %v1181 = vadd.f32 0.0, %v1180
        %v1182 = vpop.f32.mrb[0].mxu0
        %v1183 = vadd.f32 0.0, %v1182
        %v1184 = vpop.f32.mrb[0].mxu0
        %v1185 = vadd.f32 0.0, %v1184
        %1186 = vmatprep.mubr.bf16.mxu0 0
        %1187 = vmatmul.mubr.bf16.gmra.mrb[0].mxu0 %v1022
        %v1188 = vpop.f32.mrb[0].mxu0
        %v1189 = vadd.f32 0.0, %v1188
        %v1190 = vpop.f32.mrb[0].mxu0
        %v1191 = vadd.f32 0.0, %v1190
        %v1192 = vpop.f32.mrb[0].mxu0
        %v1193 = vadd.f32 0.0, %v1192
        %v1194 = vpop.f32.mrb[0].mxu0
        %v1195 = vadd.f32 0.0, %v1194
        %1196 = vdwg.mxu0
        %1197 = vst [vmem:[%s116] sm:$0xff] %v1059
        %vm1198 = vcmask 785408
        %1199 = vst.msk [vmem:[%s116 + $0x8] sm:$0xff] %vm1198, %v1061
        %1200 = vst [vmem:[%s116 + $0x10] sm:$0xff] %v1063
        %1201 = vst.msk [vmem:[%s116 + $0x18] sm:$0xff] %vm1198, %v1065
        %1202 = vst [vmem:[%s116 + $0x20] sm:$0xff] %v1069
        %1203 = vst.msk [vmem:[%s116 + $0x28] sm:$0xff] %vm1198, %v1071
        %1204 = vst [vmem:[%s116 + $0x30] sm:$0xff] %v1073
        %1205 = vst.msk [vmem:[%s116 + $0x38] sm:$0xff] %vm1198, %v1075
        %1206 = vst [vmem:[%s116 + $0x40] sm:$0xff] %v1079
        %1207 = vst.msk [vmem:[%s116 + $0x48] sm:$0xff] %vm1198, %v1081
        %1208 = vst [vmem:[%s116 + $0x50] sm:$0xff] %v1083
        %1209 = vst.msk [vmem:[%s116 + $0x58] sm:$0xff] %vm1198, %v1085
        %1210 = vst [vmem:[%s116 + $0x60] sm:$0xff] %v1089
        %1211 = vst.msk [vmem:[%s116 + $0x68] sm:$0xff] %vm1198, %v1091
        %1212 = vst [vmem:[%s116 + $0x70] sm:$0xff] %v1093
        %1213 = vst.msk [vmem:[%s116 + $0x78] sm:$0xff] %vm1198, %v1095
        %1214 = vst [vmem:[%s116 + $0x80] sm:$0xff] %v1099
        %1215 = vst.msk [vmem:[%s116 + $0x88] sm:$0xff] %vm1198, %v1101
        %1216 = vst [vmem:[%s116 + $0x90] sm:$0xff] %v1103
        %1217 = vst.msk [vmem:[%s116 + $0x98] sm:$0xff] %vm1198, %v1105
        %1218 = vst [vmem:[%s116 + $0xa0] sm:$0xff] %v1109
        %1219 = vst.msk [vmem:[%s116 + $0xa8] sm:$0xff] %vm1198, %v1111
        %1220 = vst [vmem:[%s116 + $0xb0] sm:$0xff] %v1113
        %1221 = vst.msk [vmem:[%s116 + $0xb8] sm:$0xff] %vm1198, %v1115
        %1222 = vst [vmem:[%s116 + $0xc0] sm:$0xff] %v1119
        %1223 = vst.msk [vmem:[%s116 + $0xc8] sm:$0xff] %vm1198, %v1121
        %1224 = vst [vmem:[%s116 + $0xd0] sm:$0xff] %v1123
        %1225 = vst.msk [vmem:[%s116 + $0xd8] sm:$0xff] %vm1198, %v1125
        %1226 = vst [vmem:[%s116 + $0xe0] sm:$0xff] %v1129
        %1227 = vst.msk [vmem:[%s116 + $0xe8] sm:$0xff] %vm1198, %v1131
        %1228 = vst [vmem:[%s116 + $0xf0] sm:$0xff] %v1133
        %1229 = vst.msk [vmem:[%s116 + $0xf8] sm:$0xff] %vm1198, %v1135
        %1230 = vst [vmem:[%s116 + $0x100] sm:$0xff] %v1139
        %1231 = vst.msk [vmem:[%s116 + $0x108] sm:$0xff] %vm1198, %v1141
        %1232 = vst [vmem:[%s116 + $0x110] sm:$0xff] %v1143
        %1233 = vst.msk [vmem:[%s116 + $0x118] sm:$0xff] %vm1198, %v1145
        %1234 = vst [vmem:[%s116 + $0x120] sm:$0xff] %v1149
        %1235 = vst.msk [vmem:[%s116 + $0x128] sm:$0xff] %vm1198, %v1151
        %1236 = vst [vmem:[%s116 + $0x130] sm:$0xff] %v1153
        %1237 = vst.msk [vmem:[%s116 + $0x138] sm:$0xff] %vm1198, %v1155
        %1238 = vst [vmem:[%s116 + $0x140] sm:$0xff] %v1159
        %1239 = vst.msk [vmem:[%s116 + $0x148] sm:$0xff] %vm1198, %v1161
        %1240 = vst [vmem:[%s116 + $0x150] sm:$0xff] %v1163
        %1241 = vst.msk [vmem:[%s116 + $0x158] sm:$0xff] %vm1198, %v1165
        %1242 = vst [vmem:[%s116 + $0x160] sm:$0xff] %v1169
        %1243 = vst.msk [vmem:[%s116 + $0x168] sm:$0xff] %vm1198, %v1171
        %1244 = vst [vmem:[%s116 + $0x170] sm:$0xff] %v1173
        %1245 = vst.msk [vmem:[%s116 + $0x178] sm:$0xff] %vm1198, %v1175
        %1246 = vst [vmem:[%s116 + $0x180] sm:$0xff] %v1179
        %1247 = vst.msk [vmem:[%s116 + $0x188] sm:$0xff] %vm1198, %v1181
        %1248 = vst [vmem:[%s116 + $0x190] sm:$0xff] %v1183
        %1249 = vst.msk [vmem:[%s116 + $0x198] sm:$0xff] %vm1198, %v1185
        %1250 = vst [vmem:[%s116 + $0x1a0] sm:$0xff] %v1189
        %1251 = vst.msk [vmem:[%s116 + $0x1a8] sm:$0xff] %vm1198, %v1191
        %1252 = vst [vmem:[%s116 + $0x1b0] sm:$0xff] %v1193
        %1253 = vst.msk [vmem:[%s116 + $0x1b8] sm:$0xff] %vm1198, %v1195
        %1254 = vmatprep.subr.bf16.mxu0 %v975
        %1255 = vmatpush1.bf16.msra.mxu0 %v974
        %1256 = vmatprep.subr.bf16.mxu0 %v977
        %1257 = vmatpush1.bf16.msra.mxu0 %v976
        %1258 = vmatprep.subr.bf16.mxu0 0
        %1259 = vmatpush1.bf16.msra.mxu0 0
        %1260 = vmatprep.subr.bf16.mxu0 0
        %1261 = vmatpush1.bf16.msra.mxu0 0
        %1262 = vmatprep.subr.bf16.mxu0 0
        %1263 = vmatpush1.bf16.msra.mxu0 0
        %1264 = vmatprep.subr.bf16.mxu0 0
        %1265 = vmatpush1.bf16.msra.mxu0 0
        %1266 = vmatprep.subr.bf16.mxu0 0
        %1267 = vmatpush1.bf16.msra.mxu0 0
        %1268 = vmatprep.subr.bf16.mxu0 0
        %1269 = vmatpush1.bf16.msra.mxu0 0
        %1270 = vmatprep.subr.bf16.mxu0 0
        %1271 = vmatpush1.bf16.msra.mxu0 0
        %1272 = vmatprep.subr.bf16.mxu0 0
        %1273 = vmatpush1.bf16.msra.mxu0 0
        %1274 = vmatprep.subr.bf16.mxu0 0
        %1275 = vmatpush1.bf16.msra.mxu0 0
        %1276 = vmatprep.subr.bf16.mxu0 0
        %1277 = vmatpush1.bf16.msra.mxu0 0
        %1278 = vmatprep.subr.bf16.mxu0 0
        %1279 = vmatpush1.bf16.msra.mxu0 0
        %1280 = vmatprep.subr.bf16.mxu0 0
        %1281 = vmatpush1.bf16.msra.mxu0 0
        %1282 = vmatprep.subr.bf16.mxu0 0
        %1283 = vmatpush1.bf16.msra.mxu0 0
        %1284 = vmatprep.subr.bf16.mxu0 0
        %1285 = vmatpush1.bf16.msra.mxu0 0
        %1286 = vmatprep.mubr.bf16.mxu0 0
        %1287 = vmatmul.mubr.bf16.gmra.mrb[0].mxu0 %v983
        %v1288 = vpop.f32.mrb[0].mxu0
        %v1289 = vadd.f32 0.0, %v1288
        %v1290 = vpop.f32.mrb[0].mxu0
        %v1291 = vadd.f32 0.0, %v1290
        %v1292 = vpop.f32.mrb[0].mxu0
        %v1293 = vadd.f32 0.0, %v1292
        %v1294 = vpop.f32.mrb[0].mxu0
        %v1295 = vadd.f32 0.0, %v1294
        %1296 = vmatprep.mubr.bf16.mxu0 0
        %1297 = vmatmul.mubr.bf16.gmra.mrb[0].mxu0 %v986
        %v1298 = vpop.f32.mrb[0].mxu0
        %v1299 = vadd.f32 0.0, %v1298
        %v1300 = vpop.f32.mrb[0].mxu0
        %v1301 = vadd.f32 0.0, %v1300
        %v1302 = vpop.f32.mrb[0].mxu0
        %v1303 = vadd.f32 0.0, %v1302
        %v1304 = vpop.f32.mrb[0].mxu0
        %v1305 = vadd.f32 0.0, %v1304
        %1306 = vmatprep.mubr.bf16.mxu0 0
        %1307 = vmatmul.mubr.bf16.gmra.mrb[0].mxu0 %v989
        %v1308 = vpop.f32.mrb[0].mxu0
        %v1309 = vadd.f32 0.0, %v1308
        %v1310 = vpop.f32.mrb[0].mxu0
        %v1311 = vadd.f32 0.0, %v1310
        %v1312 = vpop.f32.mrb[0].mxu0
        %v1313 = vadd.f32 0.0, %v1312
        %v1314 = vpop.f32.mrb[0].mxu0
        %v1315 = vadd.f32 0.0, %v1314
        %1316 = vmatprep.mubr.bf16.mxu0 0
        %1317 = vmatmul.mubr.bf16.gmra.mrb[0].mxu0 %v992
        %v1318 = vpop.f32.mrb[0].mxu0
        %v1319 = vadd.f32 0.0, %v1318
        %v1320 = vpop.f32.mrb[0].mxu0
        %v1321 = vadd.f32 0.0, %v1320
        %v1322 = vpop.f32.mrb[0].mxu0
        %v1323 = vadd.f32 0.0, %v1322
        %v1324 = vpop.f32.mrb[0].mxu0
        %v1325 = vadd.f32 0.0, %v1324
        %1326 = vmatprep.mubr.bf16.mxu0 0
        %1327 = vmatmul.mubr.bf16.gmra.mrb[0].mxu0 %v995
        %v1328 = vpop.f32.mrb[0].mxu0
        %v1329 = vadd.f32 0.0, %v1328
        %v1330 = vpop.f32.mrb[0].mxu0
        %v1331 = vadd.f32 0.0, %v1330
        %v1332 = vpop.f32.mrb[0].mxu0
        %v1333 = vadd.f32 0.0, %v1332
        %v1334 = vpop.f32.mrb[0].mxu0
        %v1335 = vadd.f32 0.0, %v1334
        %1336 = vmatprep.mubr.bf16.mxu0 0
        %1337 = vmatmul.mubr.bf16.gmra.mrb[0].mxu0 %v998
        %v1338 = vpop.f32.mrb[0].mxu0
        %v1339 = vadd.f32 0.0, %v1338
        %v1340 = vpop.f32.mrb[0].mxu0
        %v1341 = vadd.f32 0.0, %v1340
        %v1342 = vpop.f32.mrb[0].mxu0
        %v1343 = vadd.f32 0.0, %v1342
        %v1344 = vpop.f32.mrb[0].mxu0
        %v1345 = vadd.f32 0.0, %v1344
        %1346 = vmatprep.mubr.bf16.mxu0 0
        %1347 = vmatmul.mubr.bf16.gmra.mrb[0].mxu0 %v1001
        %v1348 = vpop.f32.mrb[0].mxu0
        %v1349 = vadd.f32 0.0, %v1348
        %v1350 = vpop.f32.mrb[0].mxu0
        %v1351 = vadd.f32 0.0, %v1350
        %v1352 = vpop.f32.mrb[0].mxu0
        %v1353 = vadd.f32 0.0, %v1352
        %v1354 = vpop.f32.mrb[0].mxu0
        %v1355 = vadd.f32 0.0, %v1354
        %1356 = vmatprep.mubr.bf16.mxu0 0
        %1357 = vmatmul.mubr.bf16.gmra.mrb[0].mxu0 %v1004
        %v1358 = vpop.f32.mrb[0].mxu0
        %v1359 = vadd.f32 0.0, %v1358
        %v1360 = vpop.f32.mrb[0].mxu0
        %v1361 = vadd.f32 0.0, %v1360
        %v1362 = vpop.f32.mrb[0].mxu0
        %v1363 = vadd.f32 0.0, %v1362
        %v1364 = vpop.f32.mrb[0].mxu0
        %v1365 = vadd.f32 0.0, %v1364
        %1366 = vmatprep.mubr.bf16.mxu0 0
        %1367 = vmatmul.mubr.bf16.gmra.mrb[0].mxu0 %v1007
        %v1368 = vpop.f32.mrb[0].mxu0
        %v1369 = vadd.f32 0.0, %v1368
        %v1370 = vpop.f32.mrb[0].mxu0
        %v1371 = vadd.f32 0.0, %v1370
        %v1372 = vpop.f32.mrb[0].mxu0
        %v1373 = vadd.f32 0.0, %v1372
        %v1374 = vpop.f32.mrb[0].mxu0
        %v1375 = vadd.f32 0.0, %v1374
        %1376 = vmatprep.mubr.bf16.mxu0 0
        %1377 = vmatmul.mubr.bf16.gmra.mrb[0].mxu0 %v1010
        %v1378 = vpop.f32.mrb[0].mxu0
        %v1379 = vadd.f32 0.0, %v1378
        %v1380 = vpop.f32.mrb[0].mxu0
        %v1381 = vadd.f32 0.0, %v1380
        %v1382 = vpop.f32.mrb[0].mxu0
        %v1383 = vadd.f32 0.0, %v1382
        %v1384 = vpop.f32.mrb[0].mxu0
        %v1385 = vadd.f32 0.0, %v1384
        %1386 = vmatprep.mubr.bf16.mxu0 0
        %1387 = vmatmul.mubr.bf16.gmra.mrb[0].mxu0 %v1013
        %v1388 = vpop.f32.mrb[0].mxu0
        %v1389 = vadd.f32 0.0, %v1388
        %v1390 = vpop.f32.mrb[0].mxu0
        %v1391 = vadd.f32 0.0, %v1390
        %v1392 = vpop.f32.mrb[0].mxu0
        %v1393 = vadd.f32 0.0, %v1392
        %v1394 = vpop.f32.mrb[0].mxu0
        %v1395 = vadd.f32 0.0, %v1394
        %1396 = vmatprep.mubr.bf16.mxu0 0
        %1397 = vmatmul.mubr.bf16.gmra.mrb[0].mxu0 %v1016
        %v1398 = vpop.f32.mrb[0].mxu0
        %v1399 = vadd.f32 0.0, %v1398
        %v1400 = vpop.f32.mrb[0].mxu0
        %v1401 = vadd.f32 0.0, %v1400
        %v1402 = vpop.f32.mrb[0].mxu0
        %v1403 = vadd.f32 0.0, %v1402
        %v1404 = vpop.f32.mrb[0].mxu0
        %v1405 = vadd.f32 0.0, %v1404
        %1406 = vmatprep.mubr.bf16.mxu0 0
        %1407 = vmatmul.mubr.bf16.gmra.mrb[0].mxu0 %v1019
        %v1408 = vpop.f32.mrb[0].mxu0
        %v1409 = vadd.f32 0.0, %v1408
        %v1410 = vpop.f32.mrb[0].mxu0
        %v1411 = vadd.f32 0.0, %v1410
        %v1412 = vpop.f32.mrb[0].mxu0
        %v1413 = vadd.f32 0.0, %v1412
        %v1414 = vpop.f32.mrb[0].mxu0
        %v1415 = vadd.f32 0.0, %v1414
        %1416 = vmatprep.mubr.bf16.mxu0 0
        %1417 = vmatmul.mubr.bf16.gmra.mrb[0].mxu0 %v1022
        %v1418 = vpop.f32.mrb[0].mxu0
        %v1419 = vadd.f32 0.0, %v1418
        %v1420 = vpop.f32.mrb[0].mxu0
        %v1421 = vadd.f32 0.0, %v1420
        %v1422 = vpop.f32.mrb[0].mxu0
        %v1423 = vadd.f32 0.0, %v1422
        %v1424 = vpop.f32.mrb[0].mxu0
        %v1425 = vadd.f32 0.0, %v1424
        %1426 = vdwg.mxu0
        %s1427 = scalar_lea.vmem %s116, 448 [#allocation4]
        %1428 = vst [vmem:[%s1427] sm:$0xff] %v1289
        %1429 = vst.msk [vmem:[%s1427 + $0x8] sm:$0xff] %vm1198, %v1291
        %1430 = vst [vmem:[%s1427 + $0x10] sm:$0xff] %v1293
        %1431 = vst.msk [vmem:[%s1427 + $0x18] sm:$0xff] %vm1198, %v1295
        %1432 = vst [vmem:[%s1427 + $0x20] sm:$0xff] %v1299
        %1433 = vst.msk [vmem:[%s1427 + $0x28] sm:$0xff] %vm1198, %v1301
        %1434 = vst [vmem:[%s1427 + $0x30] sm:$0xff] %v1303
        %1435 = vst.msk [vmem:[%s1427 + $0x38] sm:$0xff] %vm1198, %v1305
        %1436 = vst [vmem:[%s1427 + $0x40] sm:$0xff] %v1309
        %1437 = vst.msk [vmem:[%s1427 + $0x48] sm:$0xff] %vm1198, %v1311
        %1438 = vst [vmem:[%s1427 + $0x50] sm:$0xff] %v1313
        %1439 = vst.msk [vmem:[%s1427 + $0x58] sm:$0xff] %vm1198, %v1315
        %1440 = vst [vmem:[%s1427 + $0x60] sm:$0xff] %v1319
        %1441 = vst.msk [vmem:[%s1427 + $0x68] sm:$0xff] %vm1198, %v1321
        %1442 = vst [vmem:[%s1427 + $0x70] sm:$0xff] %v1323
        %1443 = vst.msk [vmem:[%s1427 + $0x78] sm:$0xff] %vm1198, %v1325
        %1444 = vst [vmem:[%s1427 + $0x80] sm:$0xff] %v1329
        %1445 = vst.msk [vmem:[%s1427 + $0x88] sm:$0xff] %vm1198, %v1331
        %1446 = vst [vmem:[%s1427 + $0x90] sm:$0xff] %v1333
        %1447 = vst.msk [vmem:[%s1427 + $0x98] sm:$0xff] %vm1198, %v1335
        %1448 = vst [vmem:[%s1427 + $0xa0] sm:$0xff] %v1339
        %1449 = vst.msk [vmem:[%s1427 + $0xa8] sm:$0xff] %vm1198, %v1341
        %1450 = vst [vmem:[%s1427 + $0xb0] sm:$0xff] %v1343
        %1451 = vst.msk [vmem:[%s1427 + $0xb8] sm:$0xff] %vm1198, %v1345
        %1452 = vst [vmem:[%s1427 + $0xc0] sm:$0xff] %v1349
        %1453 = vst.msk [vmem:[%s1427 + $0xc8] sm:$0xff] %vm1198, %v1351
        %1454 = vst [vmem:[%s1427 + $0xd0] sm:$0xff] %v1353
        %1455 = vst.msk [vmem:[%s1427 + $0xd8] sm:$0xff] %vm1198, %v1355
        %1456 = vst [vmem:[%s1427 + $0xe0] sm:$0xff] %v1359
        %1457 = vst.msk [vmem:[%s1427 + $0xe8] sm:$0xff] %vm1198, %v1361
        %1458 = vst [vmem:[%s1427 + $0xf0] sm:$0xff] %v1363
        %1459 = vst.msk [vmem:[%s1427 + $0xf8] sm:$0xff] %vm1198, %v1365
        %1460 = vst [vmem:[%s1427 + $0x100] sm:$0xff] %v1369
        %1461 = vst.msk [vmem:[%s1427 + $0x108] sm:$0xff] %vm1198, %v1371
        %1462 = vst [vmem:[%s1427 + $0x110] sm:$0xff] %v1373
        %1463 = vst.msk [vmem:[%s1427 + $0x118] sm:$0xff] %vm1198, %v1375
        %1464 = vst [vmem:[%s1427 + $0x120] sm:$0xff] %v1379
        %1465 = vst.msk [vmem:[%s1427 + $0x128] sm:$0xff] %vm1198, %v1381
        %1466 = vst [vmem:[%s1427 + $0x130] sm:$0xff] %v1383
        %1467 = vst.msk [vmem:[%s1427 + $0x138] sm:$0xff] %vm1198, %v1385
        %1468 = vst [vmem:[%s1427 + $0x140] sm:$0xff] %v1389
        %1469 = vst.msk [vmem:[%s1427 + $0x148] sm:$0xff] %vm1198, %v1391
        %1470 = vst [vmem:[%s1427 + $0x150] sm:$0xff] %v1393
        %1471 = vst.msk [vmem:[%s1427 + $0x158] sm:$0xff] %vm1198, %v1395
        %1472 = vst [vmem:[%s1427 + $0x160] sm:$0xff] %v1399
        %1473 = vst.msk [vmem:[%s1427 + $0x168] sm:$0xff] %vm1198, %v1401
        %1474 = vst [vmem:[%s1427 + $0x170] sm:$0xff] %v1403
        %1475 = vst.msk [vmem:[%s1427 + $0x178] sm:$0xff] %vm1198, %v1405
        %1476 = vst [vmem:[%s1427 + $0x180] sm:$0xff] %v1409
        %1477 = vst.msk [vmem:[%s1427 + $0x188] sm:$0xff] %vm1198, %v1411
        %1478 = vst [vmem:[%s1427 + $0x190] sm:$0xff] %v1413
        %1479 = vst.msk [vmem:[%s1427 + $0x198] sm:$0xff] %vm1198, %v1415
        %1480 = vst [vmem:[%s1427 + $0x1a0] sm:$0xff] %v1419
        %1481 = vst.msk [vmem:[%s1427 + $0x1a8] sm:$0xff] %vm1198, %v1421
        %1482 = vst [vmem:[%s1427 + $0x1b0] sm:$0xff] %v1423
        %1483 = vst.msk [vmem:[%s1427 + $0x1b8] sm:$0xff] %vm1198, %v1425
        %1484 = vmatprep.subr.bf16.mxu0 %v979
        %1485 = vmatpush1.bf16.msra.mxu0 %v978
        %1486 = vmatprep.subr.bf16.mxu0 %v981
        %1487 = vmatpush1.bf16.msra.mxu0 %v980
        %1488 = vmatprep.subr.bf16.mxu0 0
        %1489 = vmatpush1.bf16.msra.mxu0 0
        %1490 = vmatprep.subr.bf16.mxu0 0
        %1491 = vmatpush1.bf16.msra.mxu0 0
        %1492 = vmatprep.subr.bf16.mxu0 0
        %1493 = vmatpush1.bf16.msra.mxu0 0
        %1494 = vmatprep.subr.bf16.mxu0 0
        %1495 = vmatpush1.bf16.msra.mxu0 0
        %1496 = vmatprep.subr.bf16.mxu0 0
        %1497 = vmatpush1.bf16.msra.mxu0 0
        %1498 = vmatprep.subr.bf16.mxu0 0
        %1499 = vmatpush1.bf16.msra.mxu0 0
        %1500 = vmatprep.subr.bf16.mxu0 0
        %1501 = vmatpush1.bf16.msra.mxu0 0
        %1502 = vmatprep.subr.bf16.mxu0 0
        %1503 = vmatpush1.bf16.msra.mxu0 0
        %1504 = vmatprep.subr.bf16.mxu0 0
        %1505 = vmatpush1.bf16.msra.mxu0 0
        %1506 = vmatprep.subr.bf16.mxu0 0
        %1507 = vmatpush1.bf16.msra.mxu0 0
        %1508 = vmatprep.subr.bf16.mxu0 0
        %1509 = vmatpush1.bf16.msra.mxu0 0
        %1510 = vmatprep.subr.bf16.mxu0 0
        %1511 = vmatpush1.bf16.msra.mxu0 0
        %1512 = vmatprep.subr.bf16.mxu0 0
        %1513 = vmatpush1.bf16.msra.mxu0 0
        %1514 = vmatprep.subr.bf16.mxu0 0
        %1515 = vmatpush1.bf16.msra.mxu0 0
        %1516 = vmatprep.mubr.bf16.mxu0 0
        %1517 = vmatmul.mubr.bf16.gmra.mrb[0].mxu0 %v983
        %v1518 = vpop.f32.mrb[0].mxu0
        %v1519 = vadd.f32 0.0, %v1518
        %v1520 = vpop.f32.mrb[0].mxu0
        %v1521 = vadd.f32 0.0, %v1520
        %v1522 = vpop.f32.mrb[0].mxu0
        %v1523 = vadd.f32 0.0, %v1522
        %v1524 = vpop.f32.mrb[0].mxu0
        %v1525 = vadd.f32 0.0, %v1524
        %1526 = vmatprep.mubr.bf16.mxu0 0
        %1527 = vmatmul.mubr.bf16.gmra.mrb[0].mxu0 %v986
        %v1528 = vpop.f32.mrb[0].mxu0
        %v1529 = vadd.f32 0.0, %v1528
        %v1530 = vpop.f32.mrb[0].mxu0
        %v1531 = vadd.f32 0.0, %v1530
        %v1532 = vpop.f32.mrb[0].mxu0
        %v1533 = vadd.f32 0.0, %v1532
        %v1534 = vpop.f32.mrb[0].mxu0
        %v1535 = vadd.f32 0.0, %v1534
        %1536 = vmatprep.mubr.bf16.mxu0 0
        %1537 = vmatmul.mubr.bf16.gmra.mrb[0].mxu0 %v989
        %v1538 = vpop.f32.mrb[0].mxu0
        %v1539 = vadd.f32 0.0, %v1538
        %v1540 = vpop.f32.mrb[0].mxu0
        %v1541 = vadd.f32 0.0, %v1540
        %v1542 = vpop.f32.mrb[0].mxu0
        %v1543 = vadd.f32 0.0, %v1542
        %v1544 = vpop.f32.mrb[0].mxu0
        %v1545 = vadd.f32 0.0, %v1544
        %1546 = vmatprep.mubr.bf16.mxu0 0
        %1547 = vmatmul.mubr.bf16.gmra.mrb[0].mxu0 %v992
        %v1548 = vpop.f32.mrb[0].mxu0
        %v1549 = vadd.f32 0.0, %v1548
        %v1550 = vpop.f32.mrb[0].mxu0
        %v1551 = vadd.f32 0.0, %v1550
        %v1552 = vpop.f32.mrb[0].mxu0
        %v1553 = vadd.f32 0.0, %v1552
        %v1554 = vpop.f32.mrb[0].mxu0
        %v1555 = vadd.f32 0.0, %v1554
        %1556 = vmatprep.mubr.bf16.mxu0 0
        %1557 = vmatmul.mubr.bf16.gmra.mrb[0].mxu0 %v995
        %v1558 = vpop.f32.mrb[0].mxu0
        %v1559 = vadd.f32 0.0, %v1558
        %v1560 = vpop.f32.mrb[0].mxu0
        %v1561 = vadd.f32 0.0, %v1560
        %v1562 = vpop.f32.mrb[0].mxu0
        %v1563 = vadd.f32 0.0, %v1562
        %v1564 = vpop.f32.mrb[0].mxu0
        %v1565 = vadd.f32 0.0, %v1564
        %1566 = vmatprep.mubr.bf16.mxu0 0
        %1567 = vmatmul.mubr.bf16.gmra.mrb[0].mxu0 %v998
        %v1568 = vpop.f32.mrb[0].mxu0
        %v1569 = vadd.f32 0.0, %v1568
        %v1570 = vpop.f32.mrb[0].mxu0
        %v1571 = vadd.f32 0.0, %v1570
        %v1572 = vpop.f32.mrb[0].mxu0
        %v1573 = vadd.f32 0.0, %v1572
        %v1574 = vpop.f32.mrb[0].mxu0
        %v1575 = vadd.f32 0.0, %v1574
        %1576 = vmatprep.mubr.bf16.mxu0 0
        %1577 = vmatmul.mubr.bf16.gmra.mrb[0].mxu0 %v1001
        %v1578 = vpop.f32.mrb[0].mxu0
        %v1579 = vadd.f32 0.0, %v1578
        %v1580 = vpop.f32.mrb[0].mxu0
        %v1581 = vadd.f32 0.0, %v1580
        %v1582 = vpop.f32.mrb[0].mxu0
        %v1583 = vadd.f32 0.0, %v1582
        %v1584 = vpop.f32.mrb[0].mxu0
        %v1585 = vadd.f32 0.0, %v1584
        %1586 = vmatprep.mubr.bf16.mxu0 0
        %1587 = vmatmul.mubr.bf16.gmra.mrb[0].mxu0 %v1004
        %v1588 = vpop.f32.mrb[0].mxu0
        %v1589 = vadd.f32 0.0, %v1588
        %v1590 = vpop.f32.mrb[0].mxu0
        %v1591 = vadd.f32 0.0, %v1590
        %v1592 = vpop.f32.mrb[0].mxu0
        %v1593 = vadd.f32 0.0, %v1592
        %v1594 = vpop.f32.mrb[0].mxu0
        %v1595 = vadd.f32 0.0, %v1594
        %1596 = vmatprep.mubr.bf16.mxu0 0
        %1597 = vmatmul.mubr.bf16.gmra.mrb[0].mxu0 %v1007
        %v1598 = vpop.f32.mrb[0].mxu0
        %v1599 = vadd.f32 0.0, %v1598
        %v1600 = vpop.f32.mrb[0].mxu0
        %v1601 = vadd.f32 0.0, %v1600
        %v1602 = vpop.f32.mrb[0].mxu0
        %v1603 = vadd.f32 0.0, %v1602
        %v1604 = vpop.f32.mrb[0].mxu0
        %v1605 = vadd.f32 0.0, %v1604
        %1606 = vmatprep.mubr.bf16.mxu0 0
        %1607 = vmatmul.mubr.bf16.gmra.mrb[0].mxu0 %v1010
        %v1608 = vpop.f32.mrb[0].mxu0
        %v1609 = vadd.f32 0.0, %v1608
        %v1610 = vpop.f32.mrb[0].mxu0
        %v1611 = vadd.f32 0.0, %v1610
        %v1612 = vpop.f32.mrb[0].mxu0
        %v1613 = vadd.f32 0.0, %v1612
        %v1614 = vpop.f32.mrb[0].mxu0
        %v1615 = vadd.f32 0.0, %v1614
        %1616 = vmatprep.mubr.bf16.mxu0 0
        %1617 = vmatmul.mubr.bf16.gmra.mrb[0].mxu0 %v1013
        %v1618 = vpop.f32.mrb[0].mxu0
        %v1619 = vadd.f32 0.0, %v1618
        %v1620 = vpop.f32.mrb[0].mxu0
        %v1621 = vadd.f32 0.0, %v1620
        %v1622 = vpop.f32.mrb[0].mxu0
        %v1623 = vadd.f32 0.0, %v1622
        %v1624 = vpop.f32.mrb[0].mxu0
        %v1625 = vadd.f32 0.0, %v1624
        %1626 = vmatprep.mubr.bf16.mxu0 0
        %1627 = vmatmul.mubr.bf16.gmra.mrb[0].mxu0 %v1016
        %v1628 = vpop.f32.mrb[0].mxu0
        %v1629 = vadd.f32 0.0, %v1628
        %v1630 = vpop.f32.mrb[0].mxu0
        %v1631 = vadd.f32 0.0, %v1630
        %v1632 = vpop.f32.mrb[0].mxu0
        %v1633 = vadd.f32 0.0, %v1632
        %v1634 = vpop.f32.mrb[0].mxu0
        %v1635 = vadd.f32 0.0, %v1634
        %1636 = vmatprep.mubr.bf16.mxu0 0
        %1637 = vmatmul.mubr.bf16.gmra.mrb[0].mxu0 %v1019
        %v1638 = vpop.f32.mrb[0].mxu0
        %v1639 = vadd.f32 0.0, %v1638
        %v1640 = vpop.f32.mrb[0].mxu0
        %v1641 = vadd.f32 0.0, %v1640
        %v1642 = vpop.f32.mrb[0].mxu0
        %v1643 = vadd.f32 0.0, %v1642
        %v1644 = vpop.f32.mrb[0].mxu0
        %v1645 = vadd.f32 0.0, %v1644
        %1646 = vmatprep.mubr.bf16.mxu0 0
        %1647 = vmatmul.mubr.bf16.gmra.mrb[0].mxu0 %v1022
        %v1648 = vpop.f32.mrb[0].mxu0
        %v1649 = vadd.f32 0.0, %v1648
        %v1650 = vpop.f32.mrb[0].mxu0
        %v1651 = vadd.f32 0.0, %v1650
        %v1652 = vpop.f32.mrb[0].mxu0
        %v1653 = vadd.f32 0.0, %v1652
        %v1654 = vpop.f32.mrb[0].mxu0
        %v1655 = vadd.f32 0.0, %v1654
        %1656 = vdwg.mxu0
        %s1657 = scalar_lea.vmem %s116, 896 [#allocation4]
        %1658 = vst [vmem:[%s1657] sm:$0xff] %v1519
        %1659 = vst.msk [vmem:[%s1657 + $0x8] sm:$0xff] %vm1198, %v1521
        %1660 = vst [vmem:[%s1657 + $0x10] sm:$0xff] %v1523
        %1661 = vst.msk [vmem:[%s1657 + $0x18] sm:$0xff] %vm1198, %v1525
        %1662 = vst [vmem:[%s1657 + $0x20] sm:$0xff] %v1529
        %1663 = vst.msk [vmem:[%s1657 + $0x28] sm:$0xff] %vm1198, %v1531
        %1664 = vst [vmem:[%s1657 + $0x30] sm:$0xff] %v1533
        %1665 = vst.msk [vmem:[%s1657 + $0x38] sm:$0xff] %vm1198, %v1535
        %1666 = vst [vmem:[%s1657 + $0x40] sm:$0xff] %v1539
        %1667 = vst.msk [vmem:[%s1657 + $0x48] sm:$0xff] %vm1198, %v1541
        %1668 = vst [vmem:[%s1657 + $0x50] sm:$0xff] %v1543
        %1669 = vst.msk [vmem:[%s1657 + $0x58] sm:$0xff] %vm1198, %v1545
        %1670 = vst [vmem:[%s1657 + $0x60] sm:$0xff] %v1549
        %1671 = vst.msk [vmem:[%s1657 + $0x68] sm:$0xff] %vm1198, %v1551
        %1672 = vst [vmem:[%s1657 + $0x70] sm:$0xff] %v1553
        %1673 = vst.msk [vmem:[%s1657 + $0x78] sm:$0xff] %vm1198, %v1555
        %1674 = vst [vmem:[%s1657 + $0x80] sm:$0xff] %v1559
        %1675 = vst.msk [vmem:[%s1657 + $0x88] sm:$0xff] %vm1198, %v1561
        %1676 = vst [vmem:[%s1657 + $0x90] sm:$0xff] %v1563
        %1677 = vst.msk [vmem:[%s1657 + $0x98] sm:$0xff] %vm1198, %v1565
        %1678 = vst [vmem:[%s1657 + $0xa0] sm:$0xff] %v1569
        %1679 = vst.msk [vmem:[%s1657 + $0xa8] sm:$0xff] %vm1198, %v1571
        %1680 = vst [vmem:[%s1657 + $0xb0] sm:$0xff] %v1573
        %1681 = vst.msk [vmem:[%s1657 + $0xb8] sm:$0xff] %vm1198, %v1575
        %1682 = vst [vmem:[%s1657 + $0xc0] sm:$0xff] %v1579
        %1683 = vst.msk [vmem:[%s1657 + $0xc8] sm:$0xff] %vm1198, %v1581
        %1684 = vst [vmem:[%s1657 + $0xd0] sm:$0xff] %v1583
        %1685 = vst.msk [vmem:[%s1657 + $0xd8] sm:$0xff] %vm1198, %v1585
        %1686 = vst [vmem:[%s1657 + $0xe0] sm:$0xff] %v1589
        %1687 = vst.msk [vmem:[%s1657 + $0xe8] sm:$0xff] %vm1198, %v1591
        %1688 = vst [vmem:[%s1657 + $0xf0] sm:$0xff] %v1593
        %1689 = vst.msk [vmem:[%s1657 + $0xf8] sm:$0xff] %vm1198, %v1595
        %1690 = vst [vmem:[%s1657 + $0x100] sm:$0xff] %v1599
        %1691 = vst.msk [vmem:[%s1657 + $0x108] sm:$0xff] %vm1198, %v1601
        %1692 = vst [vmem:[%s1657 + $0x110] sm:$0xff] %v1603
        %1693 = vst.msk [vmem:[%s1657 + $0x118] sm:$0xff] %vm1198, %v1605
        %1694 = vst [vmem:[%s1657 + $0x120] sm:$0xff] %v1609
        %1695 = vst.msk [vmem:[%s1657 + $0x128] sm:$0xff] %vm1198, %v1611
        %1696 = vst [vmem:[%s1657 + $0x130] sm:$0xff] %v1613
        %1697 = vst.msk [vmem:[%s1657 + $0x138] sm:$0xff] %vm1198, %v1615
        %1698 = vst [vmem:[%s1657 + $0x140] sm:$0xff] %v1619
        %1699 = vst.msk [vmem:[%s1657 + $0x148] sm:$0xff] %vm1198, %v1621
        %1700 = vst [vmem:[%s1657 + $0x150] sm:$0xff] %v1623
        %1701 = vst.msk [vmem:[%s1657 + $0x158] sm:$0xff] %vm1198, %v1625
        %1702 = vst [vmem:[%s1657 + $0x160] sm:$0xff] %v1629
        %1703 = vst.msk [vmem:[%s1657 + $0x168] sm:$0xff] %vm1198, %v1631
        %1704 = vst [vmem:[%s1657 + $0x170] sm:$0xff] %v1633
        %1705 = vst.msk [vmem:[%s1657 + $0x178] sm:$0xff] %vm1198, %v1635
        %1706 = vst [vmem:[%s1657 + $0x180] sm:$0xff] %v1639
        %1707 = vst.msk [vmem:[%s1657 + $0x188] sm:$0xff] %vm1198, %v1641
        %1708 = vst [vmem:[%s1657 + $0x190] sm:$0xff] %v1643
        %1709 = vst.msk [vmem:[%s1657 + $0x198] sm:$0xff] %vm1198, %v1645
        %1710 = vst [vmem:[%s1657 + $0x1a0] sm:$0xff] %v1649
        %1711 = vst.msk [vmem:[%s1657 + $0x1a8] sm:$0xff] %vm1198, %v1651
        %1712 = vst [vmem:[%s1657 + $0x1b0] sm:$0xff] %v1653
        %1713 = vst.msk [vmem:[%s1657 + $0x1b8] sm:$0xff] %vm1198, %v1655
        %s1714 = sand.u32 %s56, 1
        %s1715 = scalar_lea.sflag [#allocation5], %s1714
        %s1716 = sand.u32 %s56, 1
        %s1717 = smul.addr %s1716, 1344
        %s1718 = scalar_lea.vmem [#allocation4], %s1717
        // Predicated region
        $region25: #{my_aug.9} parent=23 // pred_check
          %p1719 = pneg %p66
        $region26: #{my_aug.9} parent=23 // pred_check_branch
          %1721 = sbr.rel (%p1719) target = $region28
        $region27: #{my_aug.9} parent=23 // pred_region
          %s1723 = ssub.s32 21504, 21504
          %1724 = vsyncadd %s1715, %s1723
          %s1725 = smul.addr %s22, 168
          %s1726 = smul.addr %s1725, 128
          %s1727 = scalar_lea.hbm %s2, %s1726
          %s1728 = sshll.u32 %s1718, 4
          %s1729 = int_to_ptr.vmem [resolvable:$true] %s1728
          %1734 = dma.vmem_to_hbm [thread:$0]  %s1729, 21504, %s1727, %s1715, 256, 256, 16
        $region28: #{my_aug.9} parent=23 // pred_fallthru
          _
      $region24: #{my_aug.9} parent=5 // pred_fallthru
        _
      %p1735 = scmp.le.s32.totalorder 2, %s17
      // Predicated region
      $region29: #{my_aug.9} parent=5 // pred_check
        %p1736 = pneg %p1735
      $region30: #{my_aug.9} parent=5 // pred_check_branch
        %1738 = sbr.rel (%p1736) target = $region32
      $region31: #{my_aug.9} parent=5 // pred_region
        %s1739 = ssub.s32 %s17, 2
        // Predicated region
        $region33: #{my_aug.9} parent=31 // pred_check
          %p1740 = pneg %p72
        $region34: #{my_aug.9} parent=31 // pred_check_branch
          %1742 = sbr.rel (%p1740) target = $region36
        $region35: #{my_aug.9} parent=31 // pred_region
          %s1743 = sand.u32 %s57, 1
          %s1744 = scalar_lea.sflag [#allocation5], %s1743
          %s1745 = sand.u32 %s57, 1
          %s1746 = smul.addr %s1745, 1344
          %s1747 = scalar_lea.vmem [#allocation4], %s1746
          %1748 = dma.done %s1744, 21504
        $region36: #{my_aug.9} parent=31 // pred_fallthru
          _
      $region32: #{my_aug.9} parent=5 // pred_fallthru
        _
    $region6: #{my_aug.9} parent=1 // loop_footer
      %s21 = sadd.s32 1, %s17
    $region7: #{my_aug.9} parent=1 // loop_footer_branch
      %16 = sbr.rel target = $region3
    $region8: #{my_aug.9} parent=1 // loop_exit
      _
    %1749 = vsyncpa [#allocation5], 1
    %s1750 = scalar_lea.sflag [#allocation5], 1
    %1751 = vsyncpa %s1750, 1

</llo_original>
